<compile_context>
chip_gen: v5e
topology: v5e:2x2
jax: 0.10.0
libtpu: 0.0.40
codegen_flags: <defaults>
</compile_context>

<pallas_src>
import functools

import jax
import jax.numpy as jnp
from jax import lax
from jax.experimental import pallas as pl
from jax.experimental.pallas import tpu as pltpu


def _round_up(x, m):
    return ((x + m - 1) // m) * m


def _decoder_kernel(idx_ref, h0_ref, emb_ref, wihg_ref, whhg_ref, bias_ref,
                    linw_ref, linb_ref,
                    out_ref, hout_ref,
                    xbuf_ref, gir_ref, giz_ref, gin_ref, xout_ref,
                    *, seq_len, batch, batch_pad):
    S, B, BP = seq_len, batch, batch_pad
    L = h0_ref.shape[0]
    HP = h0_ref.shape[2]
    OP = linw_ref.shape[1]

    # --- embedding gather + ReLU (index-driven, no one-hot matmul) ---
    xbuf_ref[...] = jnp.zeros_like(xbuf_ref)          # zero padded batch rows / lanes
    for t in range(S):
        for b in range(B):
            tok = idx_ref[t * B + b]                  # SMEM scalar read
            row = emb_ref[pl.ds(tok, 1), :]           # (1, HP) dynamic row gather
            xbuf_ref[pl.ds(t * BP + b, 1), :] = jnp.maximum(row, 0.0)

    # --- multi-layer GRU, PyTorch gate order (r, z, n) ---
    # TODO(synk): inter-layer dropout omitted (eval-mode forward / dropout inactive).
    for l in range(L):
        # Parallel-over-time input projection, one dot per gate (bf16 in, f32 acc).
        # r/z/n input+hidden biases (except b_hh_n) are pre-folded into bias_ref[l,0:3].
        xb = xbuf_ref[...].astype(jnp.bfloat16)                     # (S*BP, HP)
        gir_ref[...] = jnp.dot(xb, wihg_ref[l, 0],
                               preferred_element_type=jnp.float32) + bias_ref[l, 0]
        giz_ref[...] = jnp.dot(xb, wihg_ref[l, 1],
                               preferred_element_type=jnp.float32) + bias_ref[l, 1]
        gin_ref[...] = jnp.dot(xb, wihg_ref[l, 2],
                               preferred_element_type=jnp.float32) + bias_ref[l, 2]

        # Hoist loop invariants: recurrent weights and the n-gate hidden bias.
        whh_r = whhg_ref[l, 0]
        whh_z = whhg_ref[l, 1]
        whh_n = whhg_ref[l, 2]
        bhn = jnp.broadcast_to(bias_ref[l, 3], (BP, HP))
        # TODO(synk): on v5e, drive the MXU explicitly (matmul_push_rhs once per layer,
        # matmul_acc_lhs per step) to keep whh resident across timesteps.

        def step(t, h):
            r0 = pl.multiple_of(t * BP, BP)           # sublane-tile-aligned slice start
            gr = gir_ref[pl.ds(r0, BP), :]
            gz = giz_ref[pl.ds(r0, BP), :]
            gn = gin_ref[pl.ds(r0, BP), :]
            hb = h.astype(jnp.bfloat16)
            ghr = jnp.dot(hb, whh_r, preferred_element_type=jnp.float32)
            ghz = jnp.dot(hb, whh_z, preferred_element_type=jnp.float32)
            ghn = jnp.dot(hb, whh_n, preferred_element_type=jnp.float32)
            r = jax.nn.sigmoid(gr + ghr)
            z = jax.nn.sigmoid(gz + ghz)
            n = jnp.tanh(gn + r * (ghn + bhn))
            h_new = (1.0 - z) * n + z * h
            xbuf_ref[pl.ds(r0, BP), :] = h_new        # layer output, in place
            return h_new

        h_last = lax.fori_loop(0, S, step, h0_ref[l], unroll=True)
        hout_ref[l] = h_last

    # --- compact the valid batch rows (drop batch padding) for the output head ---
    for t in range(S):
        xout_ref[pl.ds(t * B, B), :] = xbuf_ref[pl.ds(t * BP, B), :]

    # --- linear + softmax over dim 0 (nn.Softmax() default for a 3-D tensor) ---
    xo = xout_ref[...].astype(jnp.bfloat16)                         # (S*B, HP)
    logits = jnp.dot(xo, linw_ref[...],
                     preferred_element_type=jnp.float32) + linb_ref[...]   # (S*B, OP)
    # torch: gru_out.view(B, S, -1) is a row-major reshape of the time-major tensor.
    logits3 = logits.reshape(B, S, OP)
    m = jnp.max(logits3, axis=0, keepdims=True)
    e = jnp.exp(logits3 - m)
    inv = pl.reciprocal(jnp.sum(e, axis=0, keepdims=True), approx=True)
    out_ref[...] = e * inv


def make_params(key, hidden_size, output_size, num_layers):
    H, O, L = hidden_size, output_size, num_layers
    ks = jax.random.split(key, 7)
    scale = 1.0 / jnp.sqrt(H).astype(jnp.float32)
    return dict(
        emb=jax.random.normal(ks[0], (O, H), jnp.float32),
        w_ih=jax.random.uniform(ks[1], (L, 3 * H, H), jnp.float32, -scale, scale),
        w_hh=jax.random.uniform(ks[2], (L, 3 * H, H), jnp.float32, -scale, scale),
        b_ih=jax.random.uniform(ks[3], (L, 3 * H), jnp.float32, -scale, scale),
        b_hh=jax.random.uniform(ks[4], (L, 3 * H), jnp.float32, -scale, scale),
        lin_w=jax.random.uniform(ks[5], (O, H), jnp.float32, -scale, scale),
        lin_b=jax.random.uniform(ks[6], (O,), jnp.float32, -scale, scale),
    )


def decoder_forward(params, inp, hidden, *, num_layers):
    """inp: (B, S) int token ids, hidden: (B, L, H) float32."""
    B, S = inp.shape
    L = num_layers
    O, H = params["emb"].shape
    BP = _round_up(B, 8)        # sublane-tile padded batch
    HP = _round_up(H, 128)      # lane-tile padded hidden
    OP = _round_up(O, 128)      # lane-dense output

    # torch: input.view(S, B, -1) and hidden.view(L, B, -1) are row-major reshapes.
    idx = jnp.reshape(inp, (S * B,)).astype(jnp.int32)
    h0 = jnp.reshape(hidden, (L, B, H)).astype(jnp.float32)
    h0p = jnp.pad(h0, ((0, 0), (0, BP - B), (0, HP - H)))

    # Embedding table, zero-padded lanes (stays f32: gather only, no matmul).
    embp = jnp.pad(params["emb"].astype(jnp.float32), ((0, 0), (0, HP - H)))

    # GRU weights: PyTorch layout (L, 3H, H), gate order (r, z, n).  Split per gate,
    # transpose to (in, out), zero-pad both dims to HP so each gate is lane-aligned.
    w_ih = params["w_ih"].reshape(L, 3, H, H)
    w_hh = params["w_hh"].reshape(L, 3, H, H)
    pad4 = ((0, 0), (0, 0), (0, HP - H), (0, HP - H))
    wihg = jnp.pad(jnp.transpose(w_ih, (0, 1, 3, 2)), pad4).astype(jnp.bfloat16)
    whhg = jnp.pad(jnp.transpose(w_hh, (0, 1, 3, 2)), pad4).astype(jnp.bfloat16)

    # Bias folding: r/z hidden biases fold into the input-side bias; only b_hh_n
    # must stay inside the r*(...) term of the n gate.
    b_ih = params["b_ih"].reshape(L, 3, H)
    b_hh = params["b_hh"].reshape(L, 3, H)
    bias = jnp.stack([b_ih[:, 0] + b_hh[:, 0],      # r
                      b_ih[:, 1] + b_hh[:, 1],      # z
                      b_ih[:, 2],                   # n (input side)
                      b_hh[:, 2]], axis=1)          # n (hidden side)
    bias = jnp.pad(bias, ((0, 0), (0, 0), (0, HP - H))).astype(jnp.float32)
    bias = bias.reshape(L, 4, 1, HP)

    linw = jnp.pad(params["lin_w"].T, ((0, HP - H), (0, OP - O))).astype(jnp.bfloat16)
    linb = jnp.pad(params["lin_b"], (0, OP - O)).astype(jnp.float32).reshape(1, OP)

    kernel = functools.partial(_decoder_kernel, seq_len=S, batch=B, batch_pad=BP)
    vmem = pl.BlockSpec(memory_space=pltpu.MemorySpace.VMEM)
    smem = pl.BlockSpec(memory_space=pltpu.MemorySpace.SMEM)

    # TODO(synk): at realistic V/O/S, tile the embedding gather + input projection and
    # the output projection over a ('parallel',) grid with HBM-resident (pl.ANY) tables
    # so BlockSpec pipelining hides HBM traffic and both v7x TensorCores are used.
    out, h_final = pl.pallas_call(
        kernel,
        out_shape=(jax.ShapeDtypeStruct((B, S, OP), jnp.float32),
                   jax.ShapeDtypeStruct((L, BP, HP), jnp.float32)),
        in_specs=[smem, vmem, vmem, vmem, vmem, vmem, vmem, vmem],
        out_specs=(vmem, vmem),
        scratch_shapes=[pltpu.VMEM((S * BP, HP), jnp.float32),   # layer activations
                        pltpu.VMEM((S * BP, HP), jnp.float32),   # gi_r
                        pltpu.VMEM((S * BP, HP), jnp.float32),   # gi_z
                        pltpu.VMEM((S * BP, HP), jnp.float32),   # gi_n
                        pltpu.VMEM((S * B, HP), jnp.float32)],   # compacted rows
        compiler_params=pltpu.CompilerParams(vmem_limit_bytes=64 * 1024 * 1024),
    )(idx, h0p, embp, wihg, whhg, bias, linw, linb)

    # torch: output already (B, S, O); hidden.view(B, L, -1) (row-major reshape).
    probs = out[:, :, :O]
    h_out = jnp.reshape(h_final[:, :B, :H], (B, L, H))
    return probs, h_out


def decoder_forward_ref(params, inp, hidden, *, num_layers, bf16_matmul=False):
    """Pure-JAX reference of the PyTorch forward.  bf16_matmul=True mirrors the
    kernel's MXU fast path (bf16 inputs, f32 accumulation) for a tight check."""
    B, S = inp.shape
    O, H = params["emb"].shape
    L = num_layers
    if bf16_matmul:
        def mm(a, b):
            return jnp.dot(a.astype(jnp.bfloat16), b.astype(jnp.bfloat16),
                           preferred_element_type=jnp.float32)
    else:
        def mm(a, b):
            return jnp.dot(a, b, precision=lax.Precision.HIGHEST)

    x = jnp.reshape(inp, (S, B))
    h = jnp.reshape(hidden, (L, B, H)).astype(jnp.float32)
    layer_in = jnp.maximum(params["emb"][x], 0.0)                   # (S, B, H)
    h_fin = []
    for l in range(L):
        wih, whh = params["w_ih"][l], params["w_hh"][l]
        bih, bhh = params["b_ih"][l], params["b_hh"][l]
        hl = h[l]
        outs = []
        for t in range(S):
            gi = mm(layer_in[t], wih.T) + bih
            gh = mm(hl, whh.T) + bhh
            r = jax.nn.sigmoid(gi[:, :H] + gh[:, :H])
            z = jax.nn.sigmoid(gi[:, H:2 * H] + gh[:, H:2 * H])
            n = jnp.tanh(gi[:, 2 * H:] + r * gh[:, 2 * H:])
            hl = (1.0 - z) * n + z * hl
            outs.append(hl)
        layer_in = jnp.stack(outs, axis=0)
        h_fin.append(hl)
    h_final = jnp.stack(h_fin, axis=0)                              # (L, B, H)
    out_b = jnp.reshape(layer_in, (B, S, H))
    logits = mm(out_b, params["lin_w"].T) + params["lin_b"]
    probs = jax.nn.softmax(logits, axis=0)                          # nn.Softmax() -> dim 0
    return probs, jnp.reshape(h_final, (B, L, H))


if __name__ == "__main__":
    hidden_size, output_size, num_layers = 32, 64, 2
    batch, seq = 2, 8

    key = jax.random.PRNGKey(0)
    kp, ki, kh = jax.random.split(key, 3)
    params = make_params(kp, hidden_size, output_size, num_layers)
    inp = jax.random.randint(ki, (batch, seq), 0, output_size, dtype=jnp.int32)
    hidden = jax.random.normal(kh, (batch, num_layers, hidden_size), jnp.float32)

    out, h_out = decoder_forward(params, inp, hidden, num_layers=num_layers)
    out = jax.block_until_ready(out)
    h_out = jax.block_until_ready(h_out)

    assert out.shape == (batch, seq, output_size)
    assert h_out.shape == (batch, num_layers, hidden_size)

    # (1) Tight check vs a reference that mirrors the kernel's bf16-in / f32-acc
    #     MXU fast path (tolerance covers approx reciprocal + accumulation order).
    ref_out, ref_h = decoder_forward_ref(params, inp, hidden,
                                         num_layers=num_layers, bf16_matmul=True)
    assert jnp.allclose(out, ref_out, atol=2e-3, rtol=2e-3), "softmax mismatch (bf16 ref)"
    assert jnp.allclose(h_out, ref_h, atol=2e-3, rtol=2e-3), "hidden mismatch (bf16 ref)"

    # (2) Looser sanity check vs the full-f32 PyTorch-faithful reference; tolerance
    #     reflects bf16 matmul inputs propagated through S GRU steps.
    f32_out, f32_h = decoder_forward_ref(params, inp, hidden,
                                         num_layers=num_layers, bf16_matmul=False)
    assert jnp.allclose(out, f32_out, atol=5e-2, rtol=5e-2), "softmax drift vs f32 ref"
    assert jnp.allclose(h_out, f32_h, atol=5e-2, rtol=5e-2), "hidden drift vs f32 ref"

    print("KERNEL_OK")
</pallas_src>

<mosaic_0001>
module attributes {stable_mosaic.version = 11 : i64} {
  func.func @_decoder_kernel(%arg0: memref<16xi32, #tpu.memory_space<smem>>, %arg1: memref<2x8x128xf32, #tpu.memory_space<vmem>>, %arg2: memref<64x128xf32, #tpu.memory_space<vmem>>, %arg3: memref<2x3x128x128xbf16, #tpu.memory_space<vmem>>, %arg4: memref<2x3x128x128xbf16, #tpu.memory_space<vmem>>, %arg5: memref<2x4x1x128xf32, #tpu.memory_space<vmem>>, %arg6: memref<128x128xbf16, #tpu.memory_space<vmem>>, %arg7: memref<1x128xf32, #tpu.memory_space<vmem>>, %arg8: memref<2x8x128xf32, #tpu.memory_space<vmem>>, %arg9: memref<2x8x128xf32, #tpu.memory_space<vmem>>, %arg10: memref<64x128xf32, #tpu.memory_space<vmem>>, %arg11: memref<64x128xf32, #tpu.memory_space<vmem>>, %arg12: memref<64x128xf32, #tpu.memory_space<vmem>>, %arg13: memref<64x128xf32, #tpu.memory_space<vmem>>, %arg14: memref<16x128xf32, #tpu.memory_space<vmem>>) attributes {dimension_semantics = [], scalar_prefetch = 0 : i64, scratch_operands = 5 : i64, tpu.core_type = #tpu.core_type<tc>} {
    %cst = arith.constant 0.000000e+00 : f32
    %0 = vector.broadcast %cst : f32 to vector<64x128xf32>
    %c0 = arith.constant 0 : index
    %c0_0 = arith.constant 0 : index
    %1 = vector.load %arg10[%c0, %c0_0] : memref<64x128xf32, #tpu.memory_space<vmem>>, vector<64x128xf32>
    tpu.vector_store %arg10[%c0, %c0_0], %0 {strides = array<i32>} : memref<64x128xf32, #tpu.memory_space<vmem>>, vector<64x128xf32>,
    %c0_1 = arith.constant 0 : index
    %2 = memref.load %arg0[%c0_1] : memref<16xi32, #tpu.memory_space<smem>>
    %3 = arith.index_cast %2 : i32 to index
    %c0_2 = arith.constant 0 : index
    %4 = vector.load %arg2[%3, %c0_2] : memref<64x128xf32, #tpu.memory_space<vmem>>, vector<1x128xf32>
    %cst_3 = arith.constant 0.000000e+00 : f32
    %5 = vector.broadcast %cst_3 : f32 to vector<1x128xf32>
    %6 = arith.maximumf %4, %5 : vector<1x128xf32>
    %c0_4 = arith.constant 0 : index
    %c0_5 = arith.constant 0 : index
    %7 = vector.load %arg10[%c0_4, %c0_5] : memref<64x128xf32, #tpu.memory_space<vmem>>, vector<1x128xf32>
    tpu.vector_store %arg10[%c0_4, %c0_5], %6 {strides = array<i32>} : memref<64x128xf32, #tpu.memory_space<vmem>>, vector<1x128xf32>,
    %c1 = arith.constant 1 : index
    %8 = memref.load %arg0[%c1] : memref<16xi32, #tpu.memory_space<smem>>
    %9 = arith.index_cast %8 : i32 to index
    %c0_6 = arith.constant 0 : index
    %10 = vector.load %arg2[%9, %c0_6] : memref<64x128xf32, #tpu.memory_space<vmem>>, vector<1x128xf32>
    %cst_7 = arith.constant 0.000000e+00 : f32
    %11 = vector.broadcast %cst_7 : f32 to vector<1x128xf32>
    %12 = arith.maximumf %10, %11 : vector<1x128xf32>
    %c1_8 = arith.constant 1 : index
    %c0_9 = arith.constant 0 : index
    %13 = vector.load %arg10[%c1_8, %c0_9] : memref<64x128xf32, #tpu.memory_space<vmem>>, vector<1x128xf32>
    tpu.vector_store %arg10[%c1_8, %c0_9], %12 {strides = array<i32>} : memref<64x128xf32, #tpu.memory_space<vmem>>, vector<1x128xf32>,
    %c2 = arith.constant 2 : index
    %14 = memref.load %arg0[%c2] : memref<16xi32, #tpu.memory_space<smem>>
    %15 = arith.index_cast %14 : i32 to index
    %c0_10 = arith.constant 0 : index
    %16 = vector.load %arg2[%15, %c0_10] : memref<64x128xf32, #tpu.memory_space<vmem>>, vector<1x128xf32>
    %cst_11 = arith.constant 0.000000e+00 : f32
    %17 = vector.broadcast %cst_11 : f32 to vector<1x128xf32>
    %18 = arith.maximumf %16, %17 : vector<1x128xf32>
    %c8 = arith.constant 8 : index
    %c0_12 = arith.constant 0 : index
    %19 = vector.load %arg10[%c8, %c0_12] : memref<64x128xf32, #tpu.memory_space<vmem>>, vector<1x128xf32>
    tpu.vector_store %arg10[%c8, %c0_12], %18 {strides = array<i32>} : memref<64x128xf32, #tpu.memory_space<vmem>>, vector<1x128xf32>,
    %c3 = arith.constant 3 : index
    %20 = memref.load %arg0[%c3] : memref<16xi32, #tpu.memory_space<smem>>
    %21 = arith.index_cast %20 : i32 to index
    %c0_13 = arith.constant 0 : index
    %22 = vector.load %arg2[%21, %c0_13] : memref<64x128xf32, #tpu.memory_space<vmem>>, vector<1x128xf32>
    %cst_14 = arith.constant 0.000000e+00 : f32
    %23 = vector.broadcast %cst_14 : f32 to vector<1x128xf32>
    %24 = arith.maximumf %22, %23 : vector<1x128xf32>
    %c9 = arith.constant 9 : index
    %c0_15 = arith.constant 0 : index
    %25 = vector.load %arg10[%c9, %c0_15] : memref<64x128xf32, #tpu.memory_space<vmem>>, vector<1x128xf32>
    tpu.vector_store %arg10[%c9, %c0_15], %24 {strides = array<i32>} : memref<64x128xf32, #tpu.memory_space<vmem>>, vector<1x128xf32>,
    %c4 = arith.constant 4 : index
    %26 = memref.load %arg0[%c4] : memref<16xi32, #tpu.memory_space<smem>>
    %27 = arith.index_cast %26 : i32 to index
    %c0_16 = arith.constant 0 : index
    %28 = vector.load %arg2[%27, %c0_16] : memref<64x128xf32, #tpu.memory_space<vmem>>, vector<1x128xf32>
    %cst_17 = arith.constant 0.000000e+00 : f32
    %29 = vector.broadcast %cst_17 : f32 to vector<1x128xf32>
    %30 = arith.maximumf %28, %29 : vector<1x128xf32>
    %c16 = arith.constant 16 : index
    %c0_18 = arith.constant 0 : index
    %31 = vector.load %arg10[%c16, %c0_18] : memref<64x128xf32, #tpu.memory_space<vmem>>, vector<1x128xf32>
    tpu.vector_store %arg10[%c16, %c0_18], %30 {strides = array<i32>} : memref<64x128xf32, #tpu.memory_space<vmem>>, vector<1x128xf32>,
    %c5 = arith.constant 5 : index
    %32 = memref.load %arg0[%c5] : memref<16xi32, #tpu.memory_space<smem>>
    %33 = arith.index_cast %32 : i32 to index
    %c0_19 = arith.constant 0 : index
    %34 = vector.load %arg2[%33, %c0_19] : memref<64x128xf32, #tpu.memory_space<vmem>>, vector<1x128xf32>
    %cst_20 = arith.constant 0.000000e+00 : f32
    %35 = vector.broadcast %cst_20 : f32 to vector<1x128xf32>
    %36 = arith.maximumf %34, %35 : vector<1x128xf32>
    %c17 = arith.constant 17 : index
    %c0_21 = arith.constant 0 : index
    %37 = vector.load %arg10[%c17, %c0_21] : memref<64x128xf32, #tpu.memory_space<vmem>>, vector<1x128xf32>
    tpu.vector_store %arg10[%c17, %c0_21], %36 {strides = array<i32>} : memref<64x128xf32, #tpu.memory_space<vmem>>, vector<1x128xf32>,
    %c6 = arith.constant 6 : index
    %38 = memref.load %arg0[%c6] : memref<16xi32, #tpu.memory_space<smem>>
    %39 = arith.index_cast %38 : i32 to index
    %c0_22 = arith.constant 0 : index
    %40 = vector.load %arg2[%39, %c0_22] : memref<64x128xf32, #tpu.memory_space<vmem>>, vector<1x128xf32>
    %cst_23 = arith.constant 0.000000e+00 : f32
    %41 = vector.broadcast %cst_23 : f32 to vector<1x128xf32>
    %42 = arith.maximumf %40, %41 : vector<1x128xf32>
    %c24 = arith.constant 24 : index
    %c0_24 = arith.constant 0 : index
    %43 = vector.load %arg10[%c24, %c0_24] : memref<64x128xf32, #tpu.memory_space<vmem>>, vector<1x128xf32>
    tpu.vector_store %arg10[%c24, %c0_24], %42 {strides = array<i32>} : memref<64x128xf32, #tpu.memory_space<vmem>>, vector<1x128xf32>,
    %c7 = arith.constant 7 : index
    %44 = memref.load %arg0[%c7] : memref<16xi32, #tpu.memory_space<smem>>
    %45 = arith.index_cast %44 : i32 to index
    %c0_25 = arith.constant 0 : index
    %46 = vector.load %arg2[%45, %c0_25] : memref<64x128xf32, #tpu.memory_space<vmem>>, vector<1x128xf32>
    %cst_26 = arith.constant 0.000000e+00 : f32
    %47 = vector.broadcast %cst_26 : f32 to vector<1x128xf32>
    %48 = arith.maximumf %46, %47 : vector<1x128xf32>
    %c25 = arith.constant 25 : index
    %c0_27 = arith.constant 0 : index
    %49 = vector.load %arg10[%c25, %c0_27] : memref<64x128xf32, #tpu.memory_space<vmem>>, vector<1x128xf32>
    tpu.vector_store %arg10[%c25, %c0_27], %48 {strides = array<i32>} : memref<64x128xf32, #tpu.memory_space<vmem>>, vector<1x128xf32>,
    %c8_28 = arith.constant 8 : index
    %50 = memref.load %arg0[%c8_28] : memref<16xi32, #tpu.memory_space<smem>>
    %51 = arith.index_cast %50 : i32 to index
    %c0_29 = arith.constant 0 : index
    %52 = vector.load %arg2[%51, %c0_29] : memref<64x128xf32, #tpu.memory_space<vmem>>, vector<1x128xf32>
    %cst_30 = arith.constant 0.000000e+00 : f32
    %53 = vector.broadcast %cst_30 : f32 to vector<1x128xf32>
    %54 = arith.maximumf %52, %53 : vector<1x128xf32>
    %c32 = arith.constant 32 : index
    %c0_31 = arith.constant 0 : index
    %55 = vector.load %arg10[%c32, %c0_31] : memref<64x128xf32, #tpu.memory_space<vmem>>, vector<1x128xf32>
    tpu.vector_store %arg10[%c32, %c0_31], %54 {strides = array<i32>} : memref<64x128xf32, #tpu.memory_space<vmem>>, vector<1x128xf32>,
    %c9_32 = arith.constant 9 : index
    %56 = memref.load %arg0[%c9_32] : memref<16xi32, #tpu.memory_space<smem>>
    %57 = arith.index_cast %56 : i32 to index
    %c0_33 = arith.constant 0 : index
    %58 = vector.load %arg2[%57, %c0_33] : memref<64x128xf32, #tpu.memory_space<vmem>>, vector<1x128xf32>
    %cst_34 = arith.constant 0.000000e+00 : f32
    %59 = vector.broadcast %cst_34 : f32 to vector<1x128xf32>
    %60 = arith.maximumf %58, %59 : vector<1x128xf32>
    %c33 = arith.constant 33 : index
    %c0_35 = arith.constant 0 : index
    %61 = vector.load %arg10[%c33, %c0_35] : memref<64x128xf32, #tpu.memory_space<vmem>>, vector<1x128xf32>
    tpu.vector_store %arg10[%c33, %c0_35], %60 {strides = array<i32>} : memref<64x128xf32, #tpu.memory_space<vmem>>, vector<1x128xf32>,
    %c10 = arith.constant 10 : index
    %62 = memref.load %arg0[%c10] : memref<16xi32, #tpu.memory_space<smem>>
    %63 = arith.index_cast %62 : i32 to index
    %c0_36 = arith.constant 0 : index
    %64 = vector.load %arg2[%63, %c0_36] : memref<64x128xf32, #tpu.memory_space<vmem>>, vector<1x128xf32>
    %cst_37 = arith.constant 0.000000e+00 : f32
    %65 = vector.broadcast %cst_37 : f32 to vector<1x128xf32>
    %66 = arith.maximumf %64, %65 : vector<1x128xf32>
    %c40 = arith.constant 40 : index
    %c0_38 = arith.constant 0 : index
    %67 = vector.load %arg10[%c40, %c0_38] : memref<64x128xf32, #tpu.memory_space<vmem>>, vector<1x128xf32>
    tpu.vector_store %arg10[%c40, %c0_38], %66 {strides = array<i32>} : memref<64x128xf32, #tpu.memory_space<vmem>>, vector<1x128xf32>,
    %c11 = arith.constant 11 : index
    %68 = memref.load %arg0[%c11] : memref<16xi32, #tpu.memory_space<smem>>
    %69 = arith.index_cast %68 : i32 to index
    %c0_39 = arith.constant 0 : index
    %70 = vector.load %arg2[%69, %c0_39] : memref<64x128xf32, #tpu.memory_space<vmem>>, vector<1x128xf32>
    %cst_40 = arith.constant 0.000000e+00 : f32
    %71 = vector.broadcast %cst_40 : f32 to vector<1x128xf32>
    %72 = arith.maximumf %70, %71 : vector<1x128xf32>
    %c41 = arith.constant 41 : index
    %c0_41 = arith.constant 0 : index
    %73 = vector.load %arg10[%c41, %c0_41] : memref<64x128xf32, #tpu.memory_space<vmem>>, vector<1x128xf32>
    tpu.vector_store %arg10[%c41, %c0_41], %72 {strides = array<i32>} : memref<64x128xf32, #tpu.memory_space<vmem>>, vector<1x128xf32>,
    %c12 = arith.constant 12 : index
    %74 = memref.load %arg0[%c12] : memref<16xi32, #tpu.memory_space<smem>>
    %75 = arith.index_cast %74 : i32 to index
    %c0_42 = arith.constant 0 : index
    %76 = vector.load %arg2[%75, %c0_42] : memref<64x128xf32, #tpu.memory_space<vmem>>, vector<1x128xf32>
    %cst_43 = arith.constant 0.000000e+00 : f32
    %77 = vector.broadcast %cst_43 : f32 to vector<1x128xf32>
    %78 = arith.maximumf %76, %77 : vector<1x128xf32>
    %c48 = arith.constant 48 : index
    %c0_44 = arith.constant 0 : index
    %79 = vector.load %arg10[%c48, %c0_44] : memref<64x128xf32, #tpu.memory_space<vmem>>, vector<1x128xf32>
    tpu.vector_store %arg10[%c48, %c0_44], %78 {strides = array<i32>} : memref<64x128xf32, #tpu.memory_space<vmem>>, vector<1x128xf32>,
    %c13 = arith.constant 13 : index
    %80 = memref.load %arg0[%c13] : memref<16xi32, #tpu.memory_space<smem>>
    %81 = arith.index_cast %80 : i32 to index
    %c0_45 = arith.constant 0 : index
    %82 = vector.load %arg2[%81, %c0_45] : memref<64x128xf32, #tpu.memory_space<vmem>>, vector<1x128xf32>
    %cst_46 = arith.constant 0.000000e+00 : f32
    %83 = vector.broadcast %cst_46 : f32 to vector<1x128xf32>
    %84 = arith.maximumf %82, %83 : vector<1x128xf32>
    %c49 = arith.constant 49 : index
    %c0_47 = arith.constant 0 : index
    %85 = vector.load %arg10[%c49, %c0_47] : memref<64x128xf32, #tpu.memory_space<vmem>>, vector<1x128xf32>
    tpu.vector_store %arg10[%c49, %c0_47], %84 {strides = array<i32>} : memref<64x128xf32, #tpu.memory_space<vmem>>, vector<1x128xf32>,
    %c14 = arith.constant 14 : index
    %86 = memref.load %arg0[%c14] : memref<16xi32, #tpu.memory_space<smem>>
    %87 = arith.index_cast %86 : i32 to index
    %c0_48 = arith.constant 0 : index
    %88 = vector.load %arg2[%87, %c0_48] : memref<64x128xf32, #tpu.memory_space<vmem>>, vector<1x128xf32>
    %cst_49 = arith.constant 0.000000e+00 : f32
    %89 = vector.broadcast %cst_49 : f32 to vector<1x128xf32>
    %90 = arith.maximumf %88, %89 : vector<1x128xf32>
    %c56 = arith.constant 56 : index
    %c0_50 = arith.constant 0 : index
    %91 = vector.load %arg10[%c56, %c0_50] : memref<64x128xf32, #tpu.memory_space<vmem>>, vector<1x128xf32>
    tpu.vector_store %arg10[%c56, %c0_50], %90 {strides = array<i32>} : memref<64x128xf32, #tpu.memory_space<vmem>>, vector<1x128xf32>,
    %c15 = arith.constant 15 : index
    %92 = memref.load %arg0[%c15] : memref<16xi32, #tpu.memory_space<smem>>
    %93 = arith.index_cast %92 : i32 to index
    %c0_51 = arith.constant 0 : index
    %94 = vector.load %arg2[%93, %c0_51] : memref<64x128xf32, #tpu.memory_space<vmem>>, vector<1x128xf32>
    %cst_52 = arith.constant 0.000000e+00 : f32
    %95 = vector.broadcast %cst_52 : f32 to vector<1x128xf32>
    %96 = arith.maximumf %94, %95 : vector<1x128xf32>
    %c57 = arith.constant 57 : index
    %c0_53 = arith.constant 0 : index
    %97 = vector.load %arg10[%c57, %c0_53] : memref<64x128xf32, #tpu.memory_space<vmem>>, vector<1x128xf32>
    tpu.vector_store %arg10[%c57, %c0_53], %96 {strides = array<i32>} : memref<64x128xf32, #tpu.memory_space<vmem>>, vector<1x128xf32>,
    %c0_54 = arith.constant 0 : index
    %c0_55 = arith.constant 0 : index
    %98 = vector.load %arg10[%c0_54, %c0_55] : memref<64x128xf32, #tpu.memory_space<vmem>>, vector<64x128xf32>
    %99 = arith.truncf %98 : vector<64x128xf32> to vector<64x128xbf16>
    %c0_56 = arith.constant 0 : index
    %c0_57 = arith.constant 0 : index
    %c0_58 = arith.constant 0 : index
    %c0_59 = arith.constant 0 : index
    %100 = vector.load %arg3[%c0_56, %c0_57, %c0_58, %c0_59] : memref<2x3x128x128xbf16, #tpu.memory_space<vmem>>, vector<1x1x128x128xbf16>
    %101 = vector.shape_cast %100 : vector<1x1x128x128xbf16> to vector<128x128xbf16>
    %cst_60 = arith.constant dense<0.000000e+00> : vector<64x128xf32>
    %102 = tpu.matmul %99, %101, %cst_60 {dimension_numbers = #tpu.dot_dimension_numbers<[1], [0], [0], [1], [0, 0, 1, 1], [], []>} : vector<64x128xbf16>, vector<128x128xbf16>, vector<64x128xf32> -> vector<64x128xf32>
    %c0_61 = arith.constant 0 : index
    %c0_62 = arith.constant 0 : index
    %c0_63 = arith.constant 0 : index
    %c0_64 = arith.constant 0 : index
    %103 = vector.load %arg5[%c0_61, %c0_62, %c0_63, %c0_64] : memref<2x4x1x128xf32, #tpu.memory_space<vmem>>, vector<1x1x1x128xf32>
    %104 = vector.shape_cast %103 : vector<1x1x1x128xf32> to vector<1x128xf32>
    %105 = vector.broadcast %104 : vector<1x128xf32> to vector<64x128xf32>
    %106 = arith.addf %102, %105 : vector<64x128xf32>
    %c0_65 = arith.constant 0 : index
    %c0_66 = arith.constant 0 : index
    %107 = vector.load %arg11[%c0_65, %c0_66] : memref<64x128xf32, #tpu.memory_space<vmem>>, vector<64x128xf32>
    tpu.vector_store %arg11[%c0_65, %c0_66], %106 {strides = array<i32>} : memref<64x128xf32, #tpu.memory_space<vmem>>, vector<64x128xf32>,
    %c0_67 = arith.constant 0 : index
    %c1_68 = arith.constant 1 : index
    %c0_69 = arith.constant 0 : index
    %c0_70 = arith.constant 0 : index
    %108 = vector.load %arg3[%c0_67, %c1_68, %c0_69, %c0_70] : memref<2x3x128x128xbf16, #tpu.memory_space<vmem>>, vector<1x1x128x128xbf16>
    %109 = vector.shape_cast %108 : vector<1x1x128x128xbf16> to vector<128x128xbf16>
    %cst_71 = arith.constant dense<0.000000e+00> : vector<64x128xf32>
    %110 = tpu.matmul %99, %109, %cst_71 {dimension_numbers = #tpu.dot_dimension_numbers<[1], [0], [0], [1], [0, 0, 1, 1], [], []>} : vector<64x128xbf16>, vector<128x128xbf16>, vector<64x128xf32> -> vector<64x128xf32>
    %c0_72 = arith.constant 0 : index
    %c1_73 = arith.constant 1 : index
    %c0_74 = arith.constant 0 : index
    %c0_75 = arith.constant 0 : index
    %111 = vector.load %arg5[%c0_72, %c1_73, %c0_74, %c0_75] : memref<2x4x1x128xf32, #tpu.memory_space<vmem>>, vector<1x1x1x128xf32>
    %112 = vector.shape_cast %111 : vector<1x1x1x128xf32> to vector<1x128xf32>
    %113 = vector.broadcast %112 : vector<1x128xf32> to vector<64x128xf32>
    %114 = arith.addf %110, %113 : vector<64x128xf32>
    %c0_76 = arith.constant 0 : index
    %c0_77 = arith.constant 0 : index
    %115 = vector.load %arg12[%c0_76, %c0_77] : memref<64x128xf32, #tpu.memory_space<vmem>>, vector<64x128xf32>
    tpu.vector_store %arg12[%c0_76, %c0_77], %114 {strides = array<i32>} : memref<64x128xf32, #tpu.memory_space<vmem>>, vector<64x128xf32>,
    %c0_78 = arith.constant 0 : index
    %c2_79 = arith.constant 2 : index
    %c0_80 = arith.constant 0 : index
    %c0_81 = arith.constant 0 : index
    %116 = vector.load %arg3[%c0_78, %c2_79, %c0_80, %c0_81] : memref<2x3x128x128xbf16, #tpu.memory_space<vmem>>, vector<1x1x128x128xbf16>
    %117 = vector.shape_cast %116 : vector<1x1x128x128xbf16> to vector<128x128xbf16>
    %cst_82 = arith.constant dense<0.000000e+00> : vector<64x128xf32>
    %118 = tpu.matmul %99, %117, %cst_82 {dimension_numbers = #tpu.dot_dimension_numbers<[1], [0], [0], [1], [0, 0, 1, 1], [], []>} : vector<64x128xbf16>, vector<128x128xbf16>, vector<64x128xf32> -> vector<64x128xf32>
    %c0_83 = arith.constant 0 : index
    %c2_84 = arith.constant 2 : index
    %c0_85 = arith.constant 0 : index
    %c0_86 = arith.constant 0 : index
    %119 = vector.load %arg5[%c0_83, %c2_84, %c0_85, %c0_86] : memref<2x4x1x128xf32, #tpu.memory_space<vmem>>, vector<1x1x1x128xf32>
    %120 = vector.shape_cast %119 : vector<1x1x1x128xf32> to vector<1x128xf32>
    %121 = vector.broadcast %120 : vector<1x128xf32> to vector<64x128xf32>
    %122 = arith.addf %118, %121 : vector<64x128xf32>
    %c0_87 = arith.constant 0 : index
    %c0_88 = arith.constant 0 : index
    %123 = vector.load %arg13[%c0_87, %c0_88] : memref<64x128xf32, #tpu.memory_space<vmem>>, vector<64x128xf32>
    tpu.vector_store %arg13[%c0_87, %c0_88], %122 {strides = array<i32>} : memref<64x128xf32, #tpu.memory_space<vmem>>, vector<64x128xf32>,
    %c0_89 = arith.constant 0 : index
    %c0_90 = arith.constant 0 : index
    %c0_91 = arith.constant 0 : index
    %c0_92 = arith.constant 0 : index
    %124 = vector.load %arg4[%c0_89, %c0_90, %c0_91, %c0_92] : memref<2x3x128x128xbf16, #tpu.memory_space<vmem>>, vector<1x1x128x128xbf16>
    %125 = vector.shape_cast %124 : vector<1x1x128x128xbf16> to vector<128x128xbf16>
    %c0_93 = arith.constant 0 : index
    %c1_94 = arith.constant 1 : index
    %c0_95 = arith.constant 0 : index
    %c0_96 = arith.constant 0 : index
    %126 = vector.load %arg4[%c0_93, %c1_94, %c0_95, %c0_96] : memref<2x3x128x128xbf16, #tpu.memory_space<vmem>>, vector<1x1x128x128xbf16>
    %127 = vector.shape_cast %126 : vector<1x1x128x128xbf16> to vector<128x128xbf16>
    %c0_97 = arith.constant 0 : index
    %c2_98 = arith.constant 2 : index
    %c0_99 = arith.constant 0 : index
    %c0_100 = arith.constant 0 : index
    %128 = vector.load %arg4[%c0_97, %c2_98, %c0_99, %c0_100] : memref<2x3x128x128xbf16, #tpu.memory_space<vmem>>, vector<1x1x128x128xbf16>
    %129 = vector.shape_cast %128 : vector<1x1x128x128xbf16> to vector<128x128xbf16>
    %c0_101 = arith.constant 0 : index
    %c3_102 = arith.constant 3 : index
    %c0_103 = arith.constant 0 : index
    %c0_104 = arith.constant 0 : index
    %130 = vector.load %arg5[%c0_101, %c3_102, %c0_103, %c0_104] : memref<2x4x1x128xf32, #tpu.memory_space<vmem>>, vector<1x1x1x128xf32>
    %131 = vector.shape_cast %130 : vector<1x1x1x128xf32> to vector<1x128xf32>
    %132 = vector.shape_cast %131 : vector<1x128xf32> to vector<1x128xf32>
    %133 = vector.broadcast %132 : vector<1x128xf32> to vector<8x128xf32>
    %c0_105 = arith.constant 0 : index
    %c0_106 = arith.constant 0 : index
    %c0_107 = arith.constant 0 : index
    %134 = vector.load %arg1[%c0_105, %c0_106, %c0_107] : memref<2x8x128xf32, #tpu.memory_space<vmem>>, vector<1x8x128xf32>
    %135 = vector.shape_cast %134 : vector<1x8x128xf32> to vector<8x128xf32>
    %c0_i32 = arith.constant 0 : i32
    %c8_i32 = arith.constant 8 : i32
    %136 = arith.muli %c0_i32, %c8_i32 : i32
    %137 = tpu.assume_multiple %136, 8 : i32
    %138 = arith.index_cast %137 : i32 to index
    %c0_108 = arith.constant 0 : index
    %139 = vector.load %arg11[%138, %c0_108] : memref<64x128xf32, #tpu.memory_space<vmem>>, vector<8x128xf32>
    %140 = arith.index_cast %137 : i32 to index
    %c0_109 = arith.constant 0 : index
    %141 = vector.load %arg12[%140, %c0_109] : memref<64x128xf32, #tpu.memory_space<vmem>>, vector<8x128xf32>
    %142 = arith.index_cast %137 : i32 to index
    %c0_110 = arith.constant 0 : index
    %143 = vector.load %arg13[%142, %c0_110] : memref<64x128xf32, #tpu.memory_space<vmem>>, vector<8x128xf32>
    %144 = arith.truncf %135 : vector<8x128xf32> to vector<8x128xbf16>
    %cst_111 = arith.constant dense<0.000000e+00> : vector<8x128xf32>
    %145 = tpu.matmul %144, %125, %cst_111 {dimension_numbers = #tpu.dot_dimension_numbers<[1], [0], [0], [1], [0, 0, 1, 1], [], []>} : vector<8x128xbf16>, vector<128x128xbf16>, vector<8x128xf32> -> vector<8x128xf32>
    %cst_112 = arith.constant dense<0.000000e+00> : vector<8x128xf32>
    %146 = tpu.matmul %144, %127, %cst_112 {dimension_numbers = #tpu.dot_dimension_numbers<[1], [0], [0], [1], [0, 0, 1, 1], [], []>} : vector<8x128xbf16>, vector<128x128xbf16>, vector<8x128xf32> -> vector<8x128xf32>
    %cst_113 = arith.constant dense<0.000000e+00> : vector<8x128xf32>
    %147 = tpu.matmul %144, %129, %cst_113 {dimension_numbers = #tpu.dot_dimension_numbers<[1], [0], [0], [1], [0, 0, 1, 1], [], []>} : vector<8x128xbf16>, vector<128x128xbf16>, vector<8x128xf32> -> vector<8x128xf32>
    %148 = arith.addf %139, %145 : vector<8x128xf32>
    %149 = arith.negf %148 : vector<8x128xf32>
    %150 = math.exp %149 : vector<8x128xf32>
    %cst_114 = arith.constant 1.000000e+00 : f32
    %151 = vector.broadcast %cst_114 : f32 to vector<8x128xf32>
    %152 = arith.addf %151, %150 : vector<8x128xf32>
    %153 = arith.divf %151, %152 : vector<8x128xf32>
    %154 = arith.addf %141, %146 : vector<8x128xf32>
    %155 = arith.negf %154 : vector<8x128xf32>
    %156 = math.exp %155 : vector<8x128xf32>
    %cst_115 = arith.constant 1.000000e+00 : f32
    %157 = vector.broadcast %cst_115 : f32 to vector<8x128xf32>
    %158 = arith.addf %157, %156 : vector<8x128xf32>
    %159 = arith.divf %157, %158 : vector<8x128xf32>
    %160 = arith.addf %147, %133 : vector<8x128xf32>
    %161 = arith.mulf %153, %160 : vector<8x128xf32>
    %162 = arith.addf %143, %161 : vector<8x128xf32>
    %163 = math.tanh %162 : vector<8x128xf32>
    %cst_116 = arith.constant 1.000000e+00 : f32
    %164 = vector.broadcast %cst_116 : f32 to vector<8x128xf32>
    %165 = arith.subf %164, %159 : vector<8x128xf32>
    %166 = arith.mulf %165, %163 : vector<8x128xf32>
    %167 = arith.mulf %159, %135 : vector<8x128xf32>
    %168 = arith.addf %166, %167 : vector<8x128xf32>
    %169 = arith.index_cast %137 : i32 to index
    %c0_117 = arith.constant 0 : index
    %170 = vector.load %arg10[%169, %c0_117] : memref<64x128xf32, #tpu.memory_space<vmem>>, vector<8x128xf32>
    tpu.vector_store %arg10[%169, %c0_117], %168 {strides = array<i32>} : memref<64x128xf32, #tpu.memory_space<vmem>>, vector<8x128xf32>,
    %c1_i32 = arith.constant 1 : i32
    %c8_i32_118 = arith.constant 8 : i32
    %171 = arith.muli %c1_i32, %c8_i32_118 : i32
    %172 = tpu.assume_multiple %171, 8 : i32
    %173 = arith.index_cast %172 : i32 to index
    %c0_119 = arith.constant 0 : index
    %174 = vector.load %arg11[%173, %c0_119] : memref<64x128xf32, #tpu.memory_space<vmem>>, vector<8x128xf32>
    %175 = arith.index_cast %172 : i32 to index
    %c0_120 = arith.constant 0 : index
    %176 = vector.load %arg12[%175, %c0_120] : memref<64x128xf32, #tpu.memory_space<vmem>>, vector<8x128xf32>
    %177 = arith.index_cast %172 : i32 to index
    %c0_121 = arith.constant 0 : index
    %178 = vector.load %arg13[%177, %c0_121] : memref<64x128xf32, #tpu.memory_space<vmem>>, vector<8x128xf32>
    %179 = arith.truncf %168 : vector<8x128xf32> to vector<8x128xbf16>
    %cst_122 = arith.constant dense<0.000000e+00> : vector<8x128xf32>
    %180 = tpu.matmul %179, %125, %cst_122 {dimension_numbers = #tpu.dot_dimension_numbers<[1], [0], [0], [1], [0, 0, 1, 1], [], []>} : vector<8x128xbf16>, vector<128x128xbf16>, vector<8x128xf32> -> vector<8x128xf32>
    %cst_123 = arith.constant dense<0.000000e+00> : vector<8x128xf32>
    %181 = tpu.matmul %179, %127, %cst_123 {dimension_numbers = #tpu.dot_dimension_numbers<[1], [0], [0], [1], [0, 0, 1, 1], [], []>} : vector<8x128xbf16>, vector<128x128xbf16>, vector<8x128xf32> -> vector<8x128xf32>
    %cst_124 = arith.constant dense<0.000000e+00> : vector<8x128xf32>
    %182 = tpu.matmul %179, %129, %cst_124 {dimension_numbers = #tpu.dot_dimension_numbers<[1], [0], [0], [1], [0, 0, 1, 1], [], []>} : vector<8x128xbf16>, vector<128x128xbf16>, vector<8x128xf32> -> vector<8x128xf32>
    %183 = arith.addf %174, %180 : vector<8x128xf32>
    %184 = arith.negf %183 : vector<8x128xf32>
    %185 = math.exp %184 : vector<8x128xf32>
    %cst_125 = arith.constant 1.000000e+00 : f32
    %186 = vector.broadcast %cst_125 : f32 to vector<8x128xf32>
    %187 = arith.addf %186, %185 : vector<8x128xf32>
    %188 = arith.divf %186, %187 : vector<8x128xf32>
    %189 = arith.addf %176, %181 : vector<8x128xf32>
    %190 = arith.negf %189 : vector<8x128xf32>
    %191 = math.exp %190 : vector<8x128xf32>
    %cst_126 = arith.constant 1.000000e+00 : f32
    %192 = vector.broadcast %cst_126 : f32 to vector<8x128xf32>
    %193 = arith.addf %192, %191 : vector<8x128xf32>
    %194 = arith.divf %192, %193 : vector<8x128xf32>
    %195 = arith.addf %182, %133 : vector<8x128xf32>
    %196 = arith.mulf %188, %195 : vector<8x128xf32>
    %197 = arith.addf %178, %196 : vector<8x128xf32>
    %198 = math.tanh %197 : vector<8x128xf32>
    %cst_127 = arith.constant 1.000000e+00 : f32
    %199 = vector.broadcast %cst_127 : f32 to vector<8x128xf32>
    %200 = arith.subf %199, %194 : vector<8x128xf32>
    %201 = arith.mulf %200, %198 : vector<8x128xf32>
    %202 = arith.mulf %194, %168 : vector<8x128xf32>
    %203 = arith.addf %201, %202 : vector<8x128xf32>
    %204 = arith.index_cast %172 : i32 to index
    %c0_128 = arith.constant 0 : index
    %205 = vector.load %arg10[%204, %c0_128] : memref<64x128xf32, #tpu.memory_space<vmem>>, vector<8x128xf32>
    tpu.vector_store %arg10[%204, %c0_128], %203 {strides = array<i32>} : memref<64x128xf32, #tpu.memory_space<vmem>>, vector<8x128xf32>,
    %c2_i32 = arith.constant 2 : i32
    %c8_i32_129 = arith.constant 8 : i32
    %206 = arith.muli %c2_i32, %c8_i32_129 : i32
    %207 = tpu.assume_multiple %206, 8 : i32
    %208 = arith.index_cast %207 : i32 to index
    %c0_130 = arith.constant 0 : index
    %209 = vector.load %arg11[%208, %c0_130] : memref<64x128xf32, #tpu.memory_space<vmem>>, vector<8x128xf32>
    %210 = arith.index_cast %207 : i32 to index
    %c0_131 = arith.constant 0 : index
    %211 = vector.load %arg12[%210, %c0_131] : memref<64x128xf32, #tpu.memory_space<vmem>>, vector<8x128xf32>
    %212 = arith.index_cast %207 : i32 to index
    %c0_132 = arith.constant 0 : index
    %213 = vector.load %arg13[%212, %c0_132] : memref<64x128xf32, #tpu.memory_space<vmem>>, vector<8x128xf32>
    %214 = arith.truncf %203 : vector<8x128xf32> to vector<8x128xbf16>
    %cst_133 = arith.constant dense<0.000000e+00> : vector<8x128xf32>
    %215 = tpu.matmul %214, %125, %cst_133 {dimension_numbers = #tpu.dot_dimension_numbers<[1], [0], [0], [1], [0, 0, 1, 1], [], []>} : vector<8x128xbf16>, vector<128x128xbf16>, vector<8x128xf32> -> vector<8x128xf32>
    %cst_134 = arith.constant dense<0.000000e+00> : vector<8x128xf32>
    %216 = tpu.matmul %214, %127, %cst_134 {dimension_numbers = #tpu.dot_dimension_numbers<[1], [0], [0], [1], [0, 0, 1, 1], [], []>} : vector<8x128xbf16>, vector<128x128xbf16>, vector<8x128xf32> -> vector<8x128xf32>
    %cst_135 = arith.constant dense<0.000000e+00> : vector<8x128xf32>
    %217 = tpu.matmul %214, %129, %cst_135 {dimension_numbers = #tpu.dot_dimension_numbers<[1], [0], [0], [1], [0, 0, 1, 1], [], []>} : vector<8x128xbf16>, vector<128x128xbf16>, vector<8x128xf32> -> vector<8x128xf32>
    %218 = arith.addf %209, %215 : vector<8x128xf32>
    %219 = arith.negf %218 : vector<8x128xf32>
    %220 = math.exp %219 : vector<8x128xf32>
    %cst_136 = arith.constant 1.000000e+00 : f32
    %221 = vector.broadcast %cst_136 : f32 to vector<8x128xf32>
    %222 = arith.addf %221, %220 : vector<8x128xf32>
    %223 = arith.divf %221, %222 : vector<8x128xf32>
    %224 = arith.addf %211, %216 : vector<8x128xf32>
    %225 = arith.negf %224 : vector<8x128xf32>
    %226 = math.exp %225 : vector<8x128xf32>
    %cst_137 = arith.constant 1.000000e+00 : f32
    %227 = vector.broadcast %cst_137 : f32 to vector<8x128xf32>
    %228 = arith.addf %227, %226 : vector<8x128xf32>
    %229 = arith.divf %227, %228 : vector<8x128xf32>
    %230 = arith.addf %217, %133 : vector<8x128xf32>
    %231 = arith.mulf %223, %230 : vector<8x128xf32>
    %232 = arith.addf %213, %231 : vector<8x128xf32>
    %233 = math.tanh %232 : vector<8x128xf32>
    %cst_138 = arith.constant 1.000000e+00 : f32
    %234 = vector.broadcast %cst_138 : f32 to vector<8x128xf32>
    %235 = arith.subf %234, %229 : vector<8x128xf32>
    %236 = arith.mulf %235, %233 : vector<8x128xf32>
    %237 = arith.mulf %229, %203 : vector<8x128xf32>
    %238 = arith.addf %236, %237 : vector<8x128xf32>
    %239 = arith.index_cast %207 : i32 to index
    %c0_139 = arith.constant 0 : index
    %240 = vector.load %arg10[%239, %c0_139] : memref<64x128xf32, #tpu.memory_space<vmem>>, vector<8x128xf32>
    tpu.vector_store %arg10[%239, %c0_139], %238 {strides = array<i32>} : memref<64x128xf32, #tpu.memory_space<vmem>>, vector<8x128xf32>,
    %c3_i32 = arith.constant 3 : i32
    %c8_i32_140 = arith.constant 8 : i32
    %241 = arith.muli %c3_i32, %c8_i32_140 : i32
    %242 = tpu.assume_multiple %241, 8 : i32
    %243 = arith.index_cast %242 : i32 to index
    %c0_141 = arith.constant 0 : index
    %244 = vector.load %arg11[%243, %c0_141] : memref<64x128xf32, #tpu.memory_space<vmem>>, vector<8x128xf32>
    %245 = arith.index_cast %242 : i32 to index
    %c0_142 = arith.constant 0 : index
    %246 = vector.load %arg12[%245, %c0_142] : memref<64x128xf32, #tpu.memory_space<vmem>>, vector<8x128xf32>
    %247 = arith.index_cast %242 : i32 to index
    %c0_143 = arith.constant 0 : index
    %248 = vector.load %arg13[%247, %c0_143] : memref<64x128xf32, #tpu.memory_space<vmem>>, vector<8x128xf32>
    %249 = arith.truncf %238 : vector<8x128xf32> to vector<8x128xbf16>
    %cst_144 = arith.constant dense<0.000000e+00> : vector<8x128xf32>
    %250 = tpu.matmul %249, %125, %cst_144 {dimension_numbers = #tpu.dot_dimension_numbers<[1], [0], [0], [1], [0, 0, 1, 1], [], []>} : vector<8x128xbf16>, vector<128x128xbf16>, vector<8x128xf32> -> vector<8x128xf32>
    %cst_145 = arith.constant dense<0.000000e+00> : vector<8x128xf32>
    %251 = tpu.matmul %249, %127, %cst_145 {dimension_numbers = #tpu.dot_dimension_numbers<[1], [0], [0], [1], [0, 0, 1, 1], [], []>} : vector<8x128xbf16>, vector<128x128xbf16>, vector<8x128xf32> -> vector<8x128xf32>
    %cst_146 = arith.constant dense<0.000000e+00> : vector<8x128xf32>
    %252 = tpu.matmul %249, %129, %cst_146 {dimension_numbers = #tpu.dot_dimension_numbers<[1], [0], [0], [1], [0, 0, 1, 1], [], []>} : vector<8x128xbf16>, vector<128x128xbf16>, vector<8x128xf32> -> vector<8x128xf32>
    %253 = arith.addf %244, %250 : vector<8x128xf32>
    %254 = arith.negf %253 : vector<8x128xf32>
    %255 = math.exp %254 : vector<8x128xf32>
    %cst_147 = arith.constant 1.000000e+00 : f32
    %256 = vector.broadcast %cst_147 : f32 to vector<8x128xf32>
    %257 = arith.addf %256, %255 : vector<8x128xf32>
    %258 = arith.divf %256, %257 : vector<8x128xf32>
    %259 = arith.addf %246, %251 : vector<8x128xf32>
    %260 = arith.negf %259 : vector<8x128xf32>
    %261 = math.exp %260 : vector<8x128xf32>
    %cst_148 = arith.constant 1.000000e+00 : f32
    %262 = vector.broadcast %cst_148 : f32 to vector<8x128xf32>
    %263 = arith.addf %262, %261 : vector<8x128xf32>
    %264 = arith.divf %262, %263 : vector<8x128xf32>
    %265 = arith.addf %252, %133 : vector<8x128xf32>
    %266 = arith.mulf %258, %265 : vector<8x128xf32>
    %267 = arith.addf %248, %266 : vector<8x128xf32>
    %268 = math.tanh %267 : vector<8x128xf32>
    %cst_149 = arith.constant 1.000000e+00 : f32
    %269 = vector.broadcast %cst_149 : f32 to vector<8x128xf32>
    %270 = arith.subf %269, %264 : vector<8x128xf32>
    %271 = arith.mulf %270, %268 : vector<8x128xf32>
    %272 = arith.mulf %264, %238 : vector<8x128xf32>
    %273 = arith.addf %271, %272 : vector<8x128xf32>
    %274 = arith.index_cast %242 : i32 to index
    %c0_150 = arith.constant 0 : index
    %275 = vector.load %arg10[%274, %c0_150] : memref<64x128xf32, #tpu.memory_space<vmem>>, vector<8x128xf32>
    tpu.vector_store %arg10[%274, %c0_150], %273 {strides = array<i32>} : memref<64x128xf32, #tpu.memory_space<vmem>>, vector<8x128xf32>,
    %c4_i32 = arith.constant 4 : i32
    %c8_i32_151 = arith.constant 8 : i32
    %276 = arith.muli %c4_i32, %c8_i32_151 : i32
    %277 = tpu.assume_multiple %276, 8 : i32
    %278 = arith.index_cast %277 : i32 to index
    %c0_152 = arith.constant 0 : index
    %279 = vector.load %arg11[%278, %c0_152] : memref<64x128xf32, #tpu.memory_space<vmem>>, vector<8x128xf32>
    %280 = arith.index_cast %277 : i32 to index
    %c0_153 = arith.constant 0 : index
    %281 = vector.load %arg12[%280, %c0_153] : memref<64x128xf32, #tpu.memory_space<vmem>>, vector<8x128xf32>
    %282 = arith.index_cast %277 : i32 to index
    %c0_154 = arith.constant 0 : index
    %283 = vector.load %arg13[%282, %c0_154] : memref<64x128xf32, #tpu.memory_space<vmem>>, vector<8x128xf32>
    %284 = arith.truncf %273 : vector<8x128xf32> to vector<8x128xbf16>
    %cst_155 = arith.constant dense<0.000000e+00> : vector<8x128xf32>
    %285 = tpu.matmul %284, %125, %cst_155 {dimension_numbers = #tpu.dot_dimension_numbers<[1], [0], [0], [1], [0, 0, 1, 1], [], []>} : vector<8x128xbf16>, vector<128x128xbf16>, vector<8x128xf32> -> vector<8x128xf32>
    %cst_156 = arith.constant dense<0.000000e+00> : vector<8x128xf32>
    %286 = tpu.matmul %284, %127, %cst_156 {dimension_numbers = #tpu.dot_dimension_numbers<[1], [0], [0], [1], [0, 0, 1, 1], [], []>} : vector<8x128xbf16>, vector<128x128xbf16>, vector<8x128xf32> -> vector<8x128xf32>
    %cst_157 = arith.constant dense<0.000000e+00> : vector<8x128xf32>
    %287 = tpu.matmul %284, %129, %cst_157 {dimension_numbers = #tpu.dot_dimension_numbers<[1], [0], [0], [1], [0, 0, 1, 1], [], []>} : vector<8x128xbf16>, vector<128x128xbf16>, vector<8x128xf32> -> vector<8x128xf32>
    %288 = arith.addf %279, %285 : vector<8x128xf32>
    %289 = arith.negf %288 : vector<8x128xf32>
    %290 = math.exp %289 : vector<8x128xf32>
    %cst_158 = arith.constant 1.000000e+00 : f32
    %291 = vector.broadcast %cst_158 : f32 to vector<8x128xf32>
    %292 = arith.addf %291, %290 : vector<8x128xf32>
    %293 = arith.divf %291, %292 : vector<8x128xf32>
    %294 = arith.addf %281, %286 : vector<8x128xf32>
    %295 = arith.negf %294 : vector<8x128xf32>
    %296 = math.exp %295 : vector<8x128xf32>
    %cst_159 = arith.constant 1.000000e+00 : f32
    %297 = vector.broadcast %cst_159 : f32 to vector<8x128xf32>
    %298 = arith.addf %297, %296 : vector<8x128xf32>
    %299 = arith.divf %297, %298 : vector<8x128xf32>
    %300 = arith.addf %287, %133 : vector<8x128xf32>
    %301 = arith.mulf %293, %300 : vector<8x128xf32>
    %302 = arith.addf %283, %301 : vector<8x128xf32>
    %303 = math.tanh %302 : vector<8x128xf32>
    %cst_160 = arith.constant 1.000000e+00 : f32
    %304 = vector.broadcast %cst_160 : f32 to vector<8x128xf32>
    %305 = arith.subf %304, %299 : vector<8x128xf32>
    %306 = arith.mulf %305, %303 : vector<8x128xf32>
    %307 = arith.mulf %299, %273 : vector<8x128xf32>
    %308 = arith.addf %306, %307 : vector<8x128xf32>
    %309 = arith.index_cast %277 : i32 to index
    %c0_161 = arith.constant 0 : index
    %310 = vector.load %arg10[%309, %c0_161] : memref<64x128xf32, #tpu.memory_space<vmem>>, vector<8x128xf32>
    tpu.vector_store %arg10[%309, %c0_161], %308 {strides = array<i32>} : memref<64x128xf32, #tpu.memory_space<vmem>>, vector<8x128xf32>,
    %c5_i32 = arith.constant 5 : i32
    %c8_i32_162 = arith.constant 8 : i32
    %311 = arith.muli %c5_i32, %c8_i32_162 : i32
    %312 = tpu.assume_multiple %311, 8 : i32
    %313 = arith.index_cast %312 : i32 to index
    %c0_163 = arith.constant 0 : index
    %314 = vector.load %arg11[%313, %c0_163] : memref<64x128xf32, #tpu.memory_space<vmem>>, vector<8x128xf32>
    %315 = arith.index_cast %312 : i32 to index
    %c0_164 = arith.constant 0 : index
    %316 = vector.load %arg12[%315, %c0_164] : memref<64x128xf32, #tpu.memory_space<vmem>>, vector<8x128xf32>
    %317 = arith.index_cast %312 : i32 to index
    %c0_165 = arith.constant 0 : index
    %318 = vector.load %arg13[%317, %c0_165] : memref<64x128xf32, #tpu.memory_space<vmem>>, vector<8x128xf32>
    %319 = arith.truncf %308 : vector<8x128xf32> to vector<8x128xbf16>
    %cst_166 = arith.constant dense<0.000000e+00> : vector<8x128xf32>
    %320 = tpu.matmul %319, %125, %cst_166 {dimension_numbers = #tpu.dot_dimension_numbers<[1], [0], [0], [1], [0, 0, 1, 1], [], []>} : vector<8x128xbf16>, vector<128x128xbf16>, vector<8x128xf32> -> vector<8x128xf32>
    %cst_167 = arith.constant dense<0.000000e+00> : vector<8x128xf32>
    %321 = tpu.matmul %319, %127, %cst_167 {dimension_numbers = #tpu.dot_dimension_numbers<[1], [0], [0], [1], [0, 0, 1, 1], [], []>} : vector<8x128xbf16>, vector<128x128xbf16>, vector<8x128xf32> -> vector<8x128xf32>
    %cst_168 = arith.constant dense<0.000000e+00> : vector<8x128xf32>
    %322 = tpu.matmul %319, %129, %cst_168 {dimension_numbers = #tpu.dot_dimension_numbers<[1], [0], [0], [1], [0, 0, 1, 1], [], []>} : vector<8x128xbf16>, vector<128x128xbf16>, vector<8x128xf32> -> vector<8x128xf32>
    %323 = arith.addf %314, %320 : vector<8x128xf32>
    %324 = arith.negf %323 : vector<8x128xf32>
    %325 = math.exp %324 : vector<8x128xf32>
    %cst_169 = arith.constant 1.000000e+00 : f32
    %326 = vector.broadcast %cst_169 : f32 to vector<8x128xf32>
    %327 = arith.addf %326, %325 : vector<8x128xf32>
    %328 = arith.divf %326, %327 : vector<8x128xf32>
    %329 = arith.addf %316, %321 : vector<8x128xf32>
    %330 = arith.negf %329 : vector<8x128xf32>
    %331 = math.exp %330 : vector<8x128xf32>
    %cst_170 = arith.constant 1.000000e+00 : f32
    %332 = vector.broadcast %cst_170 : f32 to vector<8x128xf32>
    %333 = arith.addf %332, %331 : vector<8x128xf32>
    %334 = arith.divf %332, %333 : vector<8x128xf32>
    %335 = arith.addf %322, %133 : vector<8x128xf32>
    %336 = arith.mulf %328, %335 : vector<8x128xf32>
    %337 = arith.addf %318, %336 : vector<8x128xf32>
    %338 = math.tanh %337 : vector<8x128xf32>
    %cst_171 = arith.constant 1.000000e+00 : f32
    %339 = vector.broadcast %cst_171 : f32 to vector<8x128xf32>
    %340 = arith.subf %339, %334 : vector<8x128xf32>
    %341 = arith.mulf %340, %338 : vector<8x128xf32>
    %342 = arith.mulf %334, %308 : vector<8x128xf32>
    %343 = arith.addf %341, %342 : vector<8x128xf32>
    %344 = arith.index_cast %312 : i32 to index
    %c0_172 = arith.constant 0 : index
    %345 = vector.load %arg10[%344, %c0_172] : memref<64x128xf32, #tpu.memory_space<vmem>>, vector<8x128xf32>
    tpu.vector_store %arg10[%344, %c0_172], %343 {strides = array<i32>} : memref<64x128xf32, #tpu.memory_space<vmem>>, vector<8x128xf32>,
    %c6_i32 = arith.constant 6 : i32
    %c8_i32_173 = arith.constant 8 : i32
    %346 = arith.muli %c6_i32, %c8_i32_173 : i32
    %347 = tpu.assume_multiple %346, 8 : i32
    %348 = arith.index_cast %347 : i32 to index
    %c0_174 = arith.constant 0 : index
    %349 = vector.load %arg11[%348, %c0_174] : memref<64x128xf32, #tpu.memory_space<vmem>>, vector<8x128xf32>
    %350 = arith.index_cast %347 : i32 to index
    %c0_175 = arith.constant 0 : index
    %351 = vector.load %arg12[%350, %c0_175] : memref<64x128xf32, #tpu.memory_space<vmem>>, vector<8x128xf32>
    %352 = arith.index_cast %347 : i32 to index
    %c0_176 = arith.constant 0 : index
    %353 = vector.load %arg13[%352, %c0_176] : memref<64x128xf32, #tpu.memory_space<vmem>>, vector<8x128xf32>
    %354 = arith.truncf %343 : vector<8x128xf32> to vector<8x128xbf16>
    %cst_177 = arith.constant dense<0.000000e+00> : vector<8x128xf32>
    %355 = tpu.matmul %354, %125, %cst_177 {dimension_numbers = #tpu.dot_dimension_numbers<[1], [0], [0], [1], [0, 0, 1, 1], [], []>} : vector<8x128xbf16>, vector<128x128xbf16>, vector<8x128xf32> -> vector<8x128xf32>
    %cst_178 = arith.constant dense<0.000000e+00> : vector<8x128xf32>
    %356 = tpu.matmul %354, %127, %cst_178 {dimension_numbers = #tpu.dot_dimension_numbers<[1], [0], [0], [1], [0, 0, 1, 1], [], []>} : vector<8x128xbf16>, vector<128x128xbf16>, vector<8x128xf32> -> vector<8x128xf32>
    %cst_179 = arith.constant dense<0.000000e+00> : vector<8x128xf32>
    %357 = tpu.matmul %354, %129, %cst_179 {dimension_numbers = #tpu.dot_dimension_numbers<[1], [0], [0], [1], [0, 0, 1, 1], [], []>} : vector<8x128xbf16>, vector<128x128xbf16>, vector<8x128xf32> -> vector<8x128xf32>
    %358 = arith.addf %349, %355 : vector<8x128xf32>
    %359 = arith.negf %358 : vector<8x128xf32>
    %360 = math.exp %359 : vector<8x128xf32>
    %cst_180 = arith.constant 1.000000e+00 : f32
    %361 = vector.broadcast %cst_180 : f32 to vector<8x128xf32>
    %362 = arith.addf %361, %360 : vector<8x128xf32>
    %363 = arith.divf %361, %362 : vector<8x128xf32>
    %364 = arith.addf %351, %356 : vector<8x128xf32>
    %365 = arith.negf %364 : vector<8x128xf32>
    %366 = math.exp %365 : vector<8x128xf32>
    %cst_181 = arith.constant 1.000000e+00 : f32
    %367 = vector.broadcast %cst_181 : f32 to vector<8x128xf32>
    %368 = arith.addf %367, %366 : vector<8x128xf32>
    %369 = arith.divf %367, %368 : vector<8x128xf32>
    %370 = arith.addf %357, %133 : vector<8x128xf32>
    %371 = arith.mulf %363, %370 : vector<8x128xf32>
    %372 = arith.addf %353, %371 : vector<8x128xf32>
    %373 = math.tanh %372 : vector<8x128xf32>
    %cst_182 = arith.constant 1.000000e+00 : f32
    %374 = vector.broadcast %cst_182 : f32 to vector<8x128xf32>
    %375 = arith.subf %374, %369 : vector<8x128xf32>
    %376 = arith.mulf %375, %373 : vector<8x128xf32>
    %377 = arith.mulf %369, %343 : vector<8x128xf32>
    %378 = arith.addf %376, %377 : vector<8x128xf32>
    %379 = arith.index_cast %347 : i32 to index
    %c0_183 = arith.constant 0 : index
    %380 = vector.load %arg10[%379, %c0_183] : memref<64x128xf32, #tpu.memory_space<vmem>>, vector<8x128xf32>
    tpu.vector_store %arg10[%379, %c0_183], %378 {strides = array<i32>} : memref<64x128xf32, #tpu.memory_space<vmem>>, vector<8x128xf32>,
    %c7_i32 = arith.constant 7 : i32
    %c8_i32_184 = arith.constant 8 : i32
    %381 = arith.muli %c7_i32, %c8_i32_184 : i32
    %382 = tpu.assume_multiple %381, 8 : i32
    %383 = arith.index_cast %382 : i32 to index
    %c0_185 = arith.constant 0 : index
    %384 = vector.load %arg11[%383, %c0_185] : memref<64x128xf32, #tpu.memory_space<vmem>>, vector<8x128xf32>
    %385 = arith.index_cast %382 : i32 to index
    %c0_186 = arith.constant 0 : index
    %386 = vector.load %arg12[%385, %c0_186] : memref<64x128xf32, #tpu.memory_space<vmem>>, vector<8x128xf32>
    %387 = arith.index_cast %382 : i32 to index
    %c0_187 = arith.constant 0 : index
    %388 = vector.load %arg13[%387, %c0_187] : memref<64x128xf32, #tpu.memory_space<vmem>>, vector<8x128xf32>
    %389 = arith.truncf %378 : vector<8x128xf32> to vector<8x128xbf16>
    %cst_188 = arith.constant dense<0.000000e+00> : vector<8x128xf32>
    %390 = tpu.matmul %389, %125, %cst_188 {dimension_numbers = #tpu.dot_dimension_numbers<[1], [0], [0], [1], [0, 0, 1, 1], [], []>} : vector<8x128xbf16>, vector<128x128xbf16>, vector<8x128xf32> -> vector<8x128xf32>
    %cst_189 = arith.constant dense<0.000000e+00> : vector<8x128xf32>
    %391 = tpu.matmul %389, %127, %cst_189 {dimension_numbers = #tpu.dot_dimension_numbers<[1], [0], [0], [1], [0, 0, 1, 1], [], []>} : vector<8x128xbf16>, vector<128x128xbf16>, vector<8x128xf32> -> vector<8x128xf32>
    %cst_190 = arith.constant dense<0.000000e+00> : vector<8x128xf32>
    %392 = tpu.matmul %389, %129, %cst_190 {dimension_numbers = #tpu.dot_dimension_numbers<[1], [0], [0], [1], [0, 0, 1, 1], [], []>} : vector<8x128xbf16>, vector<128x128xbf16>, vector<8x128xf32> -> vector<8x128xf32>
    %393 = arith.addf %384, %390 : vector<8x128xf32>
    %394 = arith.negf %393 : vector<8x128xf32>
    %395 = math.exp %394 : vector<8x128xf32>
    %cst_191 = arith.constant 1.000000e+00 : f32
    %396 = vector.broadcast %cst_191 : f32 to vector<8x128xf32>
    %397 = arith.addf %396, %395 : vector<8x128xf32>
    %398 = arith.divf %396, %397 : vector<8x128xf32>
    %399 = arith.addf %386, %391 : vector<8x128xf32>
    %400 = arith.negf %399 : vector<8x128xf32>
    %401 = math.exp %400 : vector<8x128xf32>
    %cst_192 = arith.constant 1.000000e+00 : f32
    %402 = vector.broadcast %cst_192 : f32 to vector<8x128xf32>
    %403 = arith.addf %402, %401 : vector<8x128xf32>
    %404 = arith.divf %402, %403 : vector<8x128xf32>
    %405 = arith.addf %392, %133 : vector<8x128xf32>
    %406 = arith.mulf %398, %405 : vector<8x128xf32>
    %407 = arith.addf %388, %406 : vector<8x128xf32>
    %408 = math.tanh %407 : vector<8x128xf32>
    %cst_193 = arith.constant 1.000000e+00 : f32
    %409 = vector.broadcast %cst_193 : f32 to vector<8x128xf32>
    %410 = arith.subf %409, %404 : vector<8x128xf32>
    %411 = arith.mulf %410, %408 : vector<8x128xf32>
    %412 = arith.mulf %404, %378 : vector<8x128xf32>
    %413 = arith.addf %411, %412 : vector<8x128xf32>
    %414 = arith.index_cast %382 : i32 to index
    %c0_194 = arith.constant 0 : index
    %415 = vector.load %arg10[%414, %c0_194] : memref<64x128xf32, #tpu.memory_space<vmem>>, vector<8x128xf32>
    tpu.vector_store %arg10[%414, %c0_194], %413 {strides = array<i32>} : memref<64x128xf32, #tpu.memory_space<vmem>>, vector<8x128xf32>,
    %c8_i32_195 = arith.constant 8 : i32
    %c0_196 = arith.constant 0 : index
    %c0_197 = arith.constant 0 : index
    %c0_198 = arith.constant 0 : index
    %416 = vector.load %arg9[%c0_196, %c0_197, %c0_198] : memref<2x8x128xf32, #tpu.memory_space<vmem>>, vector<1x8x128xf32>
    %417 = vector.shape_cast %416 : vector<1x8x128xf32> to vector<8x128xf32>
    %418 = vector.shape_cast %413 : vector<8x128xf32> to vector<1x8x128xf32>
    tpu.vector_store %arg9[%c0_196, %c0_197, %c0_198], %418 {strides = array<i32>} : memref<2x8x128xf32, #tpu.memory_space<vmem>>, vector<1x8x128xf32>,
    %c0_199 = arith.constant 0 : index
    %c0_200 = arith.constant 0 : index
    %419 = vector.load %arg10[%c0_199, %c0_200] : memref<64x128xf32, #tpu.memory_space<vmem>>, vector<64x128xf32>
    %420 = arith.truncf %419 : vector<64x128xf32> to vector<64x128xbf16>
    %c1_201 = arith.constant 1 : index
    %c0_202 = arith.constant 0 : index
    %c0_203 = arith.constant 0 : index
    %c0_204 = arith.constant 0 : index
    %421 = vector.load %arg3[%c1_201, %c0_202, %c0_203, %c0_204] : memref<2x3x128x128xbf16, #tpu.memory_space<vmem>>, vector<1x1x128x128xbf16>
    %422 = vector.shape_cast %421 : vector<1x1x128x128xbf16> to vector<128x128xbf16>
    %cst_205 = arith.constant dense<0.000000e+00> : vector<64x128xf32>
    %423 = tpu.matmul %420, %422, %cst_205 {dimension_numbers = #tpu.dot_dimension_numbers<[1], [0], [0], [1], [0, 0, 1, 1], [], []>} : vector<64x128xbf16>, vector<128x128xbf16>, vector<64x128xf32> -> vector<64x128xf32>
    %c1_206 = arith.constant 1 : index
    %c0_207 = arith.constant 0 : index
    %c0_208 = arith.constant 0 : index
    %c0_209 = arith.constant 0 : index
    %424 = vector.load %arg5[%c1_206, %c0_207, %c0_208, %c0_209] : memref<2x4x1x128xf32, #tpu.memory_space<vmem>>, vector<1x1x1x128xf32>
    %425 = vector.shape_cast %424 : vector<1x1x1x128xf32> to vector<1x128xf32>
    %426 = vector.broadcast %425 : vector<1x128xf32> to vector<64x128xf32>
    %427 = arith.addf %423, %426 : vector<64x128xf32>
    %c0_210 = arith.constant 0 : index
    %c0_211 = arith.constant 0 : index
    %428 = vector.load %arg11[%c0_210, %c0_211] : memref<64x128xf32, #tpu.memory_space<vmem>>, vector<64x128xf32>
    tpu.vector_store %arg11[%c0_210, %c0_211], %427 {strides = array<i32>} : memref<64x128xf32, #tpu.memory_space<vmem>>, vector<64x128xf32>,
    %c1_212 = arith.constant 1 : index
    %c1_213 = arith.constant 1 : index
    %c0_214 = arith.constant 0 : index
    %c0_215 = arith.constant 0 : index
    %429 = vector.load %arg3[%c1_212, %c1_213, %c0_214, %c0_215] : memref<2x3x128x128xbf16, #tpu.memory_space<vmem>>, vector<1x1x128x128xbf16>
    %430 = vector.shape_cast %429 : vector<1x1x128x128xbf16> to vector<128x128xbf16>
    %cst_216 = arith.constant dense<0.000000e+00> : vector<64x128xf32>
    %431 = tpu.matmul %420, %430, %cst_216 {dimension_numbers = #tpu.dot_dimension_numbers<[1], [0], [0], [1], [0, 0, 1, 1], [], []>} : vector<64x128xbf16>, vector<128x128xbf16>, vector<64x128xf32> -> vector<64x128xf32>
    %c1_217 = arith.constant 1 : index
    %c1_218 = arith.constant 1 : index
    %c0_219 = arith.constant 0 : index
    %c0_220 = arith.constant 0 : index
    %432 = vector.load %arg5[%c1_217, %c1_218, %c0_219, %c0_220] : memref<2x4x1x128xf32, #tpu.memory_space<vmem>>, vector<1x1x1x128xf32>
    %433 = vector.shape_cast %432 : vector<1x1x1x128xf32> to vector<1x128xf32>
    %434 = vector.broadcast %433 : vector<1x128xf32> to vector<64x128xf32>
    %435 = arith.addf %431, %434 : vector<64x128xf32>
    %c0_221 = arith.constant 0 : index
    %c0_222 = arith.constant 0 : index
    %436 = vector.load %arg12[%c0_221, %c0_222] : memref<64x128xf32, #tpu.memory_space<vmem>>, vector<64x128xf32>
    tpu.vector_store %arg12[%c0_221, %c0_222], %435 {strides = array<i32>} : memref<64x128xf32, #tpu.memory_space<vmem>>, vector<64x128xf32>,
    %c1_223 = arith.constant 1 : index
    %c2_224 = arith.constant 2 : index
    %c0_225 = arith.constant 0 : index
    %c0_226 = arith.constant 0 : index
    %437 = vector.load %arg3[%c1_223, %c2_224, %c0_225, %c0_226] : memref<2x3x128x128xbf16, #tpu.memory_space<vmem>>, vector<1x1x128x128xbf16>
    %438 = vector.shape_cast %437 : vector<1x1x128x128xbf16> to vector<128x128xbf16>
    %cst_227 = arith.constant dense<0.000000e+00> : vector<64x128xf32>
    %439 = tpu.matmul %420, %438, %cst_227 {dimension_numbers = #tpu.dot_dimension_numbers<[1], [0], [0], [1], [0, 0, 1, 1], [], []>} : vector<64x128xbf16>, vector<128x128xbf16>, vector<64x128xf32> -> vector<64x128xf32>
    %c1_228 = arith.constant 1 : index
    %c2_229 = arith.constant 2 : index
    %c0_230 = arith.constant 0 : index
    %c0_231 = arith.constant 0 : index
    %440 = vector.load %arg5[%c1_228, %c2_229, %c0_230, %c0_231] : memref<2x4x1x128xf32, #tpu.memory_space<vmem>>, vector<1x1x1x128xf32>
    %441 = vector.shape_cast %440 : vector<1x1x1x128xf32> to vector<1x128xf32>
    %442 = vector.broadcast %441 : vector<1x128xf32> to vector<64x128xf32>
    %443 = arith.addf %439, %442 : vector<64x128xf32>
    %c0_232 = arith.constant 0 : index
    %c0_233 = arith.constant 0 : index
    %444 = vector.load %arg13[%c0_232, %c0_233] : memref<64x128xf32, #tpu.memory_space<vmem>>, vector<64x128xf32>
    tpu.vector_store %arg13[%c0_232, %c0_233], %443 {strides = array<i32>} : memref<64x128xf32, #tpu.memory_space<vmem>>, vector<64x128xf32>,
    %c1_234 = arith.constant 1 : index
    %c0_235 = arith.constant 0 : index
    %c0_236 = arith.constant 0 : index
    %c0_237 = arith.constant 0 : index
    %445 = vector.load %arg4[%c1_234, %c0_235, %c0_236, %c0_237] : memref<2x3x128x128xbf16, #tpu.memory_space<vmem>>, vector<1x1x128x128xbf16>
    %446 = vector.shape_cast %445 : vector<1x1x128x128xbf16> to vector<128x128xbf16>
    %c1_238 = arith.constant 1 : index
    %c1_239 = arith.constant 1 : index
    %c0_240 = arith.constant 0 : index
    %c0_241 = arith.constant 0 : index
    %447 = vector.load %arg4[%c1_238, %c1_239, %c0_240, %c0_241] : memref<2x3x128x128xbf16, #tpu.memory_space<vmem>>, vector<1x1x128x128xbf16>
    %448 = vector.shape_cast %447 : vector<1x1x128x128xbf16> to vector<128x128xbf16>
    %c1_242 = arith.constant 1 : index
    %c2_243 = arith.constant 2 : index
    %c0_244 = arith.constant 0 : index
    %c0_245 = arith.constant 0 : index
    %449 = vector.load %arg4[%c1_242, %c2_243, %c0_244, %c0_245] : memref<2x3x128x128xbf16, #tpu.memory_space<vmem>>, vector<1x1x128x128xbf16>
    %450 = vector.shape_cast %449 : vector<1x1x128x128xbf16> to vector<128x128xbf16>
    %c1_246 = arith.constant 1 : index
    %c3_247 = arith.constant 3 : index
    %c0_248 = arith.constant 0 : index
    %c0_249 = arith.constant 0 : index
    %451 = vector.load %arg5[%c1_246, %c3_247, %c0_248, %c0_249] : memref<2x4x1x128xf32, #tpu.memory_space<vmem>>, vector<1x1x1x128xf32>
    %452 = vector.shape_cast %451 : vector<1x1x1x128xf32> to vector<1x128xf32>
    %453 = vector.shape_cast %452 : vector<1x128xf32> to vector<1x128xf32>
    %454 = vector.broadcast %453 : vector<1x128xf32> to vector<8x128xf32>
    %c1_250 = arith.constant 1 : index
    %c0_251 = arith.constant 0 : index
    %c0_252 = arith.constant 0 : index
    %455 = vector.load %arg1[%c1_250, %c0_251, %c0_252] : memref<2x8x128xf32, #tpu.memory_space<vmem>>, vector<1x8x128xf32>
    %456 = vector.shape_cast %455 : vector<1x8x128xf32> to vector<8x128xf32>
    %c0_i32_253 = arith.constant 0 : i32
    %c8_i32_254 = arith.constant 8 : i32
    %457 = arith.muli %c0_i32_253, %c8_i32_254 : i32
    %458 = tpu.assume_multiple %457, 8 : i32
    %459 = arith.index_cast %458 : i32 to index
    %c0_255 = arith.constant 0 : index
    %460 = vector.load %arg11[%459, %c0_255] : memref<64x128xf32, #tpu.memory_space<vmem>>, vector<8x128xf32>
    %461 = arith.index_cast %458 : i32 to index
    %c0_256 = arith.constant 0 : index
    %462 = vector.load %arg12[%461, %c0_256] : memref<64x128xf32, #tpu.memory_space<vmem>>, vector<8x128xf32>
    %463 = arith.index_cast %458 : i32 to index
    %c0_257 = arith.constant 0 : index
    %464 = vector.load %arg13[%463, %c0_257] : memref<64x128xf32, #tpu.memory_space<vmem>>, vector<8x128xf32>
    %465 = arith.truncf %456 : vector<8x128xf32> to vector<8x128xbf16>
    %cst_258 = arith.constant dense<0.000000e+00> : vector<8x128xf32>
    %466 = tpu.matmul %465, %446, %cst_258 {dimension_numbers = #tpu.dot_dimension_numbers<[1], [0], [0], [1], [0, 0, 1, 1], [], []>} : vector<8x128xbf16>, vector<128x128xbf16>, vector<8x128xf32> -> vector<8x128xf32>
    %cst_259 = arith.constant dense<0.000000e+00> : vector<8x128xf32>
    %467 = tpu.matmul %465, %448, %cst_259 {dimension_numbers = #tpu.dot_dimension_numbers<[1], [0], [0], [1], [0, 0, 1, 1], [], []>} : vector<8x128xbf16>, vector<128x128xbf16>, vector<8x128xf32> -> vector<8x128xf32>
    %cst_260 = arith.constant dense<0.000000e+00> : vector<8x128xf32>
    %468 = tpu.matmul %465, %450, %cst_260 {dimension_numbers = #tpu.dot_dimension_numbers<[1], [0], [0], [1], [0, 0, 1, 1], [], []>} : vector<8x128xbf16>, vector<128x128xbf16>, vector<8x128xf32> -> vector<8x128xf32>
    %469 = arith.addf %460, %466 : vector<8x128xf32>
    %470 = arith.negf %469 : vector<8x128xf32>
    %471 = math.exp %470 : vector<8x128xf32>
    %cst_261 = arith.constant 1.000000e+00 : f32
    %472 = vector.broadcast %cst_261 : f32 to vector<8x128xf32>
    %473 = arith.addf %472, %471 : vector<8x128xf32>
    %474 = arith.divf %472, %473 : vector<8x128xf32>
    %475 = arith.addf %462, %467 : vector<8x128xf32>
    %476 = arith.negf %475 : vector<8x128xf32>
    %477 = math.exp %476 : vector<8x128xf32>
    %cst_262 = arith.constant 1.000000e+00 : f32
    %478 = vector.broadcast %cst_262 : f32 to vector<8x128xf32>
    %479 = arith.addf %478, %477 : vector<8x128xf32>
    %480 = arith.divf %478, %479 : vector<8x128xf32>
    %481 = arith.addf %468, %454 : vector<8x128xf32>
    %482 = arith.mulf %474, %481 : vector<8x128xf32>
    %483 = arith.addf %464, %482 : vector<8x128xf32>
    %484 = math.tanh %483 : vector<8x128xf32>
    %cst_263 = arith.constant 1.000000e+00 : f32
    %485 = vector.broadcast %cst_263 : f32 to vector<8x128xf32>
    %486 = arith.subf %485, %480 : vector<8x128xf32>
    %487 = arith.mulf %486, %484 : vector<8x128xf32>
    %488 = arith.mulf %480, %456 : vector<8x128xf32>
    %489 = arith.addf %487, %488 : vector<8x128xf32>
    %490 = arith.index_cast %458 : i32 to index
    %c0_264 = arith.constant 0 : index
    %491 = vector.load %arg10[%490, %c0_264] : memref<64x128xf32, #tpu.memory_space<vmem>>, vector<8x128xf32>
    tpu.vector_store %arg10[%490, %c0_264], %489 {strides = array<i32>} : memref<64x128xf32, #tpu.memory_space<vmem>>, vector<8x128xf32>,
    %c1_i32_265 = arith.constant 1 : i32
    %c8_i32_266 = arith.constant 8 : i32
    %492 = arith.muli %c1_i32_265, %c8_i32_266 : i32
    %493 = tpu.assume_multiple %492, 8 : i32
    %494 = arith.index_cast %493 : i32 to index
    %c0_267 = arith.constant 0 : index
    %495 = vector.load %arg11[%494, %c0_267] : memref<64x128xf32, #tpu.memory_space<vmem>>, vector<8x128xf32>
    %496 = arith.index_cast %493 : i32 to index
    %c0_268 = arith.constant 0 : index
    %497 = vector.load %arg12[%496, %c0_268] : memref<64x128xf32, #tpu.memory_space<vmem>>, vector<8x128xf32>
    %498 = arith.index_cast %493 : i32 to index
    %c0_269 = arith.constant 0 : index
    %499 = vector.load %arg13[%498, %c0_269] : memref<64x128xf32, #tpu.memory_space<vmem>>, vector<8x128xf32>
    %500 = arith.truncf %489 : vector<8x128xf32> to vector<8x128xbf16>
    %cst_270 = arith.constant dense<0.000000e+00> : vector<8x128xf32>
    %501 = tpu.matmul %500, %446, %cst_270 {dimension_numbers = #tpu.dot_dimension_numbers<[1], [0], [0], [1], [0, 0, 1, 1], [], []>} : vector<8x128xbf16>, vector<128x128xbf16>, vector<8x128xf32> -> vector<8x128xf32>
    %cst_271 = arith.constant dense<0.000000e+00> : vector<8x128xf32>
    %502 = tpu.matmul %500, %448, %cst_271 {dimension_numbers = #tpu.dot_dimension_numbers<[1], [0], [0], [1], [0, 0, 1, 1], [], []>} : vector<8x128xbf16>, vector<128x128xbf16>, vector<8x128xf32> -> vector<8x128xf32>
    %cst_272 = arith.constant dense<0.000000e+00> : vector<8x128xf32>
    %503 = tpu.matmul %500, %450, %cst_272 {dimension_numbers = #tpu.dot_dimension_numbers<[1], [0], [0], [1], [0, 0, 1, 1], [], []>} : vector<8x128xbf16>, vector<128x128xbf16>, vector<8x128xf32> -> vector<8x128xf32>
    %504 = arith.addf %495, %501 : vector<8x128xf32>
    %505 = arith.negf %504 : vector<8x128xf32>
    %506 = math.exp %505 : vector<8x128xf32>
    %cst_273 = arith.constant 1.000000e+00 : f32
    %507 = vector.broadcast %cst_273 : f32 to vector<8x128xf32>
    %508 = arith.addf %507, %506 : vector<8x128xf32>
    %509 = arith.divf %507, %508 : vector<8x128xf32>
    %510 = arith.addf %497, %502 : vector<8x128xf32>
    %511 = arith.negf %510 : vector<8x128xf32>
    %512 = math.exp %511 : vector<8x128xf32>
    %cst_274 = arith.constant 1.000000e+00 : f32
    %513 = vector.broadcast %cst_274 : f32 to vector<8x128xf32>
    %514 = arith.addf %513, %512 : vector<8x128xf32>
    %515 = arith.divf %513, %514 : vector<8x128xf32>
    %516 = arith.addf %503, %454 : vector<8x128xf32>
    %517 = arith.mulf %509, %516 : vector<8x128xf32>
    %518 = arith.addf %499, %517 : vector<8x128xf32>
    %519 = math.tanh %518 : vector<8x128xf32>
    %cst_275 = arith.constant 1.000000e+00 : f32
    %520 = vector.broadcast %cst_275 : f32 to vector<8x128xf32>
    %521 = arith.subf %520, %515 : vector<8x128xf32>
    %522 = arith.mulf %521, %519 : vector<8x128xf32>
    %523 = arith.mulf %515, %489 : vector<8x128xf32>
    %524 = arith.addf %522, %523 : vector<8x128xf32>
    %525 = arith.index_cast %493 : i32 to index
    %c0_276 = arith.constant 0 : index
    %526 = vector.load %arg10[%525, %c0_276] : memref<64x128xf32, #tpu.memory_space<vmem>>, vector<8x128xf32>
    tpu.vector_store %arg10[%525, %c0_276], %524 {strides = array<i32>} : memref<64x128xf32, #tpu.memory_space<vmem>>, vector<8x128xf32>,
    %c2_i32_277 = arith.constant 2 : i32
    %c8_i32_278 = arith.constant 8 : i32
    %527 = arith.muli %c2_i32_277, %c8_i32_278 : i32
    %528 = tpu.assume_multiple %527, 8 : i32
    %529 = arith.index_cast %528 : i32 to index
    %c0_279 = arith.constant 0 : index
    %530 = vector.load %arg11[%529, %c0_279] : memref<64x128xf32, #tpu.memory_space<vmem>>, vector<8x128xf32>
    %531 = arith.index_cast %528 : i32 to index
    %c0_280 = arith.constant 0 : index
    %532 = vector.load %arg12[%531, %c0_280] : memref<64x128xf32, #tpu.memory_space<vmem>>, vector<8x128xf32>
    %533 = arith.index_cast %528 : i32 to index
    %c0_281 = arith.constant 0 : index
    %534 = vector.load %arg13[%533, %c0_281] : memref<64x128xf32, #tpu.memory_space<vmem>>, vector<8x128xf32>
    %535 = arith.truncf %524 : vector<8x128xf32> to vector<8x128xbf16>
    %cst_282 = arith.constant dense<0.000000e+00> : vector<8x128xf32>
    %536 = tpu.matmul %535, %446, %cst_282 {dimension_numbers = #tpu.dot_dimension_numbers<[1], [0], [0], [1], [0, 0, 1, 1], [], []>} : vector<8x128xbf16>, vector<128x128xbf16>, vector<8x128xf32> -> vector<8x128xf32>
    %cst_283 = arith.constant dense<0.000000e+00> : vector<8x128xf32>
    %537 = tpu.matmul %535, %448, %cst_283 {dimension_numbers = #tpu.dot_dimension_numbers<[1], [0], [0], [1], [0, 0, 1, 1], [], []>} : vector<8x128xbf16>, vector<128x128xbf16>, vector<8x128xf32> -> vector<8x128xf32>
    %cst_284 = arith.constant dense<0.000000e+00> : vector<8x128xf32>
    %538 = tpu.matmul %535, %450, %cst_284 {dimension_numbers = #tpu.dot_dimension_numbers<[1], [0], [0], [1], [0, 0, 1, 1], [], []>} : vector<8x128xbf16>, vector<128x128xbf16>, vector<8x128xf32> -> vector<8x128xf32>
    %539 = arith.addf %530, %536 : vector<8x128xf32>
    %540 = arith.negf %539 : vector<8x128xf32>
    %541 = math.exp %540 : vector<8x128xf32>
    %cst_285 = arith.constant 1.000000e+00 : f32
    %542 = vector.broadcast %cst_285 : f32 to vector<8x128xf32>
    %543 = arith.addf %542, %541 : vector<8x128xf32>
    %544 = arith.divf %542, %543 : vector<8x128xf32>
    %545 = arith.addf %532, %537 : vector<8x128xf32>
    %546 = arith.negf %545 : vector<8x128xf32>
    %547 = math.exp %546 : vector<8x128xf32>
    %cst_286 = arith.constant 1.000000e+00 : f32
    %548 = vector.broadcast %cst_286 : f32 to vector<8x128xf32>
    %549 = arith.addf %548, %547 : vector<8x128xf32>
    %550 = arith.divf %548, %549 : vector<8x128xf32>
    %551 = arith.addf %538, %454 : vector<8x128xf32>
    %552 = arith.mulf %544, %551 : vector<8x128xf32>
    %553 = arith.addf %534, %552 : vector<8x128xf32>
    %554 = math.tanh %553 : vector<8x128xf32>
    %cst_287 = arith.constant 1.000000e+00 : f32
    %555 = vector.broadcast %cst_287 : f32 to vector<8x128xf32>
    %556 = arith.subf %555, %550 : vector<8x128xf32>
    %557 = arith.mulf %556, %554 : vector<8x128xf32>
    %558 = arith.mulf %550, %524 : vector<8x128xf32>
    %559 = arith.addf %557, %558 : vector<8x128xf32>
    %560 = arith.index_cast %528 : i32 to index
    %c0_288 = arith.constant 0 : index
    %561 = vector.load %arg10[%560, %c0_288] : memref<64x128xf32, #tpu.memory_space<vmem>>, vector<8x128xf32>
    tpu.vector_store %arg10[%560, %c0_288], %559 {strides = array<i32>} : memref<64x128xf32, #tpu.memory_space<vmem>>, vector<8x128xf32>,
    %c3_i32_289 = arith.constant 3 : i32
    %c8_i32_290 = arith.constant 8 : i32
    %562 = arith.muli %c3_i32_289, %c8_i32_290 : i32
    %563 = tpu.assume_multiple %562, 8 : i32
    %564 = arith.index_cast %563 : i32 to index
    %c0_291 = arith.constant 0 : index
    %565 = vector.load %arg11[%564, %c0_291] : memref<64x128xf32, #tpu.memory_space<vmem>>, vector<8x128xf32>
    %566 = arith.index_cast %563 : i32 to index
    %c0_292 = arith.constant 0 : index
    %567 = vector.load %arg12[%566, %c0_292] : memref<64x128xf32, #tpu.memory_space<vmem>>, vector<8x128xf32>
    %568 = arith.index_cast %563 : i32 to index
    %c0_293 = arith.constant 0 : index
    %569 = vector.load %arg13[%568, %c0_293] : memref<64x128xf32, #tpu.memory_space<vmem>>, vector<8x128xf32>
    %570 = arith.truncf %559 : vector<8x128xf32> to vector<8x128xbf16>
    %cst_294 = arith.constant dense<0.000000e+00> : vector<8x128xf32>
    %571 = tpu.matmul %570, %446, %cst_294 {dimension_numbers = #tpu.dot_dimension_numbers<[1], [0], [0], [1], [0, 0, 1, 1], [], []>} : vector<8x128xbf16>, vector<128x128xbf16>, vector<8x128xf32> -> vector<8x128xf32>
    %cst_295 = arith.constant dense<0.000000e+00> : vector<8x128xf32>
    %572 = tpu.matmul %570, %448, %cst_295 {dimension_numbers = #tpu.dot_dimension_numbers<[1], [0], [0], [1], [0, 0, 1, 1], [], []>} : vector<8x128xbf16>, vector<128x128xbf16>, vector<8x128xf32> -> vector<8x128xf32>
    %cst_296 = arith.constant dense<0.000000e+00> : vector<8x128xf32>
    %573 = tpu.matmul %570, %450, %cst_296 {dimension_numbers = #tpu.dot_dimension_numbers<[1], [0], [0], [1], [0, 0, 1, 1], [], []>} : vector<8x128xbf16>, vector<128x128xbf16>, vector<8x128xf32> -> vector<8x128xf32>
    %574 = arith.addf %565, %571 : vector<8x128xf32>
    %575 = arith.negf %574 : vector<8x128xf32>
    %576 = math.exp %575 : vector<8x128xf32>
    %cst_297 = arith.constant 1.000000e+00 : f32
    %577 = vector.broadcast %cst_297 : f32 to vector<8x128xf32>
    %578 = arith.addf %577, %576 : vector<8x128xf32>
    %579 = arith.divf %577, %578 : vector<8x128xf32>
    %580 = arith.addf %567, %572 : vector<8x128xf32>
    %581 = arith.negf %580 : vector<8x128xf32>
    %582 = math.exp %581 : vector<8x128xf32>
    %cst_298 = arith.constant 1.000000e+00 : f32
    %583 = vector.broadcast %cst_298 : f32 to vector<8x128xf32>
    %584 = arith.addf %583, %582 : vector<8x128xf32>
    %585 = arith.divf %583, %584 : vector<8x128xf32>
    %586 = arith.addf %573, %454 : vector<8x128xf32>
    %587 = arith.mulf %579, %586 : vector<8x128xf32>
    %588 = arith.addf %569, %587 : vector<8x128xf32>
    %589 = math.tanh %588 : vector<8x128xf32>
    %cst_299 = arith.constant 1.000000e+00 : f32
    %590 = vector.broadcast %cst_299 : f32 to vector<8x128xf32>
    %591 = arith.subf %590, %585 : vector<8x128xf32>
    %592 = arith.mulf %591, %589 : vector<8x128xf32>
    %593 = arith.mulf %585, %559 : vector<8x128xf32>
    %594 = arith.addf %592, %593 : vector<8x128xf32>
    %595 = arith.index_cast %563 : i32 to index
    %c0_300 = arith.constant 0 : index
    %596 = vector.load %arg10[%595, %c0_300] : memref<64x128xf32, #tpu.memory_space<vmem>>, vector<8x128xf32>
    tpu.vector_store %arg10[%595, %c0_300], %594 {strides = array<i32>} : memref<64x128xf32, #tpu.memory_space<vmem>>, vector<8x128xf32>,
    %c4_i32_301 = arith.constant 4 : i32
    %c8_i32_302 = arith.constant 8 : i32
    %597 = arith.muli %c4_i32_301, %c8_i32_302 : i32
    %598 = tpu.assume_multiple %597, 8 : i32
    %599 = arith.index_cast %598 : i32 to index
    %c0_303 = arith.constant 0 : index
    %600 = vector.load %arg11[%599, %c0_303] : memref<64x128xf32, #tpu.memory_space<vmem>>, vector<8x128xf32>
    %601 = arith.index_cast %598 : i32 to index
    %c0_304 = arith.constant 0 : index
    %602 = vector.load %arg12[%601, %c0_304] : memref<64x128xf32, #tpu.memory_space<vmem>>, vector<8x128xf32>
    %603 = arith.index_cast %598 : i32 to index
    %c0_305 = arith.constant 0 : index
    %604 = vector.load %arg13[%603, %c0_305] : memref<64x128xf32, #tpu.memory_space<vmem>>, vector<8x128xf32>
    %605 = arith.truncf %594 : vector<8x128xf32> to vector<8x128xbf16>
    %cst_306 = arith.constant dense<0.000000e+00> : vector<8x128xf32>
    %606 = tpu.matmul %605, %446, %cst_306 {dimension_numbers = #tpu.dot_dimension_numbers<[1], [0], [0], [1], [0, 0, 1, 1], [], []>} : vector<8x128xbf16>, vector<128x128xbf16>, vector<8x128xf32> -> vector<8x128xf32>
    %cst_307 = arith.constant dense<0.000000e+00> : vector<8x128xf32>
    %607 = tpu.matmul %605, %448, %cst_307 {dimension_numbers = #tpu.dot_dimension_numbers<[1], [0], [0], [1], [0, 0, 1, 1], [], []>} : vector<8x128xbf16>, vector<128x128xbf16>, vector<8x128xf32> -> vector<8x128xf32>
    %cst_308 = arith.constant dense<0.000000e+00> : vector<8x128xf32>
    %608 = tpu.matmul %605, %450, %cst_308 {dimension_numbers = #tpu.dot_dimension_numbers<[1], [0], [0], [1], [0, 0, 1, 1], [], []>} : vector<8x128xbf16>, vector<128x128xbf16>, vector<8x128xf32> -> vector<8x128xf32>
    %609 = arith.addf %600, %606 : vector<8x128xf32>
    %610 = arith.negf %609 : vector<8x128xf32>
    %611 = math.exp %610 : vector<8x128xf32>
    %cst_309 = arith.constant 1.000000e+00 : f32
    %612 = vector.broadcast %cst_309 : f32 to vector<8x128xf32>
    %613 = arith.addf %612, %611 : vector<8x128xf32>
    %614 = arith.divf %612, %613 : vector<8x128xf32>
    %615 = arith.addf %602, %607 : vector<8x128xf32>
    %616 = arith.negf %615 : vector<8x128xf32>
    %617 = math.exp %616 : vector<8x128xf32>
    %cst_310 = arith.constant 1.000000e+00 : f32
    %618 = vector.broadcast %cst_310 : f32 to vector<8x128xf32>
    %619 = arith.addf %618, %617 : vector<8x128xf32>
    %620 = arith.divf %618, %619 : vector<8x128xf32>
    %621 = arith.addf %608, %454 : vector<8x128xf32>
    %622 = arith.mulf %614, %621 : vector<8x128xf32>
    %623 = arith.addf %604, %622 : vector<8x128xf32>
    %624 = math.tanh %623 : vector<8x128xf32>
    %cst_311 = arith.constant 1.000000e+00 : f32
    %625 = vector.broadcast %cst_311 : f32 to vector<8x128xf32>
    %626 = arith.subf %625, %620 : vector<8x128xf32>
    %627 = arith.mulf %626, %624 : vector<8x128xf32>
    %628 = arith.mulf %620, %594 : vector<8x128xf32>
    %629 = arith.addf %627, %628 : vector<8x128xf32>
    %630 = arith.index_cast %598 : i32 to index
    %c0_312 = arith.constant 0 : index
    %631 = vector.load %arg10[%630, %c0_312] : memref<64x128xf32, #tpu.memory_space<vmem>>, vector<8x128xf32>
    tpu.vector_store %arg10[%630, %c0_312], %629 {strides = array<i32>} : memref<64x128xf32, #tpu.memory_space<vmem>>, vector<8x128xf32>,
    %c5_i32_313 = arith.constant 5 : i32
    %c8_i32_314 = arith.constant 8 : i32
    %632 = arith.muli %c5_i32_313, %c8_i32_314 : i32
    %633 = tpu.assume_multiple %632, 8 : i32
    %634 = arith.index_cast %633 : i32 to index
    %c0_315 = arith.constant 0 : index
    %635 = vector.load %arg11[%634, %c0_315] : memref<64x128xf32, #tpu.memory_space<vmem>>, vector<8x128xf32>
    %636 = arith.index_cast %633 : i32 to index
    %c0_316 = arith.constant 0 : index
    %637 = vector.load %arg12[%636, %c0_316] : memref<64x128xf32, #tpu.memory_space<vmem>>, vector<8x128xf32>
    %638 = arith.index_cast %633 : i32 to index
    %c0_317 = arith.constant 0 : index
    %639 = vector.load %arg13[%638, %c0_317] : memref<64x128xf32, #tpu.memory_space<vmem>>, vector<8x128xf32>
    %640 = arith.truncf %629 : vector<8x128xf32> to vector<8x128xbf16>
    %cst_318 = arith.constant dense<0.000000e+00> : vector<8x128xf32>
    %641 = tpu.matmul %640, %446, %cst_318 {dimension_numbers = #tpu.dot_dimension_numbers<[1], [0], [0], [1], [0, 0, 1, 1], [], []>} : vector<8x128xbf16>, vector<128x128xbf16>, vector<8x128xf32> -> vector<8x128xf32>
    %cst_319 = arith.constant dense<0.000000e+00> : vector<8x128xf32>
    %642 = tpu.matmul %640, %448, %cst_319 {dimension_numbers = #tpu.dot_dimension_numbers<[1], [0], [0], [1], [0, 0, 1, 1], [], []>} : vector<8x128xbf16>, vector<128x128xbf16>, vector<8x128xf32> -> vector<8x128xf32>
    %cst_320 = arith.constant dense<0.000000e+00> : vector<8x128xf32>
    %643 = tpu.matmul %640, %450, %cst_320 {dimension_numbers = #tpu.dot_dimension_numbers<[1], [0], [0], [1], [0, 0, 1, 1], [], []>} : vector<8x128xbf16>, vector<128x128xbf16>, vector<8x128xf32> -> vector<8x128xf32>
    %644 = arith.addf %635, %641 : vector<8x128xf32>
    %645 = arith.negf %644 : vector<8x128xf32>
    %646 = math.exp %645 : vector<8x128xf32>
    %cst_321 = arith.constant 1.000000e+00 : f32
    %647 = vector.broadcast %cst_321 : f32 to vector<8x128xf32>
    %648 = arith.addf %647, %646 : vector<8x128xf32>
    %649 = arith.divf %647, %648 : vector<8x128xf32>
    %650 = arith.addf %637, %642 : vector<8x128xf32>
    %651 = arith.negf %650 : vector<8x128xf32>
    %652 = math.exp %651 : vector<8x128xf32>
    %cst_322 = arith.constant 1.000000e+00 : f32
    %653 = vector.broadcast %cst_322 : f32 to vector<8x128xf32>
    %654 = arith.addf %653, %652 : vector<8x128xf32>
    %655 = arith.divf %653, %654 : vector<8x128xf32>
    %656 = arith.addf %643, %454 : vector<8x128xf32>
    %657 = arith.mulf %649, %656 : vector<8x128xf32>
    %658 = arith.addf %639, %657 : vector<8x128xf32>
    %659 = math.tanh %658 : vector<8x128xf32>
    %cst_323 = arith.constant 1.000000e+00 : f32
    %660 = vector.broadcast %cst_323 : f32 to vector<8x128xf32>
    %661 = arith.subf %660, %655 : vector<8x128xf32>
    %662 = arith.mulf %661, %659 : vector<8x128xf32>
    %663 = arith.mulf %655, %629 : vector<8x128xf32>
    %664 = arith.addf %662, %663 : vector<8x128xf32>
    %665 = arith.index_cast %633 : i32 to index
    %c0_324 = arith.constant 0 : index
    %666 = vector.load %arg10[%665, %c0_324] : memref<64x128xf32, #tpu.memory_space<vmem>>, vector<8x128xf32>
    tpu.vector_store %arg10[%665, %c0_324], %664 {strides = array<i32>} : memref<64x128xf32, #tpu.memory_space<vmem>>, vector<8x128xf32>,
    %c6_i32_325 = arith.constant 6 : i32
    %c8_i32_326 = arith.constant 8 : i32
    %667 = arith.muli %c6_i32_325, %c8_i32_326 : i32
    %668 = tpu.assume_multiple %667, 8 : i32
    %669 = arith.index_cast %668 : i32 to index
    %c0_327 = arith.constant 0 : index
    %670 = vector.load %arg11[%669, %c0_327] : memref<64x128xf32, #tpu.memory_space<vmem>>, vector<8x128xf32>
    %671 = arith.index_cast %668 : i32 to index
    %c0_328 = arith.constant 0 : index
    %672 = vector.load %arg12[%671, %c0_328] : memref<64x128xf32, #tpu.memory_space<vmem>>, vector<8x128xf32>
    %673 = arith.index_cast %668 : i32 to index
    %c0_329 = arith.constant 0 : index
    %674 = vector.load %arg13[%673, %c0_329] : memref<64x128xf32, #tpu.memory_space<vmem>>, vector<8x128xf32>
    %675 = arith.truncf %664 : vector<8x128xf32> to vector<8x128xbf16>
    %cst_330 = arith.constant dense<0.000000e+00> : vector<8x128xf32>
    %676 = tpu.matmul %675, %446, %cst_330 {dimension_numbers = #tpu.dot_dimension_numbers<[1], [0], [0], [1], [0, 0, 1, 1], [], []>} : vector<8x128xbf16>, vector<128x128xbf16>, vector<8x128xf32> -> vector<8x128xf32>
    %cst_331 = arith.constant dense<0.000000e+00> : vector<8x128xf32>
    %677 = tpu.matmul %675, %448, %cst_331 {dimension_numbers = #tpu.dot_dimension_numbers<[1], [0], [0], [1], [0, 0, 1, 1], [], []>} : vector<8x128xbf16>, vector<128x128xbf16>, vector<8x128xf32> -> vector<8x128xf32>
    %cst_332 = arith.constant dense<0.000000e+00> : vector<8x128xf32>
    %678 = tpu.matmul %675, %450, %cst_332 {dimension_numbers = #tpu.dot_dimension_numbers<[1], [0], [0], [1], [0, 0, 1, 1], [], []>} : vector<8x128xbf16>, vector<128x128xbf16>, vector<8x128xf32> -> vector<8x128xf32>
    %679 = arith.addf %670, %676 : vector<8x128xf32>
    %680 = arith.negf %679 : vector<8x128xf32>
    %681 = math.exp %680 : vector<8x128xf32>
    %cst_333 = arith.constant 1.000000e+00 : f32
    %682 = vector.broadcast %cst_333 : f32 to vector<8x128xf32>
    %683 = arith.addf %682, %681 : vector<8x128xf32>
    %684 = arith.divf %682, %683 : vector<8x128xf32>
    %685 = arith.addf %672, %677 : vector<8x128xf32>
    %686 = arith.negf %685 : vector<8x128xf32>
    %687 = math.exp %686 : vector<8x128xf32>
    %cst_334 = arith.constant 1.000000e+00 : f32
    %688 = vector.broadcast %cst_334 : f32 to vector<8x128xf32>
    %689 = arith.addf %688, %687 : vector<8x128xf32>
    %690 = arith.divf %688, %689 : vector<8x128xf32>
    %691 = arith.addf %678, %454 : vector<8x128xf32>
    %692 = arith.mulf %684, %691 : vector<8x128xf32>
    %693 = arith.addf %674, %692 : vector<8x128xf32>
    %694 = math.tanh %693 : vector<8x128xf32>
    %cst_335 = arith.constant 1.000000e+00 : f32
    %695 = vector.broadcast %cst_335 : f32 to vector<8x128xf32>
    %696 = arith.subf %695, %690 : vector<8x128xf32>
    %697 = arith.mulf %696, %694 : vector<8x128xf32>
    %698 = arith.mulf %690, %664 : vector<8x128xf32>
    %699 = arith.addf %697, %698 : vector<8x128xf32>
    %700 = arith.index_cast %668 : i32 to index
    %c0_336 = arith.constant 0 : index
    %701 = vector.load %arg10[%700, %c0_336] : memref<64x128xf32, #tpu.memory_space<vmem>>, vector<8x128xf32>
    tpu.vector_store %arg10[%700, %c0_336], %699 {strides = array<i32>} : memref<64x128xf32, #tpu.memory_space<vmem>>, vector<8x128xf32>,
    %c7_i32_337 = arith.constant 7 : i32
    %c8_i32_338 = arith.constant 8 : i32
    %702 = arith.muli %c7_i32_337, %c8_i32_338 : i32
    %703 = tpu.assume_multiple %702, 8 : i32
    %704 = arith.index_cast %703 : i32 to index
    %c0_339 = arith.constant 0 : index
    %705 = vector.load %arg11[%704, %c0_339] : memref<64x128xf32, #tpu.memory_space<vmem>>, vector<8x128xf32>
    %706 = arith.index_cast %703 : i32 to index
    %c0_340 = arith.constant 0 : index
    %707 = vector.load %arg12[%706, %c0_340] : memref<64x128xf32, #tpu.memory_space<vmem>>, vector<8x128xf32>
    %708 = arith.index_cast %703 : i32 to index
    %c0_341 = arith.constant 0 : index
    %709 = vector.load %arg13[%708, %c0_341] : memref<64x128xf32, #tpu.memory_space<vmem>>, vector<8x128xf32>
    %710 = arith.truncf %699 : vector<8x128xf32> to vector<8x128xbf16>
    %cst_342 = arith.constant dense<0.000000e+00> : vector<8x128xf32>
    %711 = tpu.matmul %710, %446, %cst_342 {dimension_numbers = #tpu.dot_dimension_numbers<[1], [0], [0], [1], [0, 0, 1, 1], [], []>} : vector<8x128xbf16>, vector<128x128xbf16>, vector<8x128xf32> -> vector<8x128xf32>
    %cst_343 = arith.constant dense<0.000000e+00> : vector<8x128xf32>
    %712 = tpu.matmul %710, %448, %cst_343 {dimension_numbers = #tpu.dot_dimension_numbers<[1], [0], [0], [1], [0, 0, 1, 1], [], []>} : vector<8x128xbf16>, vector<128x128xbf16>, vector<8x128xf32> -> vector<8x128xf32>
    %cst_344 = arith.constant dense<0.000000e+00> : vector<8x128xf32>
    %713 = tpu.matmul %710, %450, %cst_344 {dimension_numbers = #tpu.dot_dimension_numbers<[1], [0], [0], [1], [0, 0, 1, 1], [], []>} : vector<8x128xbf16>, vector<128x128xbf16>, vector<8x128xf32> -> vector<8x128xf32>
    %714 = arith.addf %705, %711 : vector<8x128xf32>
    %715 = arith.negf %714 : vector<8x128xf32>
    %716 = math.exp %715 : vector<8x128xf32>
    %cst_345 = arith.constant 1.000000e+00 : f32
    %717 = vector.broadcast %cst_345 : f32 to vector<8x128xf32>
    %718 = arith.addf %717, %716 : vector<8x128xf32>
    %719 = arith.divf %717, %718 : vector<8x128xf32>
    %720 = arith.addf %707, %712 : vector<8x128xf32>
    %721 = arith.negf %720 : vector<8x128xf32>
    %722 = math.exp %721 : vector<8x128xf32>
    %cst_346 = arith.constant 1.000000e+00 : f32
    %723 = vector.broadcast %cst_346 : f32 to vector<8x128xf32>
    %724 = arith.addf %723, %722 : vector<8x128xf32>
    %725 = arith.divf %723, %724 : vector<8x128xf32>
    %726 = arith.addf %713, %454 : vector<8x128xf32>
    %727 = arith.mulf %719, %726 : vector<8x128xf32>
    %728 = arith.addf %709, %727 : vector<8x128xf32>
    %729 = math.tanh %728 : vector<8x128xf32>
    %cst_347 = arith.constant 1.000000e+00 : f32
    %730 = vector.broadcast %cst_347 : f32 to vector<8x128xf32>
    %731 = arith.subf %730, %725 : vector<8x128xf32>
    %732 = arith.mulf %731, %729 : vector<8x128xf32>
    %733 = arith.mulf %725, %699 : vector<8x128xf32>
    %734 = arith.addf %732, %733 : vector<8x128xf32>
    %735 = arith.index_cast %703 : i32 to index
    %c0_348 = arith.constant 0 : index
    %736 = vector.load %arg10[%735, %c0_348] : memref<64x128xf32, #tpu.memory_space<vmem>>, vector<8x128xf32>
    tpu.vector_store %arg10[%735, %c0_348], %734 {strides = array<i32>} : memref<64x128xf32, #tpu.memory_space<vmem>>, vector<8x128xf32>,
    %c8_i32_349 = arith.constant 8 : i32
    %c1_350 = arith.constant 1 : index
    %c0_351 = arith.constant 0 : index
    %c0_352 = arith.constant 0 : index
    %737 = vector.load %arg9[%c1_350, %c0_351, %c0_352] : memref<2x8x128xf32, #tpu.memory_space<vmem>>, vector<1x8x128xf32>
    %738 = vector.shape_cast %737 : vector<1x8x128xf32> to vector<8x128xf32>
    %739 = vector.shape_cast %734 : vector<8x128xf32> to vector<1x8x128xf32>
    tpu.vector_store %arg9[%c1_350, %c0_351, %c0_352], %739 {strides = array<i32>} : memref<2x8x128xf32, #tpu.memory_space<vmem>>, vector<1x8x128xf32>,
    %c0_353 = arith.constant 0 : index
    %c0_354 = arith.constant 0 : index
    %740 = vector.load %arg10[%c0_353, %c0_354] : memref<64x128xf32, #tpu.memory_space<vmem>>, vector<2x128xf32>
    %c0_355 = arith.constant 0 : index
    %c0_356 = arith.constant 0 : index
    %741 = vector.load %arg14[%c0_355, %c0_356] : memref<16x128xf32, #tpu.memory_space<vmem>>, vector<2x128xf32>
    tpu.vector_store %arg14[%c0_355, %c0_356], %740 {strides = array<i32>} : memref<16x128xf32, #tpu.memory_space<vmem>>, vector<2x128xf32>,
    %c8_357 = arith.constant 8 : index
    %c0_358 = arith.constant 0 : index
    %742 = vector.load %arg10[%c8_357, %c0_358] : memref<64x128xf32, #tpu.memory_space<vmem>>, vector<2x128xf32>
    %c2_359 = arith.constant 2 : index
    %c0_360 = arith.constant 0 : index
    %743 = vector.load %arg14[%c2_359, %c0_360] : memref<16x128xf32, #tpu.memory_space<vmem>>, vector<2x128xf32>
    tpu.vector_store %arg14[%c2_359, %c0_360], %742 {strides = array<i32>} : memref<16x128xf32, #tpu.memory_space<vmem>>, vector<2x128xf32>,
    %c16_361 = arith.constant 16 : index
    %c0_362 = arith.constant 0 : index
    %744 = vector.load %arg10[%c16_361, %c0_362] : memref<64x128xf32, #tpu.memory_space<vmem>>, vector<2x128xf32>
    %c4_363 = arith.constant 4 : index
    %c0_364 = arith.constant 0 : index
    %745 = vector.load %arg14[%c4_363, %c0_364] : memref<16x128xf32, #tpu.memory_space<vmem>>, vector<2x128xf32>
    tpu.vector_store %arg14[%c4_363, %c0_364], %744 {strides = array<i32>} : memref<16x128xf32, #tpu.memory_space<vmem>>, vector<2x128xf32>,
    %c24_365 = arith.constant 24 : index
    %c0_366 = arith.constant 0 : index
    %746 = vector.load %arg10[%c24_365, %c0_366] : memref<64x128xf32, #tpu.memory_space<vmem>>, vector<2x128xf32>
    %c6_367 = arith.constant 6 : index
    %c0_368 = arith.constant 0 : index
    %747 = vector.load %arg14[%c6_367, %c0_368] : memref<16x128xf32, #tpu.memory_space<vmem>>, vector<2x128xf32>
    tpu.vector_store %arg14[%c6_367, %c0_368], %746 {strides = array<i32>} : memref<16x128xf32, #tpu.memory_space<vmem>>, vector<2x128xf32>,
    %c32_369 = arith.constant 32 : index
    %c0_370 = arith.constant 0 : index
    %748 = vector.load %arg10[%c32_369, %c0_370] : memref<64x128xf32, #tpu.memory_space<vmem>>, vector<2x128xf32>
    %c8_371 = arith.constant 8 : index
    %c0_372 = arith.constant 0 : index
    %749 = vector.load %arg14[%c8_371, %c0_372] : memref<16x128xf32, #tpu.memory_space<vmem>>, vector<2x128xf32>
    tpu.vector_store %arg14[%c8_371, %c0_372], %748 {strides = array<i32>} : memref<16x128xf32, #tpu.memory_space<vmem>>, vector<2x128xf32>,
    %c40_373 = arith.constant 40 : index
    %c0_374 = arith.constant 0 : index
    %750 = vector.load %arg10[%c40_373, %c0_374] : memref<64x128xf32, #tpu.memory_space<vmem>>, vector<2x128xf32>
    %c10_375 = arith.constant 10 : index
    %c0_376 = arith.constant 0 : index
    %751 = vector.load %arg14[%c10_375, %c0_376] : memref<16x128xf32, #tpu.memory_space<vmem>>, vector<2x128xf32>
    tpu.vector_store %arg14[%c10_375, %c0_376], %750 {strides = array<i32>} : memref<16x128xf32, #tpu.memory_space<vmem>>, vector<2x128xf32>,
    %c48_377 = arith.constant 48 : index
    %c0_378 = arith.constant 0 : index
    %752 = vector.load %arg10[%c48_377, %c0_378] : memref<64x128xf32, #tpu.memory_space<vmem>>, vector<2x128xf32>
    %c12_379 = arith.constant 12 : index
    %c0_380 = arith.constant 0 : index
    %753 = vector.load %arg14[%c12_379, %c0_380] : memref<16x128xf32, #tpu.memory_space<vmem>>, vector<2x128xf32>
    tpu.vector_store %arg14[%c12_379, %c0_380], %752 {strides = array<i32>} : memref<16x128xf32, #tpu.memory_space<vmem>>, vector<2x128xf32>,
    %c56_381 = arith.constant 56 : index
    %c0_382 = arith.constant 0 : index
    %754 = vector.load %arg10[%c56_381, %c0_382] : memref<64x128xf32, #tpu.memory_space<vmem>>, vector<2x128xf32>
    %c14_383 = arith.constant 14 : index
    %c0_384 = arith.constant 0 : index
    %755 = vector.load %arg14[%c14_383, %c0_384] : memref<16x128xf32, #tpu.memory_space<vmem>>, vector<2x128xf32>
    tpu.vector_store %arg14[%c14_383, %c0_384], %754 {strides = array<i32>} : memref<16x128xf32, #tpu.memory_space<vmem>>, vector<2x128xf32>,
    %c0_385 = arith.constant 0 : index
    %c0_386 = arith.constant 0 : index
    %756 = vector.load %arg14[%c0_385, %c0_386] : memref<16x128xf32, #tpu.memory_space<vmem>>, vector<16x128xf32>
    %757 = arith.truncf %756 : vector<16x128xf32> to vector<16x128xbf16>
    %c0_387 = arith.constant 0 : index
    %c0_388 = arith.constant 0 : index
    %758 = vector.load %arg6[%c0_387, %c0_388] : memref<128x128xbf16, #tpu.memory_space<vmem>>, vector<128x128xbf16>
    %cst_389 = arith.constant dense<0.000000e+00> : vector<16x128xf32>
    %759 = tpu.matmul %757, %758, %cst_389 {dimension_numbers = #tpu.dot_dimension_numbers<[1], [0], [0], [1], [0, 0, 1, 1], [], []>} : vector<16x128xbf16>, vector<128x128xbf16>, vector<16x128xf32> -> vector<16x128xf32>
    %c0_390 = arith.constant 0 : index
    %c0_391 = arith.constant 0 : index
    %760 = vector.load %arg7[%c0_390, %c0_391] : memref<1x128xf32, #tpu.memory_space<vmem>>, vector<1x128xf32>
    %761 = vector.broadcast %760 : vector<1x128xf32> to vector<16x128xf32>
    %762 = arith.addf %759, %761 : vector<16x128xf32>
    %763 = vector.shape_cast %762 : vector<16x128xf32> to vector<2x8x128xf32>
    %cst_392 = arith.constant dense<0xFF800000> : vector<8x128xf32>
    %764 = vector.multi_reduction <maximumf>, %763, %cst_392 [0] : vector<2x8x128xf32> to vector<8x128xf32>
    %765 = vector.shape_cast %764 : vector<8x128xf32> to vector<1x8x128xf32>
    %766 = vector.broadcast %765 : vector<1x8x128xf32> to vector<2x8x128xf32>
    %767 = arith.subf %763, %766 : vector<2x8x128xf32>
    %768 = math.exp %767 : vector<2x8x128xf32>
    %cst_393 = arith.constant dense<0.000000e+00> : vector<8x128xf32>
    %769 = vector.multi_reduction <add>, %768, %cst_393 [0] : vector<2x8x128xf32> to vector<8x128xf32>
    %770 = vector.shape_cast %769 : vector<8x128xf32> to vector<1x8x128xf32>
    %771 = tpu.reciprocal %770 {approx = true} : vector<1x8x128xf32> -> vector<1x8x128xf32>
    %772 = vector.broadcast %771 : vector<1x8x128xf32> to vector<2x8x128xf32>
    %773 = arith.mulf %768, %772 : vector<2x8x128xf32>
    %c0_394 = arith.constant 0 : index
    %c0_395 = arith.constant 0 : index
    %c0_396 = arith.constant 0 : index
    %774 = vector.load %arg8[%c0_394, %c0_395, %c0_396] : memref<2x8x128xf32, #tpu.memory_space<vmem>>, vector<2x8x128xf32>
    tpu.vector_store %arg8[%c0_394, %c0_395, %c0_396], %773 {strides = array<i32>} : memref<2x8x128xf32, #tpu.memory_space<vmem>>, vector<2x8x128xf32>,
    return
  }
}

</mosaic_0001>

<llo_original>
// kernel: tpu_custom_call.1
$region0: #{tpu_custom_call.1}
  #allocation0 [shape = 'u32[]', space=smem, size = 0x4, offset = 0x4, fixed_abs, tag = 'smem constant byte address 0x4 - core index']
  #allocation1 [shape = 'u32[72,128]{1,0:T(1,128)}', space=vmem, size = 0x9000, scoped, tag = 'internal scratch']
  #allocation2 [shape = 'f32[64,128]{1,0:T(8,128)}', space=vmem, size = 0x8000, scoped, tag = 'scratch operand']
  #allocation3 [shape = 'f32[64,128]{1,0:T(8,128)}', space=vmem, size = 0x8000, scoped, tag = 'scratch operand']
  #allocation4 [shape = 'f32[64,128]{1,0:T(8,128)}', space=vmem, size = 0x8000, scoped, tag = 'scratch operand']
  #allocation5 [shape = 'f32[64,128]{1,0:T(8,128)}', space=vmem, size = 0x8000, scoped, tag = 'scratch operand']
  #allocation6 [shape = 'f32[16,128]{1,0:T(8,128)}', space=vmem, size = 0x2000, scoped, tag = 'scratch operand']
  %s0 = inlined_call_operand.hbm [shape: s32[16], index: 0, kind: input, shape index: {}]
  %s1 = inlined_call_operand.hbm [shape: f32[2,8,128], index: 1, kind: input, shape index: {}]
  %s2 = inlined_call_operand.hbm [shape: f32[64,128], index: 2, kind: input, shape index: {}]
  %s3 = inlined_call_operand.hbm [shape: bf16[2,3,128,128], index: 3, kind: input, shape index: {}]
  %s4 = inlined_call_operand.hbm [shape: bf16[2,3,128,128], index: 4, kind: input, shape index: {}]
  %s5 = inlined_call_operand.hbm [shape: f32[2,4,1,128], index: 5, kind: input, shape index: {}]
  %s6 = inlined_call_operand.hbm [shape: bf16[128,128], index: 6, kind: input, shape index: {}]
  %s7 = inlined_call_operand.vmem [shape: f32[1,128], index: 7, kind: input, shape index: {}]
  %s8 = inlined_call_operand.hbm [shape: f32[2,8,128], index: 8, kind: output, shape index: {0}]
  %s9 = inlined_call_operand.hbm [shape: f32[2,8,128], index: 9, kind: output, shape index: {1}]
  %10 = xla_tuple %s8, %s9
  %s11 = sld [smem:[#allocation0]]
  $region78: #{tpu_custom_call.1} parent=0
    _
  %s13 = ssub.s32 1, %s11
  %s14 = scalar_select 0, %s13, %s11
  $region1: #{tpu_custom_call.1} parent=0
    #allocation7 [shape = 'u8[512]{0}', space=smem, size = 0x200, scoped, tag = 'input window, operand 0, single buffered']
    #allocation8 [shape = 's32[1]{0}', space=sflag, size = 0x4, scoped, tag = 'scoped memory for tpu_custom_call.1']
    #allocation9 [shape = 's32[1]{0}', space=sflag, size = 0x4, scoped, tag = 'scoped memory for tpu_custom_call.1']
    #allocation10 [shape = 's32[1]{0}', space=sflag, size = 0x4, scoped, tag = 'scoped memory for tpu_custom_call.1']
    #allocation11 [shape = 'u8[8192]{0}', space=vmem, size = 0x2000, scoped, tag = 'input window, operand 1, single buffered']
    #allocation12 [shape = 'u8[32768]{0}', space=vmem, size = 0x8000, scoped, tag = 'input window, operand 2, single buffered']
    #allocation13 [shape = 's32[1]{0}', space=sflag, size = 0x4, scoped, tag = 'scoped memory for tpu_custom_call.1']
    #allocation14 [shape = 'u8[196608]{0}', space=vmem, size = 0x30000, scoped, tag = 'input window, operand 3, single buffered']
    #allocation15 [shape = 'u8[196608]{0}', space=vmem, size = 0x30000, scoped, tag = 'input window, operand 4, single buffered']
    #allocation16 [shape = 's32[1]{0}', space=sflag, size = 0x4, scoped, tag = 'scoped memory for tpu_custom_call.1']
    #allocation17 [shape = 'u8[4096]{0}', space=vmem, size = 0x1000, scoped, tag = 'input window, operand 5, single buffered']
    #allocation18 [shape = 'u8[32768]{0}', space=vmem, size = 0x8000, scoped, tag = 'input window, operand 6, single buffered']
    #allocation19 [shape = 's32[1]{0}', space=sflag, size = 0x4, scoped, tag = 'scoped memory for tpu_custom_call.1']
    #allocation20 [shape = 'u8[8192]{0}', space=vmem, size = 0x2000, scoped, tag = 'output window, operand 0, single buffered']
    #allocation21 [shape = 'u8[8192]{0}', space=vmem, size = 0x2000, scoped, tag = 'output window, operand 1, single buffered']
    #allocation22 [shape = 's32[1]{0}', space=sflag, size = 0x4, scoped, tag = 'scoped memory for tpu_custom_call.1']
    %15 = vsyncpa [#allocation10], 0
    %16 = vsyncpa [#allocation8], 0
    %17 = vsyncpa [#allocation13], 0
    %18 = vsyncpa [#allocation16], 0
    %19 = vsyncpa [#allocation19], 0
    %20 = vsyncpa [#allocation9], 0
    %21 = vsyncpa [#allocation22], 0
    // Predicated region
    $region2: #{tpu_custom_call.1} parent=1 // pred_check
      _
    $region3: #{tpu_custom_call.1} parent=1 // pred_check_branch
      %23 = sbr.rel (0) target = $region5
    $region4: #{tpu_custom_call.1} parent=1 // pred_region
      %25 = vsyncadd [#allocation10], 0
      %s27 = sshll.u32 %s0, 4
      %s28 = int_to_ptr.hbm [resolvable:$true] %s27
      %30 = dma.hbm_to_smem %s28, 16, [#allocation7], [#allocation10]
    $region5: #{tpu_custom_call.1} parent=1 // pred_fallthru
      _
    // Predicated region
    $region6: #{tpu_custom_call.1} parent=1 // pred_check
      _
    $region7: #{tpu_custom_call.1} parent=1 // pred_check_branch
      %32 = sbr.rel (0) target = $region9
    $region8: #{tpu_custom_call.1} parent=1 // pred_region
      %34 = vsyncadd [#allocation8], 0
      %s35 = sshll.u32 %s1, 4
      %s36 = int_to_ptr.hbm [resolvable:$true] %s35
      %s37 = sshll.u32 [#allocation11], 4
      %s38 = int_to_ptr.vmem [resolvable:$true] %s37
      %43 = dma.hbm_to_vmem [thread:$0]  %s36, 256, %s38, [#allocation8], 128, 128, 8
    $region9: #{tpu_custom_call.1} parent=1 // pred_fallthru
      _
    // Predicated region
    $region10: #{tpu_custom_call.1} parent=1 // pred_check
      _
    $region11: #{tpu_custom_call.1} parent=1 // pred_check_branch
      %45 = sbr.rel (0) target = $region13
    $region12: #{tpu_custom_call.1} parent=1 // pred_region
      %47 = vsyncadd [#allocation13], 0
      %s48 = sshll.u32 %s2, 4
      %s49 = int_to_ptr.hbm [resolvable:$true] %s48
      %s50 = sshll.u32 [#allocation12], 4
      %s51 = int_to_ptr.vmem [resolvable:$true] %s50
      %56 = dma.hbm_to_vmem [thread:$0]  %s49, 1024, %s51, [#allocation13], 128, 128, 8
    $region13: #{tpu_custom_call.1} parent=1 // pred_fallthru
      _
    // Predicated region
    $region14: #{tpu_custom_call.1} parent=1 // pred_check
      _
    $region15: #{tpu_custom_call.1} parent=1 // pred_check_branch
      %58 = sbr.rel (0) target = $region17
    $region16: #{tpu_custom_call.1} parent=1 // pred_region
      %60 = vsyncadd [#allocation13], 0
      %s61 = sshll.u32 %s3, 4
      %s62 = int_to_ptr.hbm [resolvable:$true] %s61
      %s63 = sshll.u32 [#allocation14], 4
      %s64 = int_to_ptr.vmem [resolvable:$true] %s63
      %69 = dma.hbm_to_vmem [thread:$0]  %s62, 6144, %s64, [#allocation13], 64, 64, 4
    $region17: #{tpu_custom_call.1} parent=1 // pred_fallthru
      _
    // Predicated region
    $region18: #{tpu_custom_call.1} parent=1 // pred_check
      _
    $region19: #{tpu_custom_call.1} parent=1 // pred_check_branch
      %71 = sbr.rel (0) target = $region21
    $region20: #{tpu_custom_call.1} parent=1 // pred_region
      %73 = vsyncadd [#allocation16], 0
      %s74 = sshll.u32 %s4, 4
      %s75 = int_to_ptr.hbm [resolvable:$true] %s74
      %s76 = sshll.u32 [#allocation15], 4
      %s77 = int_to_ptr.vmem [resolvable:$true] %s76
      %82 = dma.hbm_to_vmem [thread:$0]  %s75, 6144, %s77, [#allocation16], 64, 64, 4
    $region21: #{tpu_custom_call.1} parent=1 // pred_fallthru
      _
    // Predicated region
    $region22: #{tpu_custom_call.1} parent=1 // pred_check
      _
    $region23: #{tpu_custom_call.1} parent=1 // pred_check_branch
      %84 = sbr.rel (0) target = $region25
    $region24: #{tpu_custom_call.1} parent=1 // pred_region
      %86 = vsyncadd [#allocation16], 0
      %s87 = sshll.u32 %s5, 4
      %s88 = int_to_ptr.hbm [resolvable:$true] %s87
      %s89 = sshll.u32 [#allocation17], 4
      %s90 = int_to_ptr.vmem [resolvable:$true] %s89
      %95 = dma.hbm_to_vmem [thread:$0]  %s88, 128, %s90, [#allocation16], 16, 16, 1
    $region25: #{tpu_custom_call.1} parent=1 // pred_fallthru
      _
    // Predicated region
    $region26: #{tpu_custom_call.1} parent=1 // pred_check
      _
    $region27: #{tpu_custom_call.1} parent=1 // pred_check_branch
      %97 = sbr.rel (0) target = $region29
    $region28: #{tpu_custom_call.1} parent=1 // pred_region
      %99 = vsyncadd [#allocation19], 0
      %s100 = sshll.u32 %s6, 4
      %s101 = int_to_ptr.hbm [resolvable:$true] %s100
      %s102 = sshll.u32 [#allocation18], 4
      %s103 = int_to_ptr.vmem [resolvable:$true] %s102
      %108 = dma.hbm_to_vmem [thread:$0]  %s101, 1024, %s103, [#allocation19], 64, 64, 4
    $region29: #{tpu_custom_call.1} parent=1 // pred_fallthru
      _
    // Predicated region
    $region30: #{tpu_custom_call.1} parent=1 // pred_check
      _
    $region31: #{tpu_custom_call.1} parent=1 // pred_check_branch
      %110 = sbr.rel (0) target = $region33
    $region32: #{tpu_custom_call.1} parent=1 // pred_region
      _
    $region33: #{tpu_custom_call.1} parent=1 // pred_fallthru
      _
    // Predicated region
    $region34: #{tpu_custom_call.1} parent=1 // pred_check
      _
    $region35: #{tpu_custom_call.1} parent=1 // pred_check_branch
      %112 = sbr.rel (0) target = $region37
    $region36: #{tpu_custom_call.1} parent=1 // pred_region
      %114 = dma.done [#allocation10], 16
    $region37: #{tpu_custom_call.1} parent=1 // pred_fallthru
      _
    // Predicated region
    $region38: #{tpu_custom_call.1} parent=1 // pred_check
      _
    $region39: #{tpu_custom_call.1} parent=1 // pred_check_branch
      %116 = sbr.rel (0) target = $region41
    $region40: #{tpu_custom_call.1} parent=1 // pred_region
      %118 = dma.done [#allocation8], 256
    $region41: #{tpu_custom_call.1} parent=1 // pred_fallthru
      _
    // Predicated region
    $region42: #{tpu_custom_call.1} parent=1 // pred_check
      _
    $region43: #{tpu_custom_call.1} parent=1 // pred_check_branch
      %120 = sbr.rel (0) target = $region45
    $region44: #{tpu_custom_call.1} parent=1 // pred_region
      %122 = dma.done [#allocation13], 1024
    $region45: #{tpu_custom_call.1} parent=1 // pred_fallthru
      _
    // Predicated region
    $region46: #{tpu_custom_call.1} parent=1 // pred_check
      _
    $region47: #{tpu_custom_call.1} parent=1 // pred_check_branch
      %124 = sbr.rel (0) target = $region49
    $region48: #{tpu_custom_call.1} parent=1 // pred_region
      %126 = dma.done [#allocation13], 6144
    $region49: #{tpu_custom_call.1} parent=1 // pred_fallthru
      _
    // Predicated region
    $region50: #{tpu_custom_call.1} parent=1 // pred_check
      _
    $region51: #{tpu_custom_call.1} parent=1 // pred_check_branch
      %128 = sbr.rel (0) target = $region53
    $region52: #{tpu_custom_call.1} parent=1 // pred_region
      %130 = dma.done [#allocation16], 6144
    $region53: #{tpu_custom_call.1} parent=1 // pred_fallthru
      _
    // Predicated region
    $region54: #{tpu_custom_call.1} parent=1 // pred_check
      _
    $region55: #{tpu_custom_call.1} parent=1 // pred_check_branch
      %132 = sbr.rel (0) target = $region57
    $region56: #{tpu_custom_call.1} parent=1 // pred_region
      %134 = dma.done [#allocation16], 128
    $region57: #{tpu_custom_call.1} parent=1 // pred_fallthru
      _
    // Predicated region
    $region58: #{tpu_custom_call.1} parent=1 // pred_check
      _
    $region59: #{tpu_custom_call.1} parent=1 // pred_check_branch
      %136 = sbr.rel (0) target = $region61
    $region60: #{tpu_custom_call.1} parent=1 // pred_region
      %138 = dma.done [#allocation19], 1024
    $region61: #{tpu_custom_call.1} parent=1 // pred_fallthru
      _
    %139 = sfence
    %140 = vst [vmem:[#allocation2] sm:$0xff] 0.0
    %141 = vst [vmem:[#allocation2 + $0x8] sm:$0xff] 0.0
    %142 = vst [vmem:[#allocation2 + $0x10] sm:$0xff] 0.0
    %143 = vst [vmem:[#allocation2 + $0x18] sm:$0xff] 0.0
    %144 = vst [vmem:[#allocation2 + $0x20] sm:$0xff] 0.0
    %145 = vst [vmem:[#allocation2 + $0x28] sm:$0xff] 0.0
    %146 = vst [vmem:[#allocation2 + $0x30] sm:$0xff] 0.0
    %147 = vst [vmem:[#allocation2 + $0x38] sm:$0xff] 0.0
    %s148 = sld [smem:[#allocation7]]
    %s149 = scalar_lea.vmem [#allocation12], %s148
    %v150 = vld [vmem:[%s149] sm:$0x1]
    %v151 = vmax.f32 %v150, 0.0
    %152 = vst [vmem:[#allocation2] sm:$0x1] %v151
    %s153 = sld [smem:[#allocation7 + $0x1]]
    %s154 = scalar_lea.vmem [#allocation12], %s153
    %v155 = vld [vmem:[%s154] sm:$0x1]
    %v156 = vmax.f32 %v155, 0.0
    %157 = vst [vmem:[#allocation2 + $0x1] sm:$0x1] %v156
    %s158 = sld [smem:[#allocation7 + $0x2]]
    %s159 = scalar_lea.vmem [#allocation12], %s158
    %v160 = vld [vmem:[%s159] sm:$0x1]
    %v161 = vmax.f32 %v160, 0.0
    %162 = vst [vmem:[#allocation2 + $0x8] sm:$0x1] %v161
    %s163 = sld [smem:[#allocation7 + $0x3]]
    %s164 = scalar_lea.vmem [#allocation12], %s163
    %v165 = vld [vmem:[%s164] sm:$0x1]
    %v166 = vmax.f32 %v165, 0.0
    %167 = vst [vmem:[#allocation2 + $0x9] sm:$0x1] %v166
    %s168 = sld [smem:[#allocation7 + $0x4]]
    %s169 = scalar_lea.vmem [#allocation12], %s168
    %v170 = vld [vmem:[%s169] sm:$0x1]
    %v171 = vmax.f32 %v170, 0.0
    %172 = vst [vmem:[#allocation2 + $0x10] sm:$0x1] %v171
    %s173 = sld [smem:[#allocation7 + $0x5]]
    %s174 = scalar_lea.vmem [#allocation12], %s173
    %v175 = vld [vmem:[%s174] sm:$0x1]
    %v176 = vmax.f32 %v175, 0.0
    %177 = vst [vmem:[#allocation2 + $0x11] sm:$0x1] %v176
    %s178 = sld [smem:[#allocation7 + $0x6]]
    %s179 = scalar_lea.vmem [#allocation12], %s178
    %v180 = vld [vmem:[%s179] sm:$0x1]
    %v181 = vmax.f32 %v180, 0.0
    %182 = vst [vmem:[#allocation2 + $0x18] sm:$0x1] %v181
    %s183 = sld [smem:[#allocation7 + $0x7]]
    %s184 = scalar_lea.vmem [#allocation12], %s183
    %v185 = vld [vmem:[%s184] sm:$0x1]
    %v186 = vmax.f32 %v185, 0.0
    %187 = vst [vmem:[#allocation2 + $0x19] sm:$0x1] %v186
    %s188 = sld [smem:[#allocation7 + $0x8]]
    %s189 = scalar_lea.vmem [#allocation12], %s188
    %v190 = vld [vmem:[%s189] sm:$0x1]
    %v191 = vmax.f32 %v190, 0.0
    %192 = vst [vmem:[#allocation2 + $0x20] sm:$0x1] %v191
    %s193 = sld [smem:[#allocation7 + $0x9]]
    %s194 = scalar_lea.vmem [#allocation12], %s193
    %v195 = vld [vmem:[%s194] sm:$0x1]
    %v196 = vmax.f32 %v195, 0.0
    %197 = vst [vmem:[#allocation2 + $0x21] sm:$0x1] %v196
    %s198 = sld [smem:[#allocation7 + $0xa]]
    %s199 = scalar_lea.vmem [#allocation12], %s198
    %v200 = vld [vmem:[%s199] sm:$0x1]
    %v201 = vmax.f32 %v200, 0.0
    %202 = vst [vmem:[#allocation2 + $0x28] sm:$0x1] %v201
    %s203 = sld [smem:[#allocation7 + $0xb]]
    %s204 = scalar_lea.vmem [#allocation12], %s203
    %v205 = vld [vmem:[%s204] sm:$0x1]
    %v206 = vmax.f32 %v205, 0.0
    %207 = vst [vmem:[#allocation2 + $0x29] sm:$0x1] %v206
    %s208 = sld [smem:[#allocation7 + $0xc]]
    %s209 = scalar_lea.vmem [#allocation12], %s208
    %v210 = vld [vmem:[%s209] sm:$0x1]
    %v211 = vmax.f32 %v210, 0.0
    %212 = vst [vmem:[#allocation2 + $0x30] sm:$0x1] %v211
    %s213 = sld [smem:[#allocation7 + $0xd]]
    %s214 = scalar_lea.vmem [#allocation12], %s213
    %v215 = vld [vmem:[%s214] sm:$0x1]
    %v216 = vmax.f32 %v215, 0.0
    %217 = vst [vmem:[#allocation2 + $0x31] sm:$0x1] %v216
    %s218 = sld [smem:[#allocation7 + $0xe]]
    %s219 = scalar_lea.vmem [#allocation12], %s218
    %v220 = vld [vmem:[%s219] sm:$0x1]
    %v221 = vmax.f32 %v220, 0.0
    %222 = vst [vmem:[#allocation2 + $0x38] sm:$0x1] %v221
    %s223 = sld [smem:[#allocation7 + $0xf]]
    %s224 = scalar_lea.vmem [#allocation12], %s223
    %v225 = vld [vmem:[%s224] sm:$0x1]
    %v226 = vmax.f32 %v225, 0.0
    %227 = vst [vmem:[#allocation2 + $0x39] sm:$0x1] %v226
    %v228 = vld [vmem:[#allocation2] sm:$0xff]
    %v229 = vld [vmem:[#allocation2 + $0x8] sm:$0xff]
    %v230 = vld [vmem:[#allocation2 + $0x10] sm:$0xff]
    %v231 = vld [vmem:[#allocation2 + $0x18] sm:$0xff]
    %v232 = vld [vmem:[#allocation2 + $0x20] sm:$0xff]
    %v233 = vld [vmem:[#allocation2 + $0x28] sm:$0xff]
    %v234 = vld [vmem:[#allocation2 + $0x30] sm:$0xff]
    %v235 = vld [vmem:[#allocation2 + $0x38] sm:$0xff]
    %v236 = vpack.c.bf16 %v229, %v228
    %v237 = vpack.c.bf16 %v231, %v230
    %v238 = vpack.c.bf16 %v233, %v232
    %v239 = vpack.c.bf16 %v235, %v234
    %v240 = vld [vmem:[#allocation14] sm:$0xf]
    %v241 = vld [vmem:[#allocation14 + $0x4] sm:$0xf]
    %v242 = vld [vmem:[#allocation14 + $0x8] sm:$0xf]
    %v243 = vld [vmem:[#allocation14 + $0xc] sm:$0xf]
    %v244 = vld [vmem:[#allocation14 + $0x10] sm:$0xf]
    %v245 = vld [vmem:[#allocation14 + $0x14] sm:$0xf]
    %v246 = vld [vmem:[#allocation14 + $0x18] sm:$0xf]
    %v247 = vld [vmem:[#allocation14 + $0x1c] sm:$0xf]
    %v248 = vld [vmem:[#allocation14 + $0x20] sm:$0xf]
    %v249 = vld [vmem:[#allocation14 + $0x24] sm:$0xf]
    %v250 = vld [vmem:[#allocation14 + $0x28] sm:$0xf]
    %v251 = vld [vmem:[#allocation14 + $0x2c] sm:$0xf]
    %v252 = vld [vmem:[#allocation14 + $0x30] sm:$0xf]
    %v253 = vld [vmem:[#allocation14 + $0x34] sm:$0xf]
    %v254 = vld [vmem:[#allocation14 + $0x38] sm:$0xf]
    %v255 = vld [vmem:[#allocation14 + $0x3c] sm:$0xf]
    %v256 = vld [vmem:[#allocation17] sm:$0x1]
    %v258 = vperm.slane %v256, 0
    %v276 = vunpack.c.l.b16 %v240
    %v277 = vunpack.c.l.b16 %v241
    %v278 = vunpack.c.l.b16 %v242
    %v279 = vunpack.c.l.b16 %v243
    %v280 = vunpack.c.l.b16 %v244
    %v281 = vunpack.c.l.b16 %v245
    %v282 = vunpack.c.l.b16 %v246
    %v283 = vunpack.c.l.b16 %v247
    %v284 = vunpack.c.l.b16 %v248
    %v285 = vunpack.c.l.b16 %v249
    %v286 = vunpack.c.l.b16 %v250
    %v287 = vunpack.c.l.b16 %v251
    %v288 = vunpack.c.l.b16 %v252
    %v289 = vunpack.c.l.b16 %v253
    %v290 = vunpack.c.l.b16 %v254
    %v291 = vunpack.c.l.b16 %v255
    %v292 = vpack.c.b16 %v277, %v276
    %v293 = vpack.c.b16 %v279, %v278
    %v294 = vpack.c.b16 %v281, %v280
    %v295 = vpack.c.b16 %v283, %v282
    %v296 = vpack.c.b16 %v285, %v284
    %v297 = vpack.c.b16 %v287, %v286
    %v298 = vpack.c.b16 %v289, %v288
    %v299 = vpack.c.b16 %v291, %v290
    %308 = vmatpush.bf16.msra.mxu0 %v299
    %309 = vmatpush.bf16.msra.mxu0 %v298
    %310 = vmatpush.bf16.msra.mxu0 %v297
    %311 = vmatpush.bf16.msra.mxu0 %v296
    %312 = vmatpush.bf16.msra.mxu0 %v295
    %313 = vmatpush.bf16.msra.mxu0 %v294
    %314 = vmatpush.bf16.msra.mxu0 %v293
    %315 = vmatpush.bf16.msra.mxu0 %v292
    %316 = vmatmul.bf16.gmra.mxu0 %v236
    %v317 = vpop.f32.mrf.mxu0
    %v318 = vadd.f32 %v258, %v317
    %v319 = vpop.f32.mrf.mxu0
    %v320 = vadd.f32 %v258, %v319
    %321 = vmatmul.bf16.gmra.mxu0 %v237
    %v322 = vpop.f32.mrf.mxu0
    %v323 = vadd.f32 %v258, %v322
    %v324 = vpop.f32.mrf.mxu0
    %v325 = vadd.f32 %v258, %v324
    %326 = vmatmul.bf16.gmra.mxu0 %v238
    %v327 = vpop.f32.mrf.mxu0
    %v328 = vadd.f32 %v258, %v327
    %v329 = vpop.f32.mrf.mxu0
    %v330 = vadd.f32 %v258, %v329
    %331 = vmatmul.bf16.gmra.mxu0 %v239
    %v332 = vpop.f32.mrf.mxu0
    %v333 = vadd.f32 %v258, %v332
    %v334 = vpop.f32.mrf.mxu0
    %v335 = vadd.f32 %v258, %v334
    %336 = vdwg.mxu0
    %337 = vst [vmem:[#allocation3] sm:$0xff] %v318
    %338 = vst [vmem:[#allocation3 + $0x8] sm:$0xff] %v320
    %339 = vst [vmem:[#allocation3 + $0x10] sm:$0xff] %v323
    %340 = vst [vmem:[#allocation3 + $0x18] sm:$0xff] %v325
    %341 = vst [vmem:[#allocation3 + $0x20] sm:$0xff] %v328
    %342 = vst [vmem:[#allocation3 + $0x28] sm:$0xff] %v330
    %343 = vst [vmem:[#allocation3 + $0x30] sm:$0xff] %v333
    %344 = vst [vmem:[#allocation3 + $0x38] sm:$0xff] %v335
    %s345 = scalar_lea.vmem [#allocation14], 64
    %v346 = vld [vmem:[%s345] sm:$0xf]
    %v347 = vld [vmem:[%s345 + $0x4] sm:$0xf]
    %v348 = vld [vmem:[%s345 + $0x8] sm:$0xf]
    %v349 = vld [vmem:[%s345 + $0xc] sm:$0xf]
    %v350 = vld [vmem:[%s345 + $0x10] sm:$0xf]
    %v351 = vld [vmem:[%s345 + $0x14] sm:$0xf]
    %v352 = vld [vmem:[%s345 + $0x18] sm:$0xf]
    %v353 = vld [vmem:[%s345 + $0x1c] sm:$0xf]
    %v354 = vld [vmem:[%s345 + $0x20] sm:$0xf]
    %v355 = vld [vmem:[%s345 + $0x24] sm:$0xf]
    %v356 = vld [vmem:[%s345 + $0x28] sm:$0xf]
    %v357 = vld [vmem:[%s345 + $0x2c] sm:$0xf]
    %v358 = vld [vmem:[%s345 + $0x30] sm:$0xf]
    %v359 = vld [vmem:[%s345 + $0x34] sm:$0xf]
    %v360 = vld [vmem:[%s345 + $0x38] sm:$0xf]
    %v361 = vld [vmem:[%s345 + $0x3c] sm:$0xf]
    %s362 = scalar_lea.vmem [#allocation17], 1
    %v363 = vld [vmem:[%s362] sm:$0x1]
    %v365 = vperm.slane %v363, 0
    %v383 = vunpack.c.l.b16 %v346
    %v384 = vunpack.c.l.b16 %v347
    %v385 = vunpack.c.l.b16 %v348
    %v386 = vunpack.c.l.b16 %v349
    %v387 = vunpack.c.l.b16 %v350
    %v388 = vunpack.c.l.b16 %v351
    %v389 = vunpack.c.l.b16 %v352
    %v390 = vunpack.c.l.b16 %v353
    %v391 = vunpack.c.l.b16 %v354
    %v392 = vunpack.c.l.b16 %v355
    %v393 = vunpack.c.l.b16 %v356
    %v394 = vunpack.c.l.b16 %v357
    %v395 = vunpack.c.l.b16 %v358
    %v396 = vunpack.c.l.b16 %v359
    %v397 = vunpack.c.l.b16 %v360
    %v398 = vunpack.c.l.b16 %v361
    %v399 = vpack.c.b16 %v384, %v383
    %v400 = vpack.c.b16 %v386, %v385
    %v401 = vpack.c.b16 %v388, %v387
    %v402 = vpack.c.b16 %v390, %v389
    %v403 = vpack.c.b16 %v392, %v391
    %v404 = vpack.c.b16 %v394, %v393
    %v405 = vpack.c.b16 %v396, %v395
    %v406 = vpack.c.b16 %v398, %v397
    %415 = vmatpush.bf16.msra.mxu0 %v406
    %416 = vmatpush.bf16.msra.mxu0 %v405
    %417 = vmatpush.bf16.msra.mxu0 %v404
    %418 = vmatpush.bf16.msra.mxu0 %v403
    %419 = vmatpush.bf16.msra.mxu0 %v402
    %420 = vmatpush.bf16.msra.mxu0 %v401
    %421 = vmatpush.bf16.msra.mxu0 %v400
    %422 = vmatpush.bf16.msra.mxu0 %v399
    %423 = vmatmul.bf16.gmra.mxu0 %v236
    %v424 = vpop.f32.mrf.mxu0
    %v425 = vadd.f32 %v365, %v424
    %v426 = vpop.f32.mrf.mxu0
    %v427 = vadd.f32 %v365, %v426
    %428 = vmatmul.bf16.gmra.mxu0 %v237
    %v429 = vpop.f32.mrf.mxu0
    %v430 = vadd.f32 %v365, %v429
    %v431 = vpop.f32.mrf.mxu0
    %v432 = vadd.f32 %v365, %v431
    %433 = vmatmul.bf16.gmra.mxu0 %v238
    %v434 = vpop.f32.mrf.mxu0
    %v435 = vadd.f32 %v365, %v434
    %v436 = vpop.f32.mrf.mxu0
    %v437 = vadd.f32 %v365, %v436
    %438 = vmatmul.bf16.gmra.mxu0 %v239
    %v439 = vpop.f32.mrf.mxu0
    %v440 = vadd.f32 %v365, %v439
    %v441 = vpop.f32.mrf.mxu0
    %v442 = vadd.f32 %v365, %v441
    %443 = vdwg.mxu0
    %444 = vst [vmem:[#allocation4] sm:$0xff] %v425
    %445 = vst [vmem:[#allocation4 + $0x8] sm:$0xff] %v427
    %446 = vst [vmem:[#allocation4 + $0x10] sm:$0xff] %v430
    %447 = vst [vmem:[#allocation4 + $0x18] sm:$0xff] %v432
    %448 = vst [vmem:[#allocation4 + $0x20] sm:$0xff] %v435
    %449 = vst [vmem:[#allocation4 + $0x28] sm:$0xff] %v437
    %450 = vst [vmem:[#allocation4 + $0x30] sm:$0xff] %v440
    %451 = vst [vmem:[#allocation4 + $0x38] sm:$0xff] %v442
    %s452 = scalar_lea.vmem [#allocation14], 128
    %v453 = vld [vmem:[%s452] sm:$0xf]
    %v454 = vld [vmem:[%s452 + $0x4] sm:$0xf]
    %v455 = vld [vmem:[%s452 + $0x8] sm:$0xf]
    %v456 = vld [vmem:[%s452 + $0xc] sm:$0xf]
    %v457 = vld [vmem:[%s452 + $0x10] sm:$0xf]
    %v458 = vld [vmem:[%s452 + $0x14] sm:$0xf]
    %v459 = vld [vmem:[%s452 + $0x18] sm:$0xf]
    %v460 = vld [vmem:[%s452 + $0x1c] sm:$0xf]
    %v461 = vld [vmem:[%s452 + $0x20] sm:$0xf]
    %v462 = vld [vmem:[%s452 + $0x24] sm:$0xf]
    %v463 = vld [vmem:[%s452 + $0x28] sm:$0xf]
    %v464 = vld [vmem:[%s452 + $0x2c] sm:$0xf]
    %v465 = vld [vmem:[%s452 + $0x30] sm:$0xf]
    %v466 = vld [vmem:[%s452 + $0x34] sm:$0xf]
    %v467 = vld [vmem:[%s452 + $0x38] sm:$0xf]
    %v468 = vld [vmem:[%s452 + $0x3c] sm:$0xf]
    %s469 = scalar_lea.vmem [#allocation17], 2
    %v470 = vld [vmem:[%s469] sm:$0x1]
    %v472 = vperm.slane %v470, 0
    %v490 = vunpack.c.l.b16 %v453
    %v491 = vunpack.c.l.b16 %v454
    %v492 = vunpack.c.l.b16 %v455
    %v493 = vunpack.c.l.b16 %v456
    %v494 = vunpack.c.l.b16 %v457
    %v495 = vunpack.c.l.b16 %v458
    %v496 = vunpack.c.l.b16 %v459
    %v497 = vunpack.c.l.b16 %v460
    %v498 = vunpack.c.l.b16 %v461
    %v499 = vunpack.c.l.b16 %v462
    %v500 = vunpack.c.l.b16 %v463
    %v501 = vunpack.c.l.b16 %v464
    %v502 = vunpack.c.l.b16 %v465
    %v503 = vunpack.c.l.b16 %v466
    %v504 = vunpack.c.l.b16 %v467
    %v505 = vunpack.c.l.b16 %v468
    %v506 = vpack.c.b16 %v491, %v490
    %v507 = vpack.c.b16 %v493, %v492
    %v508 = vpack.c.b16 %v495, %v494
    %v509 = vpack.c.b16 %v497, %v496
    %v510 = vpack.c.b16 %v499, %v498
    %v511 = vpack.c.b16 %v501, %v500
    %v512 = vpack.c.b16 %v503, %v502
    %v513 = vpack.c.b16 %v505, %v504
    %522 = vmatpush.bf16.msra.mxu0 %v513
    %523 = vmatpush.bf16.msra.mxu0 %v512
    %524 = vmatpush.bf16.msra.mxu0 %v511
    %525 = vmatpush.bf16.msra.mxu0 %v510
    %526 = vmatpush.bf16.msra.mxu0 %v509
    %527 = vmatpush.bf16.msra.mxu0 %v508
    %528 = vmatpush.bf16.msra.mxu0 %v507
    %529 = vmatpush.bf16.msra.mxu0 %v506
    %530 = vmatmul.bf16.gmra.mxu0 %v236
    %v531 = vpop.f32.mrf.mxu0
    %v532 = vadd.f32 %v472, %v531
    %v533 = vpop.f32.mrf.mxu0
    %v534 = vadd.f32 %v472, %v533
    %535 = vmatmul.bf16.gmra.mxu0 %v237
    %v536 = vpop.f32.mrf.mxu0
    %v537 = vadd.f32 %v472, %v536
    %v538 = vpop.f32.mrf.mxu0
    %v539 = vadd.f32 %v472, %v538
    %540 = vmatmul.bf16.gmra.mxu0 %v238
    %v541 = vpop.f32.mrf.mxu0
    %v542 = vadd.f32 %v472, %v541
    %v543 = vpop.f32.mrf.mxu0
    %v544 = vadd.f32 %v472, %v543
    %545 = vmatmul.bf16.gmra.mxu0 %v239
    %v546 = vpop.f32.mrf.mxu0
    %v547 = vadd.f32 %v472, %v546
    %v548 = vpop.f32.mrf.mxu0
    %v549 = vadd.f32 %v472, %v548
    %550 = vdwg.mxu0
    %551 = vst [vmem:[#allocation5] sm:$0xff] %v532
    %552 = vst [vmem:[#allocation5 + $0x8] sm:$0xff] %v534
    %553 = vst [vmem:[#allocation5 + $0x10] sm:$0xff] %v537
    %554 = vst [vmem:[#allocation5 + $0x18] sm:$0xff] %v539
    %555 = vst [vmem:[#allocation5 + $0x20] sm:$0xff] %v542
    %556 = vst [vmem:[#allocation5 + $0x28] sm:$0xff] %v544
    %557 = vst [vmem:[#allocation5 + $0x30] sm:$0xff] %v547
    %558 = vst [vmem:[#allocation5 + $0x38] sm:$0xff] %v549
    %v559 = vld [vmem:[#allocation15] sm:$0xf]
    %v560 = vld [vmem:[#allocation15 + $0x4] sm:$0xf]
    %v561 = vld [vmem:[#allocation15 + $0x8] sm:$0xf]
    %v562 = vld [vmem:[#allocation15 + $0xc] sm:$0xf]
    %v563 = vld [vmem:[#allocation15 + $0x10] sm:$0xf]
    %v564 = vld [vmem:[#allocation15 + $0x14] sm:$0xf]
    %v565 = vld [vmem:[#allocation15 + $0x18] sm:$0xf]
    %v566 = vld [vmem:[#allocation15 + $0x1c] sm:$0xf]
    %v567 = vld [vmem:[#allocation15 + $0x20] sm:$0xf]
    %v568 = vld [vmem:[#allocation15 + $0x24] sm:$0xf]
    %v569 = vld [vmem:[#allocation15 + $0x28] sm:$0xf]
    %v570 = vld [vmem:[#allocation15 + $0x2c] sm:$0xf]
    %v571 = vld [vmem:[#allocation15 + $0x30] sm:$0xf]
    %v572 = vld [vmem:[#allocation15 + $0x34] sm:$0xf]
    %v573 = vld [vmem:[#allocation15 + $0x38] sm:$0xf]
    %v574 = vld [vmem:[#allocation15 + $0x3c] sm:$0xf]
    %s575 = scalar_lea.vmem [#allocation15], 64
    %v576 = vld [vmem:[%s575] sm:$0xf]
    %v577 = vld [vmem:[%s575 + $0x4] sm:$0xf]
    %v578 = vld [vmem:[%s575 + $0x8] sm:$0xf]
    %v579 = vld [vmem:[%s575 + $0xc] sm:$0xf]
    %v580 = vld [vmem:[%s575 + $0x10] sm:$0xf]
    %v581 = vld [vmem:[%s575 + $0x14] sm:$0xf]
    %v582 = vld [vmem:[%s575 + $0x18] sm:$0xf]
    %v583 = vld [vmem:[%s575 + $0x1c] sm:$0xf]
    %v584 = vld [vmem:[%s575 + $0x20] sm:$0xf]
    %v585 = vld [vmem:[%s575 + $0x24] sm:$0xf]
    %v586 = vld [vmem:[%s575 + $0x28] sm:$0xf]
    %v587 = vld [vmem:[%s575 + $0x2c] sm:$0xf]
    %v588 = vld [vmem:[%s575 + $0x30] sm:$0xf]
    %v589 = vld [vmem:[%s575 + $0x34] sm:$0xf]
    %v590 = vld [vmem:[%s575 + $0x38] sm:$0xf]
    %v591 = vld [vmem:[%s575 + $0x3c] sm:$0xf]
    %s592 = scalar_lea.vmem [#allocation15], 128
    %v593 = vld [vmem:[%s592] sm:$0xf]
    %v594 = vld [vmem:[%s592 + $0x4] sm:$0xf]
    %v595 = vld [vmem:[%s592 + $0x8] sm:$0xf]
    %v596 = vld [vmem:[%s592 + $0xc] sm:$0xf]
    %v597 = vld [vmem:[%s592 + $0x10] sm:$0xf]
    %v598 = vld [vmem:[%s592 + $0x14] sm:$0xf]
    %v599 = vld [vmem:[%s592 + $0x18] sm:$0xf]
    %v600 = vld [vmem:[%s592 + $0x1c] sm:$0xf]
    %v601 = vld [vmem:[%s592 + $0x20] sm:$0xf]
    %v602 = vld [vmem:[%s592 + $0x24] sm:$0xf]
    %v603 = vld [vmem:[%s592 + $0x28] sm:$0xf]
    %v604 = vld [vmem:[%s592 + $0x2c] sm:$0xf]
    %v605 = vld [vmem:[%s592 + $0x30] sm:$0xf]
    %v606 = vld [vmem:[%s592 + $0x34] sm:$0xf]
    %v607 = vld [vmem:[%s592 + $0x38] sm:$0xf]
    %v608 = vld [vmem:[%s592 + $0x3c] sm:$0xf]
    %s609 = scalar_lea.vmem [#allocation17], 3
    %v610 = vld [vmem:[%s609] sm:$0x1]
    %v612 = vperm.slane %v610, 0
    %v614 = vld [vmem:[#allocation11] sm:$0xff]
    %v615 = vld [vmem:[#allocation3] sm:$0xff]
    %v616 = vld [vmem:[#allocation4] sm:$0xff]
    %v617 = vld [vmem:[#allocation5] sm:$0xff]
    %v618 = vpack.c.bf16 %v614, %v614
    %v635 = vunpack.c.l.b16 %v559
    %v636 = vunpack.c.l.b16 %v560
    %v637 = vunpack.c.l.b16 %v561
    %v638 = vunpack.c.l.b16 %v562
    %v639 = vunpack.c.l.b16 %v563
    %v640 = vunpack.c.l.b16 %v564
    %v641 = vunpack.c.l.b16 %v565
    %v642 = vunpack.c.l.b16 %v566
    %v643 = vunpack.c.l.b16 %v567
    %v644 = vunpack.c.l.b16 %v568
    %v645 = vunpack.c.l.b16 %v569
    %v646 = vunpack.c.l.b16 %v570
    %v647 = vunpack.c.l.b16 %v571
    %v648 = vunpack.c.l.b16 %v572
    %v649 = vunpack.c.l.b16 %v573
    %v650 = vunpack.c.l.b16 %v574
    %v651 = vpack.c.b16 %v636, %v635
    %v652 = vpack.c.b16 %v638, %v637
    %v653 = vpack.c.b16 %v640, %v639
    %v654 = vpack.c.b16 %v642, %v641
    %v655 = vpack.c.b16 %v644, %v643
    %v656 = vpack.c.b16 %v646, %v645
    %v657 = vpack.c.b16 %v648, %v647
    %v658 = vpack.c.b16 %v650, %v649
    %667 = vmatpush.bf16.msra.mxu0 %v658
    %668 = vmatpush.bf16.msra.mxu0 %v657
    %669 = vmatpush.bf16.msra.mxu0 %v656
    %670 = vmatpush.bf16.msra.mxu0 %v655
    %671 = vmatpush.bf16.msra.mxu0 %v654
    %672 = vmatpush.bf16.msra.mxu0 %v653
    %673 = vmatpush.bf16.msra.mxu0 %v652
    %674 = vmatpush.bf16.msra.mxu0 %v651
    %675 = vmatmul.bf16.gmra.mxu0 %v618
    %v676 = vpop.f32.mrf.mxu0
    %v677 = vadd.f32 0.0, %v676
    %v678 = vpop.f32.mrf.mxu0
    %679 = vdwg.mxu0
    %v696 = vunpack.c.l.b16 %v576
    %v697 = vunpack.c.l.b16 %v577
    %v698 = vunpack.c.l.b16 %v578
    %v699 = vunpack.c.l.b16 %v579
    %v700 = vunpack.c.l.b16 %v580
    %v701 = vunpack.c.l.b16 %v581
    %v702 = vunpack.c.l.b16 %v582
    %v703 = vunpack.c.l.b16 %v583
    %v704 = vunpack.c.l.b16 %v584
    %v705 = vunpack.c.l.b16 %v585
    %v706 = vunpack.c.l.b16 %v586
    %v707 = vunpack.c.l.b16 %v587
    %v708 = vunpack.c.l.b16 %v588
    %v709 = vunpack.c.l.b16 %v589
    %v710 = vunpack.c.l.b16 %v590
    %v711 = vunpack.c.l.b16 %v591
    %v712 = vpack.c.b16 %v697, %v696
    %v713 = vpack.c.b16 %v699, %v698
    %v714 = vpack.c.b16 %v701, %v700
    %v715 = vpack.c.b16 %v703, %v702
    %v716 = vpack.c.b16 %v705, %v704
    %v717 = vpack.c.b16 %v707, %v706
    %v718 = vpack.c.b16 %v709, %v708
    %v719 = vpack.c.b16 %v711, %v710
    %728 = vmatpush.bf16.msra.mxu0 %v719
    %729 = vmatpush.bf16.msra.mxu0 %v718
    %730 = vmatpush.bf16.msra.mxu0 %v717
    %731 = vmatpush.bf16.msra.mxu0 %v716
    %732 = vmatpush.bf16.msra.mxu0 %v715
    %733 = vmatpush.bf16.msra.mxu0 %v714
    %734 = vmatpush.bf16.msra.mxu0 %v713
    %735 = vmatpush.bf16.msra.mxu0 %v712
    %736 = vmatmul.bf16.gmra.mxu0 %v618
    %v737 = vpop.f32.mrf.mxu0
    %v738 = vadd.f32 0.0, %v737
    %v739 = vpop.f32.mrf.mxu0
    %740 = vdwg.mxu0
    %v741 = vadd.f32 %v615, %v677
    %v742 = vxor.u32 %v741, 2147483648
    %v743 = vmul.f32 %v742, 1.442695
    %v744 = vpow.pop %v743
    %v745 = vadd.f32 %v744, 1.0
    %v746 = vrcp.pop %v745
    %v747 = vmul.f32 %v745, %v746
    %v748 = vsub.f32 1.0, %v747
    %v749 = vmul.f32 %v746, %v748
    %v750 = vadd.f32 %v746, %v749
    %vm751 = vweird.f32 %v745
    %vm752 = vweird.f32 %v746
    %vm753 = vmor %vm751, %vm752
    %v754 = vsel %vm753, %v746, %v750
    %v755 = vand.u32 2147483647, %v745
    %vm756 = vcmp.eq.f32.partialorder %v755, 8.507059e+37
    %v757 = vand.u32 %v745, 2147483648
    %v758 = vor.u32 1.1754944e-38, %v757
    %v759 = vsel %vm756, %v758, %v754
    %v760 = vmul.f32 1.0, %v759
    %v761 = vadd.f32 %v616, %v738
    %v762 = vxor.u32 %v761, 2147483648
    %v763 = vmul.f32 %v762, 1.442695
    %v764 = vpow.pop %v763
    %v765 = vadd.f32 %v764, 1.0
    %v766 = vrcp.pop %v765
    %v767 = vmul.f32 %v765, %v766
    %v768 = vsub.f32 1.0, %v767
    %v769 = vmul.f32 %v766, %v768
    %v770 = vadd.f32 %v766, %v769
    %vm771 = vweird.f32 %v765
    %vm772 = vweird.f32 %v766
    %vm773 = vmor %vm771, %vm772
    %v774 = vsel %vm773, %v766, %v770
    %v775 = vand.u32 2147483647, %v765
    %vm776 = vcmp.eq.f32.partialorder %v775, 8.507059e+37
    %v777 = vand.u32 %v765, 2147483648
    %v778 = vor.u32 1.1754944e-38, %v777
    %v779 = vsel %vm776, %v778, %v774
    %v780 = vmul.f32 1.0, %v779
    %v797 = vunpack.c.l.b16 %v593
    %v798 = vunpack.c.l.b16 %v594
    %v799 = vunpack.c.l.b16 %v595
    %v800 = vunpack.c.l.b16 %v596
    %v801 = vunpack.c.l.b16 %v597
    %v802 = vunpack.c.l.b16 %v598
    %v803 = vunpack.c.l.b16 %v599
    %v804 = vunpack.c.l.b16 %v600
    %v805 = vunpack.c.l.b16 %v601
    %v806 = vunpack.c.l.b16 %v602
    %v807 = vunpack.c.l.b16 %v603
    %v808 = vunpack.c.l.b16 %v604
    %v809 = vunpack.c.l.b16 %v605
    %v810 = vunpack.c.l.b16 %v606
    %v811 = vunpack.c.l.b16 %v607
    %v812 = vunpack.c.l.b16 %v608
    %v813 = vpack.c.b16 %v798, %v797
    %v814 = vpack.c.b16 %v800, %v799
    %v815 = vpack.c.b16 %v802, %v801
    %v816 = vpack.c.b16 %v804, %v803
    %v817 = vpack.c.b16 %v806, %v805
    %v818 = vpack.c.b16 %v808, %v807
    %v819 = vpack.c.b16 %v810, %v809
    %v820 = vpack.c.b16 %v812, %v811
    %829 = vmatpush.bf16.msra.mxu0 %v820
    %830 = vmatpush.bf16.msra.mxu0 %v819
    %831 = vmatpush.bf16.msra.mxu0 %v818
    %832 = vmatpush.bf16.msra.mxu0 %v817
    %833 = vmatpush.bf16.msra.mxu0 %v816
    %834 = vmatpush.bf16.msra.mxu0 %v815
    %835 = vmatpush.bf16.msra.mxu0 %v814
    %836 = vmatpush.bf16.msra.mxu0 %v813
    %837 = vmatmul.bf16.gmra.mxu0 %v618
    %v838 = vpop.f32.mrf.mxu0
    %v839 = vadd.f32 %v612, %v838
    %v840 = vpop.f32.mrf.mxu0
    %841 = vdwg.mxu0
    %v842 = vmul.f32 %v760, %v839
    %v843 = vadd.f32 %v617, %v842
    %v844 = vtanh.pop %v843
    %v845 = vsub.f32 1.0, %v780
    %v846 = vmul.f32 %v845, %v844
    %v847 = vmul.f32 %v780, %v614
    %v848 = vadd.f32 %v846, %v847
    %849 = vst [vmem:[#allocation2] sm:$0xff] %v848
    %s850 = scalar_lea.vmem [#allocation3], 8
    %v851 = vld [vmem:[%s850] sm:$0xff]
    %s852 = scalar_lea.vmem [#allocation4], 8
    %v853 = vld [vmem:[%s852] sm:$0xff]
    %s854 = scalar_lea.vmem [#allocation5], 8
    %v855 = vld [vmem:[%s854] sm:$0xff]
    %v856 = vpack.c.bf16 %v848, %v848
    %857 = vmatpush.bf16.msra.mxu0 %v658
    %858 = vmatpush.bf16.msra.mxu0 %v657
    %859 = vmatpush.bf16.msra.mxu0 %v656
    %860 = vmatpush.bf16.msra.mxu0 %v655
    %861 = vmatpush.bf16.msra.mxu0 %v654
    %862 = vmatpush.bf16.msra.mxu0 %v653
    %863 = vmatpush.bf16.msra.mxu0 %v652
    %864 = vmatpush.bf16.msra.mxu0 %v651
    %865 = vmatmul.bf16.gmra.mxu0 %v856
    %v866 = vpop.f32.mrf.mxu0
    %v867 = vadd.f32 0.0, %v866
    %v868 = vpop.f32.mrf.mxu0
    %869 = vdwg.mxu0
    %870 = vmatpush.bf16.msra.mxu0 %v719
    %871 = vmatpush.bf16.msra.mxu0 %v718
    %872 = vmatpush.bf16.msra.mxu0 %v717
    %873 = vmatpush.bf16.msra.mxu0 %v716
    %874 = vmatpush.bf16.msra.mxu0 %v715
    %875 = vmatpush.bf16.msra.mxu0 %v714
    %876 = vmatpush.bf16.msra.mxu0 %v713
    %877 = vmatpush.bf16.msra.mxu0 %v712
    %878 = vmatmul.bf16.gmra.mxu0 %v856
    %v879 = vpop.f32.mrf.mxu0
    %v880 = vadd.f32 0.0, %v879
    %v881 = vpop.f32.mrf.mxu0
    %882 = vdwg.mxu0
    %v883 = vadd.f32 %v851, %v867
    %v884 = vxor.u32 %v883, 2147483648
    %v885 = vmul.f32 %v884, 1.442695
    %v886 = vpow.pop %v885
    %v887 = vadd.f32 %v886, 1.0
    %v888 = vrcp.pop %v887
    %v889 = vmul.f32 %v887, %v888
    %v890 = vsub.f32 1.0, %v889
    %v891 = vmul.f32 %v888, %v890
    %v892 = vadd.f32 %v888, %v891
    %vm893 = vweird.f32 %v887
    %vm894 = vweird.f32 %v888
    %vm895 = vmor %vm893, %vm894
    %v896 = vsel %vm895, %v888, %v892
    %v897 = vand.u32 2147483647, %v887
    %vm898 = vcmp.eq.f32.partialorder %v897, 8.507059e+37
    %v899 = vand.u32 %v887, 2147483648
    %v900 = vor.u32 1.1754944e-38, %v899
    %v901 = vsel %vm898, %v900, %v896
    %v902 = vmul.f32 1.0, %v901
    %v903 = vadd.f32 %v853, %v880
    %v904 = vxor.u32 %v903, 2147483648
    %v905 = vmul.f32 %v904, 1.442695
    %v906 = vpow.pop %v905
    %v907 = vadd.f32 %v906, 1.0
    %v908 = vrcp.pop %v907
    %v909 = vmul.f32 %v907, %v908
    %v910 = vsub.f32 1.0, %v909
    %v911 = vmul.f32 %v908, %v910
    %v912 = vadd.f32 %v908, %v911
    %vm913 = vweird.f32 %v907
    %vm914 = vweird.f32 %v908
    %vm915 = vmor %vm913, %vm914
    %v916 = vsel %vm915, %v908, %v912
    %v917 = vand.u32 2147483647, %v907
    %vm918 = vcmp.eq.f32.partialorder %v917, 8.507059e+37
    %v919 = vand.u32 %v907, 2147483648
    %v920 = vor.u32 1.1754944e-38, %v919
    %v921 = vsel %vm918, %v920, %v916
    %v922 = vmul.f32 1.0, %v921
    %923 = vmatpush.bf16.msra.mxu0 %v820
    %924 = vmatpush.bf16.msra.mxu0 %v819
    %925 = vmatpush.bf16.msra.mxu0 %v818
    %926 = vmatpush.bf16.msra.mxu0 %v817
    %927 = vmatpush.bf16.msra.mxu0 %v816
    %928 = vmatpush.bf16.msra.mxu0 %v815
    %929 = vmatpush.bf16.msra.mxu0 %v814
    %930 = vmatpush.bf16.msra.mxu0 %v813
    %931 = vmatmul.bf16.gmra.mxu0 %v856
    %v932 = vpop.f32.mrf.mxu0
    %v933 = vadd.f32 %v612, %v932
    %v934 = vpop.f32.mrf.mxu0
    %935 = vdwg.mxu0
    %v936 = vmul.f32 %v902, %v933
    %v937 = vadd.f32 %v855, %v936
    %v938 = vtanh.pop %v937
    %v939 = vsub.f32 1.0, %v922
    %v940 = vmul.f32 %v939, %v938
    %v941 = vmul.f32 %v922, %v848
    %v942 = vadd.f32 %v940, %v941
    %s943 = scalar_lea.vmem [#allocation2], 8
    %944 = vst [vmem:[%s943] sm:$0xff] %v942
    %s945 = scalar_lea.vmem [#allocation3], 16
    %v946 = vld [vmem:[%s945] sm:$0xff]
    %s947 = scalar_lea.vmem [#allocation4], 16
    %v948 = vld [vmem:[%s947] sm:$0xff]
    %s949 = scalar_lea.vmem [#allocation5], 16
    %v950 = vld [vmem:[%s949] sm:$0xff]
    %v951 = vpack.c.bf16 %v942, %v942
    %952 = vmatpush.bf16.msra.mxu0 %v658
    %953 = vmatpush.bf16.msra.mxu0 %v657
    %954 = vmatpush.bf16.msra.mxu0 %v656
    %955 = vmatpush.bf16.msra.mxu0 %v655
    %956 = vmatpush.bf16.msra.mxu0 %v654
    %957 = vmatpush.bf16.msra.mxu0 %v653
    %958 = vmatpush.bf16.msra.mxu0 %v652
    %959 = vmatpush.bf16.msra.mxu0 %v651
    %960 = vmatmul.bf16.gmra.mxu0 %v951
    %v961 = vpop.f32.mrf.mxu0
    %v962 = vadd.f32 0.0, %v961
    %v963 = vpop.f32.mrf.mxu0
    %964 = vdwg.mxu0
    %965 = vmatpush.bf16.msra.mxu0 %v719
    %966 = vmatpush.bf16.msra.mxu0 %v718
    %967 = vmatpush.bf16.msra.mxu0 %v717
    %968 = vmatpush.bf16.msra.mxu0 %v716
    %969 = vmatpush.bf16.msra.mxu0 %v715
    %970 = vmatpush.bf16.msra.mxu0 %v714
    %971 = vmatpush.bf16.msra.mxu0 %v713
    %972 = vmatpush.bf16.msra.mxu0 %v712
    %973 = vmatmul.bf16.gmra.mxu0 %v951
    %v974 = vpop.f32.mrf.mxu0
    %v975 = vadd.f32 0.0, %v974
    %v976 = vpop.f32.mrf.mxu0
    %977 = vdwg.mxu0
    %v978 = vadd.f32 %v946, %v962
    %v979 = vxor.u32 %v978, 2147483648
    %v980 = vmul.f32 %v979, 1.442695
    %v981 = vpow.pop %v980
    %v982 = vadd.f32 %v981, 1.0
    %v983 = vrcp.pop %v982
    %v984 = vmul.f32 %v982, %v983
    %v985 = vsub.f32 1.0, %v984
    %v986 = vmul.f32 %v983, %v985
    %v987 = vadd.f32 %v983, %v986
    %vm988 = vweird.f32 %v982
    %vm989 = vweird.f32 %v983
    %vm990 = vmor %vm988, %vm989
    %v991 = vsel %vm990, %v983, %v987
    %v992 = vand.u32 2147483647, %v982
    %vm993 = vcmp.eq.f32.partialorder %v992, 8.507059e+37
    %v994 = vand.u32 %v982, 2147483648
    %v995 = vor.u32 1.1754944e-38, %v994
    %v996 = vsel %vm993, %v995, %v991
    %v997 = vmul.f32 1.0, %v996
    %v998 = vadd.f32 %v948, %v975
    %v999 = vxor.u32 %v998, 2147483648
    %v1000 = vmul.f32 %v999, 1.442695
    %v1001 = vpow.pop %v1000
    %v1002 = vadd.f32 %v1001, 1.0
    %v1003 = vrcp.pop %v1002
    %v1004 = vmul.f32 %v1002, %v1003
    %v1005 = vsub.f32 1.0, %v1004
    %v1006 = vmul.f32 %v1003, %v1005
    %v1007 = vadd.f32 %v1003, %v1006
    %vm1008 = vweird.f32 %v1002
    %vm1009 = vweird.f32 %v1003
    %vm1010 = vmor %vm1008, %vm1009
    %v1011 = vsel %vm1010, %v1003, %v1007
    %v1012 = vand.u32 2147483647, %v1002
    %vm1013 = vcmp.eq.f32.partialorder %v1012, 8.507059e+37
    %v1014 = vand.u32 %v1002, 2147483648
    %v1015 = vor.u32 1.1754944e-38, %v1014
    %v1016 = vsel %vm1013, %v1015, %v1011
    %v1017 = vmul.f32 1.0, %v1016
    %1018 = vmatpush.bf16.msra.mxu0 %v820
    %1019 = vmatpush.bf16.msra.mxu0 %v819
    %1020 = vmatpush.bf16.msra.mxu0 %v818
    %1021 = vmatpush.bf16.msra.mxu0 %v817
    %1022 = vmatpush.bf16.msra.mxu0 %v816
    %1023 = vmatpush.bf16.msra.mxu0 %v815
    %1024 = vmatpush.bf16.msra.mxu0 %v814
    %1025 = vmatpush.bf16.msra.mxu0 %v813
    %1026 = vmatmul.bf16.gmra.mxu0 %v951
    %v1027 = vpop.f32.mrf.mxu0
    %v1028 = vadd.f32 %v612, %v1027
    %v1029 = vpop.f32.mrf.mxu0
    %1030 = vdwg.mxu0
    %v1031 = vmul.f32 %v997, %v1028
    %v1032 = vadd.f32 %v950, %v1031
    %v1033 = vtanh.pop %v1032
    %v1034 = vsub.f32 1.0, %v1017
    %v1035 = vmul.f32 %v1034, %v1033
    %v1036 = vmul.f32 %v1017, %v942
    %v1037 = vadd.f32 %v1035, %v1036
    %s1038 = scalar_lea.vmem [#allocation2], 16
    %1039 = vst [vmem:[%s1038] sm:$0xff] %v1037
    %s1040 = scalar_lea.vmem [#allocation3], 24
    %v1041 = vld [vmem:[%s1040] sm:$0xff]
    %s1042 = scalar_lea.vmem [#allocation4], 24
    %v1043 = vld [vmem:[%s1042] sm:$0xff]
    %s1044 = scalar_lea.vmem [#allocation5], 24
    %v1045 = vld [vmem:[%s1044] sm:$0xff]
    %v1046 = vpack.c.bf16 %v1037, %v1037
    %1047 = vmatpush.bf16.msra.mxu0 %v658
    %1048 = vmatpush.bf16.msra.mxu0 %v657
    %1049 = vmatpush.bf16.msra.mxu0 %v656
    %1050 = vmatpush.bf16.msra.mxu0 %v655
    %1051 = vmatpush.bf16.msra.mxu0 %v654
    %1052 = vmatpush.bf16.msra.mxu0 %v653
    %1053 = vmatpush.bf16.msra.mxu0 %v652
    %1054 = vmatpush.bf16.msra.mxu0 %v651
    %1055 = vmatmul.bf16.gmra.mxu0 %v1046
    %v1056 = vpop.f32.mrf.mxu0
    %v1057 = vadd.f32 0.0, %v1056
    %v1058 = vpop.f32.mrf.mxu0
    %1059 = vdwg.mxu0
    %1060 = vmatpush.bf16.msra.mxu0 %v719
    %1061 = vmatpush.bf16.msra.mxu0 %v718
    %1062 = vmatpush.bf16.msra.mxu0 %v717
    %1063 = vmatpush.bf16.msra.mxu0 %v716
    %1064 = vmatpush.bf16.msra.mxu0 %v715
    %1065 = vmatpush.bf16.msra.mxu0 %v714
    %1066 = vmatpush.bf16.msra.mxu0 %v713
    %1067 = vmatpush.bf16.msra.mxu0 %v712
    %1068 = vmatmul.bf16.gmra.mxu0 %v1046
    %v1069 = vpop.f32.mrf.mxu0
    %v1070 = vadd.f32 0.0, %v1069
    %v1071 = vpop.f32.mrf.mxu0
    %1072 = vdwg.mxu0
    %v1073 = vadd.f32 %v1041, %v1057
    %v1074 = vxor.u32 %v1073, 2147483648
    %v1075 = vmul.f32 %v1074, 1.442695
    %v1076 = vpow.pop %v1075
    %v1077 = vadd.f32 %v1076, 1.0
    %v1078 = vrcp.pop %v1077
    %v1079 = vmul.f32 %v1077, %v1078
    %v1080 = vsub.f32 1.0, %v1079
    %v1081 = vmul.f32 %v1078, %v1080
    %v1082 = vadd.f32 %v1078, %v1081
    %vm1083 = vweird.f32 %v1077
    %vm1084 = vweird.f32 %v1078
    %vm1085 = vmor %vm1083, %vm1084
    %v1086 = vsel %vm1085, %v1078, %v1082
    %v1087 = vand.u32 2147483647, %v1077
    %vm1088 = vcmp.eq.f32.partialorder %v1087, 8.507059e+37
    %v1089 = vand.u32 %v1077, 2147483648
    %v1090 = vor.u32 1.1754944e-38, %v1089
    %v1091 = vsel %vm1088, %v1090, %v1086
    %v1092 = vmul.f32 1.0, %v1091
    %v1093 = vadd.f32 %v1043, %v1070
    %v1094 = vxor.u32 %v1093, 2147483648
    %v1095 = vmul.f32 %v1094, 1.442695
    %v1096 = vpow.pop %v1095
    %v1097 = vadd.f32 %v1096, 1.0
    %v1098 = vrcp.pop %v1097
    %v1099 = vmul.f32 %v1097, %v1098
    %v1100 = vsub.f32 1.0, %v1099
    %v1101 = vmul.f32 %v1098, %v1100
    %v1102 = vadd.f32 %v1098, %v1101
    %vm1103 = vweird.f32 %v1097
    %vm1104 = vweird.f32 %v1098
    %vm1105 = vmor %vm1103, %vm1104
    %v1106 = vsel %vm1105, %v1098, %v1102
    %v1107 = vand.u32 2147483647, %v1097
    %vm1108 = vcmp.eq.f32.partialorder %v1107, 8.507059e+37
    %v1109 = vand.u32 %v1097, 2147483648
    %v1110 = vor.u32 1.1754944e-38, %v1109
    %v1111 = vsel %vm1108, %v1110, %v1106
    %v1112 = vmul.f32 1.0, %v1111
    %1113 = vmatpush.bf16.msra.mxu0 %v820
    %1114 = vmatpush.bf16.msra.mxu0 %v819
    %1115 = vmatpush.bf16.msra.mxu0 %v818
    %1116 = vmatpush.bf16.msra.mxu0 %v817
    %1117 = vmatpush.bf16.msra.mxu0 %v816
    %1118 = vmatpush.bf16.msra.mxu0 %v815
    %1119 = vmatpush.bf16.msra.mxu0 %v814
    %1120 = vmatpush.bf16.msra.mxu0 %v813
    %1121 = vmatmul.bf16.gmra.mxu0 %v1046
    %v1122 = vpop.f32.mrf.mxu0
    %v1123 = vadd.f32 %v612, %v1122
    %v1124 = vpop.f32.mrf.mxu0
    %1125 = vdwg.mxu0
    %v1126 = vmul.f32 %v1092, %v1123
    %v1127 = vadd.f32 %v1045, %v1126
    %v1128 = vtanh.pop %v1127
    %v1129 = vsub.f32 1.0, %v1112
    %v1130 = vmul.f32 %v1129, %v1128
    %v1131 = vmul.f32 %v1112, %v1037
    %v1132 = vadd.f32 %v1130, %v1131
    %s1133 = scalar_lea.vmem [#allocation2], 24
    %1134 = vst [vmem:[%s1133] sm:$0xff] %v1132
    %s1135 = scalar_lea.vmem [#allocation3], 32
    %v1136 = vld [vmem:[%s1135] sm:$0xff]
    %s1137 = scalar_lea.vmem [#allocation4], 32
    %v1138 = vld [vmem:[%s1137] sm:$0xff]
    %s1139 = scalar_lea.vmem [#allocation5], 32
    %v1140 = vld [vmem:[%s1139] sm:$0xff]
    %v1141 = vpack.c.bf16 %v1132, %v1132
    %1142 = vmatpush.bf16.msra.mxu0 %v658
    %1143 = vmatpush.bf16.msra.mxu0 %v657
    %1144 = vmatpush.bf16.msra.mxu0 %v656
    %1145 = vmatpush.bf16.msra.mxu0 %v655
    %1146 = vmatpush.bf16.msra.mxu0 %v654
    %1147 = vmatpush.bf16.msra.mxu0 %v653
    %1148 = vmatpush.bf16.msra.mxu0 %v652
    %1149 = vmatpush.bf16.msra.mxu0 %v651
    %1150 = vmatmul.bf16.gmra.mxu0 %v1141
    %v1151 = vpop.f32.mrf.mxu0
    %v1152 = vadd.f32 0.0, %v1151
    %v1153 = vpop.f32.mrf.mxu0
    %1154 = vdwg.mxu0
    %1155 = vmatpush.bf16.msra.mxu0 %v719
    %1156 = vmatpush.bf16.msra.mxu0 %v718
    %1157 = vmatpush.bf16.msra.mxu0 %v717
    %1158 = vmatpush.bf16.msra.mxu0 %v716
    %1159 = vmatpush.bf16.msra.mxu0 %v715
    %1160 = vmatpush.bf16.msra.mxu0 %v714
    %1161 = vmatpush.bf16.msra.mxu0 %v713
    %1162 = vmatpush.bf16.msra.mxu0 %v712
    %1163 = vmatmul.bf16.gmra.mxu0 %v1141
    %v1164 = vpop.f32.mrf.mxu0
    %v1165 = vadd.f32 0.0, %v1164
    %v1166 = vpop.f32.mrf.mxu0
    %1167 = vdwg.mxu0
    %v1168 = vadd.f32 %v1136, %v1152
    %v1169 = vxor.u32 %v1168, 2147483648
    %v1170 = vmul.f32 %v1169, 1.442695
    %v1171 = vpow.pop %v1170
    %v1172 = vadd.f32 %v1171, 1.0
    %v1173 = vrcp.pop %v1172
    %v1174 = vmul.f32 %v1172, %v1173
    %v1175 = vsub.f32 1.0, %v1174
    %v1176 = vmul.f32 %v1173, %v1175
    %v1177 = vadd.f32 %v1173, %v1176
    %vm1178 = vweird.f32 %v1172
    %vm1179 = vweird.f32 %v1173
    %vm1180 = vmor %vm1178, %vm1179
    %v1181 = vsel %vm1180, %v1173, %v1177
    %v1182 = vand.u32 2147483647, %v1172
    %vm1183 = vcmp.eq.f32.partialorder %v1182, 8.507059e+37
    %v1184 = vand.u32 %v1172, 2147483648
    %v1185 = vor.u32 1.1754944e-38, %v1184
    %v1186 = vsel %vm1183, %v1185, %v1181
    %v1187 = vmul.f32 1.0, %v1186
    %v1188 = vadd.f32 %v1138, %v1165
    %v1189 = vxor.u32 %v1188, 2147483648
    %v1190 = vmul.f32 %v1189, 1.442695
    %v1191 = vpow.pop %v1190
    %v1192 = vadd.f32 %v1191, 1.0
    %v1193 = vrcp.pop %v1192
    %v1194 = vmul.f32 %v1192, %v1193
    %v1195 = vsub.f32 1.0, %v1194
    %v1196 = vmul.f32 %v1193, %v1195
    %v1197 = vadd.f32 %v1193, %v1196
    %vm1198 = vweird.f32 %v1192
    %vm1199 = vweird.f32 %v1193
    %vm1200 = vmor %vm1198, %vm1199
    %v1201 = vsel %vm1200, %v1193, %v1197
    %v1202 = vand.u32 2147483647, %v1192
    %vm1203 = vcmp.eq.f32.partialorder %v1202, 8.507059e+37
    %v1204 = vand.u32 %v1192, 2147483648
    %v1205 = vor.u32 1.1754944e-38, %v1204
    %v1206 = vsel %vm1203, %v1205, %v1201
    %v1207 = vmul.f32 1.0, %v1206
    %1208 = vmatpush.bf16.msra.mxu0 %v820
    %1209 = vmatpush.bf16.msra.mxu0 %v819
    %1210 = vmatpush.bf16.msra.mxu0 %v818
    %1211 = vmatpush.bf16.msra.mxu0 %v817
    %1212 = vmatpush.bf16.msra.mxu0 %v816
    %1213 = vmatpush.bf16.msra.mxu0 %v815
    %1214 = vmatpush.bf16.msra.mxu0 %v814
    %1215 = vmatpush.bf16.msra.mxu0 %v813
    %1216 = vmatmul.bf16.gmra.mxu0 %v1141
    %v1217 = vpop.f32.mrf.mxu0
    %v1218 = vadd.f32 %v612, %v1217
    %v1219 = vpop.f32.mrf.mxu0
    %1220 = vdwg.mxu0
    %v1221 = vmul.f32 %v1187, %v1218
    %v1222 = vadd.f32 %v1140, %v1221
    %v1223 = vtanh.pop %v1222
    %v1224 = vsub.f32 1.0, %v1207
    %v1225 = vmul.f32 %v1224, %v1223
    %v1226 = vmul.f32 %v1207, %v1132
    %v1227 = vadd.f32 %v1225, %v1226
    %s1228 = scalar_lea.vmem [#allocation2], 32
    %1229 = vst [vmem:[%s1228] sm:$0xff] %v1227
    %s1230 = scalar_lea.vmem [#allocation3], 40
    %v1231 = vld [vmem:[%s1230] sm:$0xff]
    %s1232 = scalar_lea.vmem [#allocation4], 40
    %v1233 = vld [vmem:[%s1232] sm:$0xff]
    %s1234 = scalar_lea.vmem [#allocation5], 40
    %v1235 = vld [vmem:[%s1234] sm:$0xff]
    %v1236 = vpack.c.bf16 %v1227, %v1227
    %1237 = vmatpush.bf16.msra.mxu0 %v658
    %1238 = vmatpush.bf16.msra.mxu0 %v657
    %1239 = vmatpush.bf16.msra.mxu0 %v656
    %1240 = vmatpush.bf16.msra.mxu0 %v655
    %1241 = vmatpush.bf16.msra.mxu0 %v654
    %1242 = vmatpush.bf16.msra.mxu0 %v653
    %1243 = vmatpush.bf16.msra.mxu0 %v652
    %1244 = vmatpush.bf16.msra.mxu0 %v651
    %1245 = vmatmul.bf16.gmra.mxu0 %v1236
    %v1246 = vpop.f32.mrf.mxu0
    %v1247 = vadd.f32 0.0, %v1246
    %v1248 = vpop.f32.mrf.mxu0
    %1249 = vdwg.mxu0
    %1250 = vmatpush.bf16.msra.mxu0 %v719
    %1251 = vmatpush.bf16.msra.mxu0 %v718
    %1252 = vmatpush.bf16.msra.mxu0 %v717
    %1253 = vmatpush.bf16.msra.mxu0 %v716
    %1254 = vmatpush.bf16.msra.mxu0 %v715
    %1255 = vmatpush.bf16.msra.mxu0 %v714
    %1256 = vmatpush.bf16.msra.mxu0 %v713
    %1257 = vmatpush.bf16.msra.mxu0 %v712
    %1258 = vmatmul.bf16.gmra.mxu0 %v1236
    %v1259 = vpop.f32.mrf.mxu0
    %v1260 = vadd.f32 0.0, %v1259
    %v1261 = vpop.f32.mrf.mxu0
    %1262 = vdwg.mxu0
    %v1263 = vadd.f32 %v1231, %v1247
    %v1264 = vxor.u32 %v1263, 2147483648
    %v1265 = vmul.f32 %v1264, 1.442695
    %v1266 = vpow.pop %v1265
    %v1267 = vadd.f32 %v1266, 1.0
    %v1268 = vrcp.pop %v1267
    %v1269 = vmul.f32 %v1267, %v1268
    %v1270 = vsub.f32 1.0, %v1269
    %v1271 = vmul.f32 %v1268, %v1270
    %v1272 = vadd.f32 %v1268, %v1271
    %vm1273 = vweird.f32 %v1267
    %vm1274 = vweird.f32 %v1268
    %vm1275 = vmor %vm1273, %vm1274
    %v1276 = vsel %vm1275, %v1268, %v1272
    %v1277 = vand.u32 2147483647, %v1267
    %vm1278 = vcmp.eq.f32.partialorder %v1277, 8.507059e+37
    %v1279 = vand.u32 %v1267, 2147483648
    %v1280 = vor.u32 1.1754944e-38, %v1279
    %v1281 = vsel %vm1278, %v1280, %v1276
    %v1282 = vmul.f32 1.0, %v1281
    %v1283 = vadd.f32 %v1233, %v1260
    %v1284 = vxor.u32 %v1283, 2147483648
    %v1285 = vmul.f32 %v1284, 1.442695
    %v1286 = vpow.pop %v1285
    %v1287 = vadd.f32 %v1286, 1.0
    %v1288 = vrcp.pop %v1287
    %v1289 = vmul.f32 %v1287, %v1288
    %v1290 = vsub.f32 1.0, %v1289
    %v1291 = vmul.f32 %v1288, %v1290
    %v1292 = vadd.f32 %v1288, %v1291
    %vm1293 = vweird.f32 %v1287
    %vm1294 = vweird.f32 %v1288
    %vm1295 = vmor %vm1293, %vm1294
    %v1296 = vsel %vm1295, %v1288, %v1292
    %v1297 = vand.u32 2147483647, %v1287
    %vm1298 = vcmp.eq.f32.partialorder %v1297, 8.507059e+37
    %v1299 = vand.u32 %v1287, 2147483648
    %v1300 = vor.u32 1.1754944e-38, %v1299
    %v1301 = vsel %vm1298, %v1300, %v1296
    %v1302 = vmul.f32 1.0, %v1301
    %1303 = vmatpush.bf16.msra.mxu0 %v820
    %1304 = vmatpush.bf16.msra.mxu0 %v819
    %1305 = vmatpush.bf16.msra.mxu0 %v818
    %1306 = vmatpush.bf16.msra.mxu0 %v817
    %1307 = vmatpush.bf16.msra.mxu0 %v816
    %1308 = vmatpush.bf16.msra.mxu0 %v815
    %1309 = vmatpush.bf16.msra.mxu0 %v814
    %1310 = vmatpush.bf16.msra.mxu0 %v813
    %1311 = vmatmul.bf16.gmra.mxu0 %v1236
    %v1312 = vpop.f32.mrf.mxu0
    %v1313 = vadd.f32 %v612, %v1312
    %v1314 = vpop.f32.mrf.mxu0
    %1315 = vdwg.mxu0
    %v1316 = vmul.f32 %v1282, %v1313
    %v1317 = vadd.f32 %v1235, %v1316
    %v1318 = vtanh.pop %v1317
    %v1319 = vsub.f32 1.0, %v1302
    %v1320 = vmul.f32 %v1319, %v1318
    %v1321 = vmul.f32 %v1302, %v1227
    %v1322 = vadd.f32 %v1320, %v1321
    %s1323 = scalar_lea.vmem [#allocation2], 40
    %1324 = vst [vmem:[%s1323] sm:$0xff] %v1322
    %s1325 = scalar_lea.vmem [#allocation3], 48
    %v1326 = vld [vmem:[%s1325] sm:$0xff]
    %s1327 = scalar_lea.vmem [#allocation4], 48
    %v1328 = vld [vmem:[%s1327] sm:$0xff]
    %s1329 = scalar_lea.vmem [#allocation5], 48
    %v1330 = vld [vmem:[%s1329] sm:$0xff]
    %v1331 = vpack.c.bf16 %v1322, %v1322
    %1332 = vmatpush.bf16.msra.mxu0 %v658
    %1333 = vmatpush.bf16.msra.mxu0 %v657
    %1334 = vmatpush.bf16.msra.mxu0 %v656
    %1335 = vmatpush.bf16.msra.mxu0 %v655
    %1336 = vmatpush.bf16.msra.mxu0 %v654
    %1337 = vmatpush.bf16.msra.mxu0 %v653
    %1338 = vmatpush.bf16.msra.mxu0 %v652
    %1339 = vmatpush.bf16.msra.mxu0 %v651
    %1340 = vmatmul.bf16.gmra.mxu0 %v1331
    %v1341 = vpop.f32.mrf.mxu0
    %v1342 = vadd.f32 0.0, %v1341
    %v1343 = vpop.f32.mrf.mxu0
    %1344 = vdwg.mxu0
    %1345 = vmatpush.bf16.msra.mxu0 %v719
    %1346 = vmatpush.bf16.msra.mxu0 %v718
    %1347 = vmatpush.bf16.msra.mxu0 %v717
    %1348 = vmatpush.bf16.msra.mxu0 %v716
    %1349 = vmatpush.bf16.msra.mxu0 %v715
    %1350 = vmatpush.bf16.msra.mxu0 %v714
    %1351 = vmatpush.bf16.msra.mxu0 %v713
    %1352 = vmatpush.bf16.msra.mxu0 %v712
    %1353 = vmatmul.bf16.gmra.mxu0 %v1331
    %v1354 = vpop.f32.mrf.mxu0
    %v1355 = vadd.f32 0.0, %v1354
    %v1356 = vpop.f32.mrf.mxu0
    %1357 = vdwg.mxu0
    %v1358 = vadd.f32 %v1326, %v1342
    %v1359 = vxor.u32 %v1358, 2147483648
    %v1360 = vmul.f32 %v1359, 1.442695
    %v1361 = vpow.pop %v1360
    %v1362 = vadd.f32 %v1361, 1.0
    %v1363 = vrcp.pop %v1362
    %v1364 = vmul.f32 %v1362, %v1363
    %v1365 = vsub.f32 1.0, %v1364
    %v1366 = vmul.f32 %v1363, %v1365
    %v1367 = vadd.f32 %v1363, %v1366
    %vm1368 = vweird.f32 %v1362
    %vm1369 = vweird.f32 %v1363
    %vm1370 = vmor %vm1368, %vm1369
    %v1371 = vsel %vm1370, %v1363, %v1367
    %v1372 = vand.u32 2147483647, %v1362
    %vm1373 = vcmp.eq.f32.partialorder %v1372, 8.507059e+37
    %v1374 = vand.u32 %v1362, 2147483648
    %v1375 = vor.u32 1.1754944e-38, %v1374
    %v1376 = vsel %vm1373, %v1375, %v1371
    %v1377 = vmul.f32 1.0, %v1376
    %v1378 = vadd.f32 %v1328, %v1355
    %v1379 = vxor.u32 %v1378, 2147483648
    %v1380 = vmul.f32 %v1379, 1.442695
    %v1381 = vpow.pop %v1380
    %v1382 = vadd.f32 %v1381, 1.0
    %v1383 = vrcp.pop %v1382
    %v1384 = vmul.f32 %v1382, %v1383
    %v1385 = vsub.f32 1.0, %v1384
    %v1386 = vmul.f32 %v1383, %v1385
    %v1387 = vadd.f32 %v1383, %v1386
    %vm1388 = vweird.f32 %v1382
    %vm1389 = vweird.f32 %v1383
    %vm1390 = vmor %vm1388, %vm1389
    %v1391 = vsel %vm1390, %v1383, %v1387
    %v1392 = vand.u32 2147483647, %v1382
    %vm1393 = vcmp.eq.f32.partialorder %v1392, 8.507059e+37
    %v1394 = vand.u32 %v1382, 2147483648
    %v1395 = vor.u32 1.1754944e-38, %v1394
    %v1396 = vsel %vm1393, %v1395, %v1391
    %v1397 = vmul.f32 1.0, %v1396
    %1398 = vmatpush.bf16.msra.mxu0 %v820
    %1399 = vmatpush.bf16.msra.mxu0 %v819
    %1400 = vmatpush.bf16.msra.mxu0 %v818
    %1401 = vmatpush.bf16.msra.mxu0 %v817
    %1402 = vmatpush.bf16.msra.mxu0 %v816
    %1403 = vmatpush.bf16.msra.mxu0 %v815
    %1404 = vmatpush.bf16.msra.mxu0 %v814
    %1405 = vmatpush.bf16.msra.mxu0 %v813
    %1406 = vmatmul.bf16.gmra.mxu0 %v1331
    %v1407 = vpop.f32.mrf.mxu0
    %v1408 = vadd.f32 %v612, %v1407
    %v1409 = vpop.f32.mrf.mxu0
    %1410 = vdwg.mxu0
    %v1411 = vmul.f32 %v1377, %v1408
    %v1412 = vadd.f32 %v1330, %v1411
    %v1413 = vtanh.pop %v1412
    %v1414 = vsub.f32 1.0, %v1397
    %v1415 = vmul.f32 %v1414, %v1413
    %v1416 = vmul.f32 %v1397, %v1322
    %v1417 = vadd.f32 %v1415, %v1416
    %s1418 = scalar_lea.vmem [#allocation2], 48
    %1419 = vst [vmem:[%s1418] sm:$0xff] %v1417
    %s1420 = scalar_lea.vmem [#allocation3], 56
    %v1421 = vld [vmem:[%s1420] sm:$0xff]
    %s1422 = scalar_lea.vmem [#allocation4], 56
    %v1423 = vld [vmem:[%s1422] sm:$0xff]
    %s1424 = scalar_lea.vmem [#allocation5], 56
    %v1425 = vld [vmem:[%s1424] sm:$0xff]
    %v1426 = vpack.c.bf16 %v1417, %v1417
    %1427 = vmatpush.bf16.msra.mxu0 %v658
    %1428 = vmatpush.bf16.msra.mxu0 %v657
    %1429 = vmatpush.bf16.msra.mxu0 %v656
    %1430 = vmatpush.bf16.msra.mxu0 %v655
    %1431 = vmatpush.bf16.msra.mxu0 %v654
    %1432 = vmatpush.bf16.msra.mxu0 %v653
    %1433 = vmatpush.bf16.msra.mxu0 %v652
    %1434 = vmatpush.bf16.msra.mxu0 %v651
    %1435 = vmatmul.bf16.gmra.mxu0 %v1426
    %v1436 = vpop.f32.mrf.mxu0
    %v1437 = vadd.f32 0.0, %v1436
    %v1438 = vpop.f32.mrf.mxu0
    %1439 = vdwg.mxu0
    %1440 = vmatpush.bf16.msra.mxu0 %v719
    %1441 = vmatpush.bf16.msra.mxu0 %v718
    %1442 = vmatpush.bf16.msra.mxu0 %v717
    %1443 = vmatpush.bf16.msra.mxu0 %v716
    %1444 = vmatpush.bf16.msra.mxu0 %v715
    %1445 = vmatpush.bf16.msra.mxu0 %v714
    %1446 = vmatpush.bf16.msra.mxu0 %v713
    %1447 = vmatpush.bf16.msra.mxu0 %v712
    %1448 = vmatmul.bf16.gmra.mxu0 %v1426
    %v1449 = vpop.f32.mrf.mxu0
    %v1450 = vadd.f32 0.0, %v1449
    %v1451 = vpop.f32.mrf.mxu0
    %1452 = vdwg.mxu0
    %v1453 = vadd.f32 %v1421, %v1437
    %v1454 = vxor.u32 %v1453, 2147483648
    %v1455 = vmul.f32 %v1454, 1.442695
    %v1456 = vpow.pop %v1455
    %v1457 = vadd.f32 %v1456, 1.0
    %v1458 = vrcp.pop %v1457
    %v1459 = vmul.f32 %v1457, %v1458
    %v1460 = vsub.f32 1.0, %v1459
    %v1461 = vmul.f32 %v1458, %v1460
    %v1462 = vadd.f32 %v1458, %v1461
    %vm1463 = vweird.f32 %v1457
    %vm1464 = vweird.f32 %v1458
    %vm1465 = vmor %vm1463, %vm1464
    %v1466 = vsel %vm1465, %v1458, %v1462
    %v1467 = vand.u32 2147483647, %v1457
    %vm1468 = vcmp.eq.f32.partialorder %v1467, 8.507059e+37
    %v1469 = vand.u32 %v1457, 2147483648
    %v1470 = vor.u32 1.1754944e-38, %v1469
    %v1471 = vsel %vm1468, %v1470, %v1466
    %v1472 = vmul.f32 1.0, %v1471
    %v1473 = vadd.f32 %v1423, %v1450
    %v1474 = vxor.u32 %v1473, 2147483648
    %v1475 = vmul.f32 %v1474, 1.442695
    %v1476 = vpow.pop %v1475
    %v1477 = vadd.f32 %v1476, 1.0
    %v1478 = vrcp.pop %v1477
    %v1479 = vmul.f32 %v1477, %v1478
    %v1480 = vsub.f32 1.0, %v1479
    %v1481 = vmul.f32 %v1478, %v1480
    %v1482 = vadd.f32 %v1478, %v1481
    %vm1483 = vweird.f32 %v1477
    %vm1484 = vweird.f32 %v1478
    %vm1485 = vmor %vm1483, %vm1484
    %v1486 = vsel %vm1485, %v1478, %v1482
    %v1487 = vand.u32 2147483647, %v1477
    %vm1488 = vcmp.eq.f32.partialorder %v1487, 8.507059e+37
    %v1489 = vand.u32 %v1477, 2147483648
    %v1490 = vor.u32 1.1754944e-38, %v1489
    %v1491 = vsel %vm1488, %v1490, %v1486
    %v1492 = vmul.f32 1.0, %v1491
    %1493 = vmatpush.bf16.msra.mxu0 %v820
    %1494 = vmatpush.bf16.msra.mxu0 %v819
    %1495 = vmatpush.bf16.msra.mxu0 %v818
    %1496 = vmatpush.bf16.msra.mxu0 %v817
    %1497 = vmatpush.bf16.msra.mxu0 %v816
    %1498 = vmatpush.bf16.msra.mxu0 %v815
    %1499 = vmatpush.bf16.msra.mxu0 %v814
    %1500 = vmatpush.bf16.msra.mxu0 %v813
    %1501 = vmatmul.bf16.gmra.mxu0 %v1426
    %v1502 = vpop.f32.mrf.mxu0
    %v1503 = vadd.f32 %v612, %v1502
    %v1504 = vpop.f32.mrf.mxu0
    %1505 = vdwg.mxu0
    %v1506 = vmul.f32 %v1472, %v1503
    %v1507 = vadd.f32 %v1425, %v1506
    %v1508 = vtanh.pop %v1507
    %v1509 = vsub.f32 1.0, %v1492
    %v1510 = vmul.f32 %v1509, %v1508
    %v1511 = vmul.f32 %v1492, %v1417
    %v1512 = vadd.f32 %v1510, %v1511
    %s1513 = scalar_lea.vmem [#allocation2], 56
    %1514 = vst [vmem:[%s1513] sm:$0xff] %v1512
    %1515 = vst [vmem:[#allocation21] sm:$0xff] %v1512
    %v1516 = vld [vmem:[#allocation2] sm:$0xff]
    %v1517 = vld [vmem:[#allocation2 + $0x8] sm:$0xff]
    %v1518 = vld [vmem:[#allocation2 + $0x10] sm:$0xff]
    %v1519 = vld [vmem:[#allocation2 + $0x18] sm:$0xff]
    %v1520 = vld [vmem:[#allocation2 + $0x20] sm:$0xff]
    %v1521 = vld [vmem:[#allocation2 + $0x28] sm:$0xff]
    %v1522 = vld [vmem:[#allocation2 + $0x30] sm:$0xff]
    %v1523 = vld [vmem:[#allocation2 + $0x38] sm:$0xff]
    %v1524 = vpack.c.bf16 %v1517, %v1516
    %v1525 = vpack.c.bf16 %v1519, %v1518
    %v1526 = vpack.c.bf16 %v1521, %v1520
    %v1527 = vpack.c.bf16 %v1523, %v1522
    %s1528 = scalar_lea.vmem [#allocation14], 192
    %v1529 = vld [vmem:[%s1528] sm:$0xf]
    %v1530 = vld [vmem:[%s1528 + $0x4] sm:$0xf]
    %v1531 = vld [vmem:[%s1528 + $0x8] sm:$0xf]
    %v1532 = vld [vmem:[%s1528 + $0xc] sm:$0xf]
    %v1533 = vld [vmem:[%s1528 + $0x10] sm:$0xf]
    %v1534 = vld [vmem:[%s1528 + $0x14] sm:$0xf]
    %v1535 = vld [vmem:[%s1528 + $0x18] sm:$0xf]
    %v1536 = vld [vmem:[%s1528 + $0x1c] sm:$0xf]
    %v1537 = vld [vmem:[%s1528 + $0x20] sm:$0xf]
    %v1538 = vld [vmem:[%s1528 + $0x24] sm:$0xf]
    %v1539 = vld [vmem:[%s1528 + $0x28] sm:$0xf]
    %v1540 = vld [vmem:[%s1528 + $0x2c] sm:$0xf]
    %v1541 = vld [vmem:[%s1528 + $0x30] sm:$0xf]
    %v1542 = vld [vmem:[%s1528 + $0x34] sm:$0xf]
    %v1543 = vld [vmem:[%s1528 + $0x38] sm:$0xf]
    %v1544 = vld [vmem:[%s1528 + $0x3c] sm:$0xf]
    %s1545 = scalar_lea.vmem [#allocation17], 4
    %v1546 = vld [vmem:[%s1545] sm:$0x1]
    %v1548 = vperm.slane %v1546, 0
    %v1566 = vunpack.c.l.b16 %v1529
    %v1567 = vunpack.c.l.b16 %v1530
    %v1568 = vunpack.c.l.b16 %v1531
    %v1569 = vunpack.c.l.b16 %v1532
    %v1570 = vunpack.c.l.b16 %v1533
    %v1571 = vunpack.c.l.b16 %v1534
    %v1572 = vunpack.c.l.b16 %v1535
    %v1573 = vunpack.c.l.b16 %v1536
    %v1574 = vunpack.c.l.b16 %v1537
    %v1575 = vunpack.c.l.b16 %v1538
    %v1576 = vunpack.c.l.b16 %v1539
    %v1577 = vunpack.c.l.b16 %v1540
    %v1578 = vunpack.c.l.b16 %v1541
    %v1579 = vunpack.c.l.b16 %v1542
    %v1580 = vunpack.c.l.b16 %v1543
    %v1581 = vunpack.c.l.b16 %v1544
    %v1582 = vpack.c.b16 %v1567, %v1566
    %v1583 = vpack.c.b16 %v1569, %v1568
    %v1584 = vpack.c.b16 %v1571, %v1570
    %v1585 = vpack.c.b16 %v1573, %v1572
    %v1586 = vpack.c.b16 %v1575, %v1574
    %v1587 = vpack.c.b16 %v1577, %v1576
    %v1588 = vpack.c.b16 %v1579, %v1578
    %v1589 = vpack.c.b16 %v1581, %v1580
    %1598 = vmatpush.bf16.msra.mxu0 %v1589
    %1599 = vmatpush.bf16.msra.mxu0 %v1588
    %1600 = vmatpush.bf16.msra.mxu0 %v1587
    %1601 = vmatpush.bf16.msra.mxu0 %v1586
    %1602 = vmatpush.bf16.msra.mxu0 %v1585
    %1603 = vmatpush.bf16.msra.mxu0 %v1584
    %1604 = vmatpush.bf16.msra.mxu0 %v1583
    %1605 = vmatpush.bf16.msra.mxu0 %v1582
    %1606 = vmatmul.bf16.gmra.mxu0 %v1524
    %v1607 = vpop.f32.mrf.mxu0
    %v1608 = vadd.f32 %v1548, %v1607
    %v1609 = vpop.f32.mrf.mxu0
    %v1610 = vadd.f32 %v1548, %v1609
    %1611 = vmatmul.bf16.gmra.mxu0 %v1525
    %v1612 = vpop.f32.mrf.mxu0
    %v1613 = vadd.f32 %v1548, %v1612
    %v1614 = vpop.f32.mrf.mxu0
    %v1615 = vadd.f32 %v1548, %v1614
    %1616 = vmatmul.bf16.gmra.mxu0 %v1526
    %v1617 = vpop.f32.mrf.mxu0
    %v1618 = vadd.f32 %v1548, %v1617
    %v1619 = vpop.f32.mrf.mxu0
    %v1620 = vadd.f32 %v1548, %v1619
    %1621 = vmatmul.bf16.gmra.mxu0 %v1527
    %v1622 = vpop.f32.mrf.mxu0
    %v1623 = vadd.f32 %v1548, %v1622
    %v1624 = vpop.f32.mrf.mxu0
    %v1625 = vadd.f32 %v1548, %v1624
    %1626 = vdwg.mxu0
    %1627 = vst [vmem:[#allocation3] sm:$0xff] %v1608
    %1628 = vst [vmem:[#allocation3 + $0x8] sm:$0xff] %v1610
    %1629 = vst [vmem:[#allocation3 + $0x10] sm:$0xff] %v1613
    %1630 = vst [vmem:[#allocation3 + $0x18] sm:$0xff] %v1615
    %1631 = vst [vmem:[#allocation3 + $0x20] sm:$0xff] %v1618
    %1632 = vst [vmem:[#allocation3 + $0x28] sm:$0xff] %v1620
    %1633 = vst [vmem:[#allocation3 + $0x30] sm:$0xff] %v1623
    %1634 = vst [vmem:[#allocation3 + $0x38] sm:$0xff] %v1625
    %s1635 = scalar_lea.vmem [#allocation14], 256
    %v1636 = vld [vmem:[%s1635] sm:$0xf]
    %v1637 = vld [vmem:[%s1635 + $0x4] sm:$0xf]
    %v1638 = vld [vmem:[%s1635 + $0x8] sm:$0xf]
    %v1639 = vld [vmem:[%s1635 + $0xc] sm:$0xf]
    %v1640 = vld [vmem:[%s1635 + $0x10] sm:$0xf]
    %v1641 = vld [vmem:[%s1635 + $0x14] sm:$0xf]
    %v1642 = vld [vmem:[%s1635 + $0x18] sm:$0xf]
    %v1643 = vld [vmem:[%s1635 + $0x1c] sm:$0xf]
    %v1644 = vld [vmem:[%s1635 + $0x20] sm:$0xf]
    %v1645 = vld [vmem:[%s1635 + $0x24] sm:$0xf]
    %v1646 = vld [vmem:[%s1635 + $0x28] sm:$0xf]
    %v1647 = vld [vmem:[%s1635 + $0x2c] sm:$0xf]
    %v1648 = vld [vmem:[%s1635 + $0x30] sm:$0xf]
    %v1649 = vld [vmem:[%s1635 + $0x34] sm:$0xf]
    %v1650 = vld [vmem:[%s1635 + $0x38] sm:$0xf]
    %v1651 = vld [vmem:[%s1635 + $0x3c] sm:$0xf]
    %s1652 = scalar_lea.vmem [#allocation17], 5
    %v1653 = vld [vmem:[%s1652] sm:$0x1]
    %v1655 = vperm.slane %v1653, 0
    %v1673 = vunpack.c.l.b16 %v1636
    %v1674 = vunpack.c.l.b16 %v1637
    %v1675 = vunpack.c.l.b16 %v1638
    %v1676 = vunpack.c.l.b16 %v1639
    %v1677 = vunpack.c.l.b16 %v1640
    %v1678 = vunpack.c.l.b16 %v1641
    %v1679 = vunpack.c.l.b16 %v1642
    %v1680 = vunpack.c.l.b16 %v1643
    %v1681 = vunpack.c.l.b16 %v1644
    %v1682 = vunpack.c.l.b16 %v1645
    %v1683 = vunpack.c.l.b16 %v1646
    %v1684 = vunpack.c.l.b16 %v1647
    %v1685 = vunpack.c.l.b16 %v1648
    %v1686 = vunpack.c.l.b16 %v1649
    %v1687 = vunpack.c.l.b16 %v1650
    %v1688 = vunpack.c.l.b16 %v1651
    %v1689 = vpack.c.b16 %v1674, %v1673
    %v1690 = vpack.c.b16 %v1676, %v1675
    %v1691 = vpack.c.b16 %v1678, %v1677
    %v1692 = vpack.c.b16 %v1680, %v1679
    %v1693 = vpack.c.b16 %v1682, %v1681
    %v1694 = vpack.c.b16 %v1684, %v1683
    %v1695 = vpack.c.b16 %v1686, %v1685
    %v1696 = vpack.c.b16 %v1688, %v1687
    %1705 = vmatpush.bf16.msra.mxu0 %v1696
    %1706 = vmatpush.bf16.msra.mxu0 %v1695
    %1707 = vmatpush.bf16.msra.mxu0 %v1694
    %1708 = vmatpush.bf16.msra.mxu0 %v1693
    %1709 = vmatpush.bf16.msra.mxu0 %v1692
    %1710 = vmatpush.bf16.msra.mxu0 %v1691
    %1711 = vmatpush.bf16.msra.mxu0 %v1690
    %1712 = vmatpush.bf16.msra.mxu0 %v1689
    %1713 = vmatmul.bf16.gmra.mxu0 %v1524
    %v1714 = vpop.f32.mrf.mxu0
    %v1715 = vadd.f32 %v1655, %v1714
    %v1716 = vpop.f32.mrf.mxu0
    %v1717 = vadd.f32 %v1655, %v1716
    %1718 = vmatmul.bf16.gmra.mxu0 %v1525
    %v1719 = vpop.f32.mrf.mxu0
    %v1720 = vadd.f32 %v1655, %v1719
    %v1721 = vpop.f32.mrf.mxu0
    %v1722 = vadd.f32 %v1655, %v1721
    %1723 = vmatmul.bf16.gmra.mxu0 %v1526
    %v1724 = vpop.f32.mrf.mxu0
    %v1725 = vadd.f32 %v1655, %v1724
    %v1726 = vpop.f32.mrf.mxu0
    %v1727 = vadd.f32 %v1655, %v1726
    %1728 = vmatmul.bf16.gmra.mxu0 %v1527
    %v1729 = vpop.f32.mrf.mxu0
    %v1730 = vadd.f32 %v1655, %v1729
    %v1731 = vpop.f32.mrf.mxu0
    %v1732 = vadd.f32 %v1655, %v1731
    %1733 = vdwg.mxu0
    %1734 = vst [vmem:[#allocation4] sm:$0xff] %v1715
    %1735 = vst [vmem:[#allocation4 + $0x8] sm:$0xff] %v1717
    %1736 = vst [vmem:[#allocation4 + $0x10] sm:$0xff] %v1720
    %1737 = vst [vmem:[#allocation4 + $0x18] sm:$0xff] %v1722
    %1738 = vst [vmem:[#allocation4 + $0x20] sm:$0xff] %v1725
    %1739 = vst [vmem:[#allocation4 + $0x28] sm:$0xff] %v1727
    %1740 = vst [vmem:[#allocation4 + $0x30] sm:$0xff] %v1730
    %1741 = vst [vmem:[#allocation4 + $0x38] sm:$0xff] %v1732
    %s1742 = scalar_lea.vmem [#allocation14], 320
    %v1743 = vld [vmem:[%s1742] sm:$0xf]
    %v1744 = vld [vmem:[%s1742 + $0x4] sm:$0xf]
    %v1745 = vld [vmem:[%s1742 + $0x8] sm:$0xf]
    %v1746 = vld [vmem:[%s1742 + $0xc] sm:$0xf]
    %v1747 = vld [vmem:[%s1742 + $0x10] sm:$0xf]
    %v1748 = vld [vmem:[%s1742 + $0x14] sm:$0xf]
    %v1749 = vld [vmem:[%s1742 + $0x18] sm:$0xf]
    %v1750 = vld [vmem:[%s1742 + $0x1c] sm:$0xf]
    %v1751 = vld [vmem:[%s1742 + $0x20] sm:$0xf]
    %v1752 = vld [vmem:[%s1742 + $0x24] sm:$0xf]
    %v1753 = vld [vmem:[%s1742 + $0x28] sm:$0xf]
    %v1754 = vld [vmem:[%s1742 + $0x2c] sm:$0xf]
    %v1755 = vld [vmem:[%s1742 + $0x30] sm:$0xf]
    %v1756 = vld [vmem:[%s1742 + $0x34] sm:$0xf]
    %v1757 = vld [vmem:[%s1742 + $0x38] sm:$0xf]
    %v1758 = vld [vmem:[%s1742 + $0x3c] sm:$0xf]
    %s1759 = scalar_lea.vmem [#allocation17], 6
    %v1760 = vld [vmem:[%s1759] sm:$0x1]
    %v1762 = vperm.slane %v1760, 0
    %v1780 = vunpack.c.l.b16 %v1743
    %v1781 = vunpack.c.l.b16 %v1744
    %v1782 = vunpack.c.l.b16 %v1745
    %v1783 = vunpack.c.l.b16 %v1746
    %v1784 = vunpack.c.l.b16 %v1747
    %v1785 = vunpack.c.l.b16 %v1748
    %v1786 = vunpack.c.l.b16 %v1749
    %v1787 = vunpack.c.l.b16 %v1750
    %v1788 = vunpack.c.l.b16 %v1751
    %v1789 = vunpack.c.l.b16 %v1752
    %v1790 = vunpack.c.l.b16 %v1753
    %v1791 = vunpack.c.l.b16 %v1754
    %v1792 = vunpack.c.l.b16 %v1755
    %v1793 = vunpack.c.l.b16 %v1756
    %v1794 = vunpack.c.l.b16 %v1757
    %v1795 = vunpack.c.l.b16 %v1758
    %v1796 = vpack.c.b16 %v1781, %v1780
    %v1797 = vpack.c.b16 %v1783, %v1782
    %v1798 = vpack.c.b16 %v1785, %v1784
    %v1799 = vpack.c.b16 %v1787, %v1786
    %v1800 = vpack.c.b16 %v1789, %v1788
    %v1801 = vpack.c.b16 %v1791, %v1790
    %v1802 = vpack.c.b16 %v1793, %v1792
    %v1803 = vpack.c.b16 %v1795, %v1794
    %1812 = vmatpush.bf16.msra.mxu0 %v1803
    %1813 = vmatpush.bf16.msra.mxu0 %v1802
    %1814 = vmatpush.bf16.msra.mxu0 %v1801
    %1815 = vmatpush.bf16.msra.mxu0 %v1800
    %1816 = vmatpush.bf16.msra.mxu0 %v1799
    %1817 = vmatpush.bf16.msra.mxu0 %v1798
    %1818 = vmatpush.bf16.msra.mxu0 %v1797
    %1819 = vmatpush.bf16.msra.mxu0 %v1796
    %1820 = vmatmul.bf16.gmra.mxu0 %v1524
    %v1821 = vpop.f32.mrf.mxu0
    %v1822 = vadd.f32 %v1762, %v1821
    %v1823 = vpop.f32.mrf.mxu0
    %v1824 = vadd.f32 %v1762, %v1823
    %1825 = vmatmul.bf16.gmra.mxu0 %v1525
    %v1826 = vpop.f32.mrf.mxu0
    %v1827 = vadd.f32 %v1762, %v1826
    %v1828 = vpop.f32.mrf.mxu0
    %v1829 = vadd.f32 %v1762, %v1828
    %1830 = vmatmul.bf16.gmra.mxu0 %v1526
    %v1831 = vpop.f32.mrf.mxu0
    %v1832 = vadd.f32 %v1762, %v1831
    %v1833 = vpop.f32.mrf.mxu0
    %v1834 = vadd.f32 %v1762, %v1833
    %1835 = vmatmul.bf16.gmra.mxu0 %v1527
    %v1836 = vpop.f32.mrf.mxu0
    %v1837 = vadd.f32 %v1762, %v1836
    %v1838 = vpop.f32.mrf.mxu0
    %v1839 = vadd.f32 %v1762, %v1838
    %1840 = vdwg.mxu0
    %1841 = vst [vmem:[#allocation5] sm:$0xff] %v1822
    %1842 = vst [vmem:[#allocation5 + $0x8] sm:$0xff] %v1824
    %1843 = vst [vmem:[#allocation5 + $0x10] sm:$0xff] %v1827
    %1844 = vst [vmem:[#allocation5 + $0x18] sm:$0xff] %v1829
    %1845 = vst [vmem:[#allocation5 + $0x20] sm:$0xff] %v1832
    %1846 = vst [vmem:[#allocation5 + $0x28] sm:$0xff] %v1834
    %1847 = vst [vmem:[#allocation5 + $0x30] sm:$0xff] %v1837
    %1848 = vst [vmem:[#allocation5 + $0x38] sm:$0xff] %v1839
    %s1849 = scalar_lea.vmem [#allocation15], 192
    %v1850 = vld [vmem:[%s1849] sm:$0xf]
    %v1851 = vld [vmem:[%s1849 + $0x4] sm:$0xf]
    %v1852 = vld [vmem:[%s1849 + $0x8] sm:$0xf]
    %v1853 = vld [vmem:[%s1849 + $0xc] sm:$0xf]
    %v1854 = vld [vmem:[%s1849 + $0x10] sm:$0xf]
    %v1855 = vld [vmem:[%s1849 + $0x14] sm:$0xf]
    %v1856 = vld [vmem:[%s1849 + $0x18] sm:$0xf]
    %v1857 = vld [vmem:[%s1849 + $0x1c] sm:$0xf]
    %v1858 = vld [vmem:[%s1849 + $0x20] sm:$0xf]
    %v1859 = vld [vmem:[%s1849 + $0x24] sm:$0xf]
    %v1860 = vld [vmem:[%s1849 + $0x28] sm:$0xf]
    %v1861 = vld [vmem:[%s1849 + $0x2c] sm:$0xf]
    %v1862 = vld [vmem:[%s1849 + $0x30] sm:$0xf]
    %v1863 = vld [vmem:[%s1849 + $0x34] sm:$0xf]
    %v1864 = vld [vmem:[%s1849 + $0x38] sm:$0xf]
    %v1865 = vld [vmem:[%s1849 + $0x3c] sm:$0xf]
    %s1866 = scalar_lea.vmem [#allocation15], 256
    %v1867 = vld [vmem:[%s1866] sm:$0xf]
    %v1868 = vld [vmem:[%s1866 + $0x4] sm:$0xf]
    %v1869 = vld [vmem:[%s1866 + $0x8] sm:$0xf]
    %v1870 = vld [vmem:[%s1866 + $0xc] sm:$0xf]
    %v1871 = vld [vmem:[%s1866 + $0x10] sm:$0xf]
    %v1872 = vld [vmem:[%s1866 + $0x14] sm:$0xf]
    %v1873 = vld [vmem:[%s1866 + $0x18] sm:$0xf]
    %v1874 = vld [vmem:[%s1866 + $0x1c] sm:$0xf]
    %v1875 = vld [vmem:[%s1866 + $0x20] sm:$0xf]
    %v1876 = vld [vmem:[%s1866 + $0x24] sm:$0xf]
    %v1877 = vld [vmem:[%s1866 + $0x28] sm:$0xf]
    %v1878 = vld [vmem:[%s1866 + $0x2c] sm:$0xf]
    %v1879 = vld [vmem:[%s1866 + $0x30] sm:$0xf]
    %v1880 = vld [vmem:[%s1866 + $0x34] sm:$0xf]
    %v1881 = vld [vmem:[%s1866 + $0x38] sm:$0xf]
    %v1882 = vld [vmem:[%s1866 + $0x3c] sm:$0xf]
    %s1883 = scalar_lea.vmem [#allocation15], 320
    %v1884 = vld [vmem:[%s1883] sm:$0xf]
    %v1885 = vld [vmem:[%s1883 + $0x4] sm:$0xf]
    %v1886 = vld [vmem:[%s1883 + $0x8] sm:$0xf]
    %v1887 = vld [vmem:[%s1883 + $0xc] sm:$0xf]
    %v1888 = vld [vmem:[%s1883 + $0x10] sm:$0xf]
    %v1889 = vld [vmem:[%s1883 + $0x14] sm:$0xf]
    %v1890 = vld [vmem:[%s1883 + $0x18] sm:$0xf]
    %v1891 = vld [vmem:[%s1883 + $0x1c] sm:$0xf]
    %v1892 = vld [vmem:[%s1883 + $0x20] sm:$0xf]
    %v1893 = vld [vmem:[%s1883 + $0x24] sm:$0xf]
    %v1894 = vld [vmem:[%s1883 + $0x28] sm:$0xf]
    %v1895 = vld [vmem:[%s1883 + $0x2c] sm:$0xf]
    %v1896 = vld [vmem:[%s1883 + $0x30] sm:$0xf]
    %v1897 = vld [vmem:[%s1883 + $0x34] sm:$0xf]
    %v1898 = vld [vmem:[%s1883 + $0x38] sm:$0xf]
    %v1899 = vld [vmem:[%s1883 + $0x3c] sm:$0xf]
    %s1900 = scalar_lea.vmem [#allocation17], 7
    %v1901 = vld [vmem:[%s1900] sm:$0x1]
    %v1903 = vperm.slane %v1901, 0
    %s1905 = scalar_lea.vmem [#allocation11], 8
    %v1906 = vld [vmem:[%s1905] sm:$0xff]
    %v1907 = vld [vmem:[#allocation3] sm:$0xff]
    %v1908 = vld [vmem:[#allocation4] sm:$0xff]
    %v1909 = vld [vmem:[#allocation5] sm:$0xff]
    %v1910 = vpack.c.bf16 %v1906, %v1906
    %v1927 = vunpack.c.l.b16 %v1850
    %v1928 = vunpack.c.l.b16 %v1851
    %v1929 = vunpack.c.l.b16 %v1852
    %v1930 = vunpack.c.l.b16 %v1853
    %v1931 = vunpack.c.l.b16 %v1854
    %v1932 = vunpack.c.l.b16 %v1855
    %v1933 = vunpack.c.l.b16 %v1856
    %v1934 = vunpack.c.l.b16 %v1857
    %v1935 = vunpack.c.l.b16 %v1858
    %v1936 = vunpack.c.l.b16 %v1859
    %v1937 = vunpack.c.l.b16 %v1860
    %v1938 = vunpack.c.l.b16 %v1861
    %v1939 = vunpack.c.l.b16 %v1862
    %v1940 = vunpack.c.l.b16 %v1863
    %v1941 = vunpack.c.l.b16 %v1864
    %v1942 = vunpack.c.l.b16 %v1865
    %v1943 = vpack.c.b16 %v1928, %v1927
    %v1944 = vpack.c.b16 %v1930, %v1929
    %v1945 = vpack.c.b16 %v1932, %v1931
    %v1946 = vpack.c.b16 %v1934, %v1933
    %v1947 = vpack.c.b16 %v1936, %v1935
    %v1948 = vpack.c.b16 %v1938, %v1937
    %v1949 = vpack.c.b16 %v1940, %v1939
    %v1950 = vpack.c.b16 %v1942, %v1941
    %1959 = vmatpush.bf16.msra.mxu0 %v1950
    %1960 = vmatpush.bf16.msra.mxu0 %v1949
    %1961 = vmatpush.bf16.msra.mxu0 %v1948
    %1962 = vmatpush.bf16.msra.mxu0 %v1947
    %1963 = vmatpush.bf16.msra.mxu0 %v1946
    %1964 = vmatpush.bf16.msra.mxu0 %v1945
    %1965 = vmatpush.bf16.msra.mxu0 %v1944
    %1966 = vmatpush.bf16.msra.mxu0 %v1943
    %1967 = vmatmul.bf16.gmra.mxu0 %v1910
    %v1968 = vpop.f32.mrf.mxu0
    %v1969 = vadd.f32 0.0, %v1968
    %v1970 = vpop.f32.mrf.mxu0
    %1971 = vdwg.mxu0
    %v1988 = vunpack.c.l.b16 %v1867
    %v1989 = vunpack.c.l.b16 %v1868
    %v1990 = vunpack.c.l.b16 %v1869
    %v1991 = vunpack.c.l.b16 %v1870
    %v1992 = vunpack.c.l.b16 %v1871
    %v1993 = vunpack.c.l.b16 %v1872
    %v1994 = vunpack.c.l.b16 %v1873
    %v1995 = vunpack.c.l.b16 %v1874
    %v1996 = vunpack.c.l.b16 %v1875
    %v1997 = vunpack.c.l.b16 %v1876
    %v1998 = vunpack.c.l.b16 %v1877
    %v1999 = vunpack.c.l.b16 %v1878
    %v2000 = vunpack.c.l.b16 %v1879
    %v2001 = vunpack.c.l.b16 %v1880
    %v2002 = vunpack.c.l.b16 %v1881
    %v2003 = vunpack.c.l.b16 %v1882
    %v2004 = vpack.c.b16 %v1989, %v1988
    %v2005 = vpack.c.b16 %v1991, %v1990
    %v2006 = vpack.c.b16 %v1993, %v1992
    %v2007 = vpack.c.b16 %v1995, %v1994
    %v2008 = vpack.c.b16 %v1997, %v1996
    %v2009 = vpack.c.b16 %v1999, %v1998
    %v2010 = vpack.c.b16 %v2001, %v2000
    %v2011 = vpack.c.b16 %v2003, %v2002
    %2020 = vmatpush.bf16.msra.mxu0 %v2011
    %2021 = vmatpush.bf16.msra.mxu0 %v2010
    %2022 = vmatpush.bf16.msra.mxu0 %v2009
    %2023 = vmatpush.bf16.msra.mxu0 %v2008
    %2024 = vmatpush.bf16.msra.mxu0 %v2007
    %2025 = vmatpush.bf16.msra.mxu0 %v2006
    %2026 = vmatpush.bf16.msra.mxu0 %v2005
    %2027 = vmatpush.bf16.msra.mxu0 %v2004
    %2028 = vmatmul.bf16.gmra.mxu0 %v1910
    %v2029 = vpop.f32.mrf.mxu0
    %v2030 = vadd.f32 0.0, %v2029
    %v2031 = vpop.f32.mrf.mxu0
    %2032 = vdwg.mxu0
    %v2033 = vadd.f32 %v1907, %v1969
    %v2034 = vxor.u32 %v2033, 2147483648
    %v2035 = vmul.f32 %v2034, 1.442695
    %v2036 = vpow.pop %v2035
    %v2037 = vadd.f32 %v2036, 1.0
    %v2038 = vrcp.pop %v2037
    %v2039 = vmul.f32 %v2037, %v2038
    %v2040 = vsub.f32 1.0, %v2039
    %v2041 = vmul.f32 %v2038, %v2040
    %v2042 = vadd.f32 %v2038, %v2041
    %vm2043 = vweird.f32 %v2037
    %vm2044 = vweird.f32 %v2038
    %vm2045 = vmor %vm2043, %vm2044
    %v2046 = vsel %vm2045, %v2038, %v2042
    %v2047 = vand.u32 2147483647, %v2037
    %vm2048 = vcmp.eq.f32.partialorder %v2047, 8.507059e+37
    %v2049 = vand.u32 %v2037, 2147483648
    %v2050 = vor.u32 1.1754944e-38, %v2049
    %v2051 = vsel %vm2048, %v2050, %v2046
    %v2052 = vmul.f32 1.0, %v2051
    %v2053 = vadd.f32 %v1908, %v2030
    %v2054 = vxor.u32 %v2053, 2147483648
    %v2055 = vmul.f32 %v2054, 1.442695
    %v2056 = vpow.pop %v2055
    %v2057 = vadd.f32 %v2056, 1.0
    %v2058 = vrcp.pop %v2057
    %v2059 = vmul.f32 %v2057, %v2058
    %v2060 = vsub.f32 1.0, %v2059
    %v2061 = vmul.f32 %v2058, %v2060
    %v2062 = vadd.f32 %v2058, %v2061
    %vm2063 = vweird.f32 %v2057
    %vm2064 = vweird.f32 %v2058
    %vm2065 = vmor %vm2063, %vm2064
    %v2066 = vsel %vm2065, %v2058, %v2062
    %v2067 = vand.u32 2147483647, %v2057
    %vm2068 = vcmp.eq.f32.partialorder %v2067, 8.507059e+37
    %v2069 = vand.u32 %v2057, 2147483648
    %v2070 = vor.u32 1.1754944e-38, %v2069
    %v2071 = vsel %vm2068, %v2070, %v2066
    %v2072 = vmul.f32 1.0, %v2071
    %v2089 = vunpack.c.l.b16 %v1884
    %v2090 = vunpack.c.l.b16 %v1885
    %v2091 = vunpack.c.l.b16 %v1886
    %v2092 = vunpack.c.l.b16 %v1887
    %v2093 = vunpack.c.l.b16 %v1888
    %v2094 = vunpack.c.l.b16 %v1889
    %v2095 = vunpack.c.l.b16 %v1890
    %v2096 = vunpack.c.l.b16 %v1891
    %v2097 = vunpack.c.l.b16 %v1892
    %v2098 = vunpack.c.l.b16 %v1893
    %v2099 = vunpack.c.l.b16 %v1894
    %v2100 = vunpack.c.l.b16 %v1895
    %v2101 = vunpack.c.l.b16 %v1896
    %v2102 = vunpack.c.l.b16 %v1897
    %v2103 = vunpack.c.l.b16 %v1898
    %v2104 = vunpack.c.l.b16 %v1899
    %v2105 = vpack.c.b16 %v2090, %v2089
    %v2106 = vpack.c.b16 %v2092, %v2091
    %v2107 = vpack.c.b16 %v2094, %v2093
    %v2108 = vpack.c.b16 %v2096, %v2095
    %v2109 = vpack.c.b16 %v2098, %v2097
    %v2110 = vpack.c.b16 %v2100, %v2099
    %v2111 = vpack.c.b16 %v2102, %v2101
    %v2112 = vpack.c.b16 %v2104, %v2103
    %2121 = vmatpush.bf16.msra.mxu0 %v2112
    %2122 = vmatpush.bf16.msra.mxu0 %v2111
    %2123 = vmatpush.bf16.msra.mxu0 %v2110
    %2124 = vmatpush.bf16.msra.mxu0 %v2109
    %2125 = vmatpush.bf16.msra.mxu0 %v2108
    %2126 = vmatpush.bf16.msra.mxu0 %v2107
    %2127 = vmatpush.bf16.msra.mxu0 %v2106
    %2128 = vmatpush.bf16.msra.mxu0 %v2105
    %2129 = vmatmul.bf16.gmra.mxu0 %v1910
    %v2130 = vpop.f32.mrf.mxu0
    %v2131 = vadd.f32 %v1903, %v2130
    %v2132 = vpop.f32.mrf.mxu0
    %2133 = vdwg.mxu0
    %v2134 = vmul.f32 %v2052, %v2131
    %v2135 = vadd.f32 %v1909, %v2134
    %v2136 = vtanh.pop %v2135
    %v2137 = vsub.f32 1.0, %v2072
    %v2138 = vmul.f32 %v2137, %v2136
    %v2139 = vmul.f32 %v2072, %v1906
    %v2140 = vadd.f32 %v2138, %v2139
    %2141 = vst [vmem:[#allocation2] sm:$0xff] %v2140
    %v2142 = vld [vmem:[%s850] sm:$0xff]
    %v2143 = vld [vmem:[%s852] sm:$0xff]
    %v2144 = vld [vmem:[%s854] sm:$0xff]
    %v2145 = vpack.c.bf16 %v2140, %v2140
    %2146 = vmatpush.bf16.msra.mxu0 %v1950
    %2147 = vmatpush.bf16.msra.mxu0 %v1949
    %2148 = vmatpush.bf16.msra.mxu0 %v1948
    %2149 = vmatpush.bf16.msra.mxu0 %v1947
    %2150 = vmatpush.bf16.msra.mxu0 %v1946
    %2151 = vmatpush.bf16.msra.mxu0 %v1945
    %2152 = vmatpush.bf16.msra.mxu0 %v1944
    %2153 = vmatpush.bf16.msra.mxu0 %v1943
    %2154 = vmatmul.bf16.gmra.mxu0 %v2145
    %v2155 = vpop.f32.mrf.mxu0
    %v2156 = vadd.f32 0.0, %v2155
    %v2157 = vpop.f32.mrf.mxu0
    %2158 = vdwg.mxu0
    %2159 = vmatpush.bf16.msra.mxu0 %v2011
    %2160 = vmatpush.bf16.msra.mxu0 %v2010
    %2161 = vmatpush.bf16.msra.mxu0 %v2009
    %2162 = vmatpush.bf16.msra.mxu0 %v2008
    %2163 = vmatpush.bf16.msra.mxu0 %v2007
    %2164 = vmatpush.bf16.msra.mxu0 %v2006
    %2165 = vmatpush.bf16.msra.mxu0 %v2005
    %2166 = vmatpush.bf16.msra.mxu0 %v2004
    %2167 = vmatmul.bf16.gmra.mxu0 %v2145
    %v2168 = vpop.f32.mrf.mxu0
    %v2169 = vadd.f32 0.0, %v2168
    %v2170 = vpop.f32.mrf.mxu0
    %2171 = vdwg.mxu0
    %v2172 = vadd.f32 %v2142, %v2156
    %v2173 = vxor.u32 %v2172, 2147483648
    %v2174 = vmul.f32 %v2173, 1.442695
    %v2175 = vpow.pop %v2174
    %v2176 = vadd.f32 %v2175, 1.0
    %v2177 = vrcp.pop %v2176
    %v2178 = vmul.f32 %v2176, %v2177
    %v2179 = vsub.f32 1.0, %v2178
    %v2180 = vmul.f32 %v2177, %v2179
    %v2181 = vadd.f32 %v2177, %v2180
    %vm2182 = vweird.f32 %v2176
    %vm2183 = vweird.f32 %v2177
    %vm2184 = vmor %vm2182, %vm2183
    %v2185 = vsel %vm2184, %v2177, %v2181
    %v2186 = vand.u32 2147483647, %v2176
    %vm2187 = vcmp.eq.f32.partialorder %v2186, 8.507059e+37
    %v2188 = vand.u32 %v2176, 2147483648
    %v2189 = vor.u32 1.1754944e-38, %v2188
    %v2190 = vsel %vm2187, %v2189, %v2185
    %v2191 = vmul.f32 1.0, %v2190
    %v2192 = vadd.f32 %v2143, %v2169
    %v2193 = vxor.u32 %v2192, 2147483648
    %v2194 = vmul.f32 %v2193, 1.442695
    %v2195 = vpow.pop %v2194
    %v2196 = vadd.f32 %v2195, 1.0
    %v2197 = vrcp.pop %v2196
    %v2198 = vmul.f32 %v2196, %v2197
    %v2199 = vsub.f32 1.0, %v2198
    %v2200 = vmul.f32 %v2197, %v2199
    %v2201 = vadd.f32 %v2197, %v2200
    %vm2202 = vweird.f32 %v2196
    %vm2203 = vweird.f32 %v2197
    %vm2204 = vmor %vm2202, %vm2203
    %v2205 = vsel %vm2204, %v2197, %v2201
    %v2206 = vand.u32 2147483647, %v2196
    %vm2207 = vcmp.eq.f32.partialorder %v2206, 8.507059e+37
    %v2208 = vand.u32 %v2196, 2147483648
    %v2209 = vor.u32 1.1754944e-38, %v2208
    %v2210 = vsel %vm2207, %v2209, %v2205
    %v2211 = vmul.f32 1.0, %v2210
    %2212 = vmatpush.bf16.msra.mxu0 %v2112
    %2213 = vmatpush.bf16.msra.mxu0 %v2111
    %2214 = vmatpush.bf16.msra.mxu0 %v2110
    %2215 = vmatpush.bf16.msra.mxu0 %v2109
    %2216 = vmatpush.bf16.msra.mxu0 %v2108
    %2217 = vmatpush.bf16.msra.mxu0 %v2107
    %2218 = vmatpush.bf16.msra.mxu0 %v2106
    %2219 = vmatpush.bf16.msra.mxu0 %v2105
    %2220 = vmatmul.bf16.gmra.mxu0 %v2145
    %v2221 = vpop.f32.mrf.mxu0
    %v2222 = vadd.f32 %v1903, %v2221
    %v2223 = vpop.f32.mrf.mxu0
    %2224 = vdwg.mxu0
    %v2225 = vmul.f32 %v2191, %v2222
    %v2226 = vadd.f32 %v2144, %v2225
    %v2227 = vtanh.pop %v2226
    %v2228 = vsub.f32 1.0, %v2211
    %v2229 = vmul.f32 %v2228, %v2227
    %v2230 = vmul.f32 %v2211, %v2140
    %v2231 = vadd.f32 %v2229, %v2230
    %2232 = vst [vmem:[%s943] sm:$0xff] %v2231
    %v2233 = vld [vmem:[%s945] sm:$0xff]
    %v2234 = vld [vmem:[%s947] sm:$0xff]
    %v2235 = vld [vmem:[%s949] sm:$0xff]
    %v2236 = vpack.c.bf16 %v2231, %v2231
    %2237 = vmatpush.bf16.msra.mxu0 %v1950
    %2238 = vmatpush.bf16.msra.mxu0 %v1949
    %2239 = vmatpush.bf16.msra.mxu0 %v1948
    %2240 = vmatpush.bf16.msra.mxu0 %v1947
    %2241 = vmatpush.bf16.msra.mxu0 %v1946
    %2242 = vmatpush.bf16.msra.mxu0 %v1945
    %2243 = vmatpush.bf16.msra.mxu0 %v1944
    %2244 = vmatpush.bf16.msra.mxu0 %v1943
    %2245 = vmatmul.bf16.gmra.mxu0 %v2236
    %v2246 = vpop.f32.mrf.mxu0
    %v2247 = vadd.f32 0.0, %v2246
    %v2248 = vpop.f32.mrf.mxu0
    %2249 = vdwg.mxu0
    %2250 = vmatpush.bf16.msra.mxu0 %v2011
    %2251 = vmatpush.bf16.msra.mxu0 %v2010
    %2252 = vmatpush.bf16.msra.mxu0 %v2009
    %2253 = vmatpush.bf16.msra.mxu0 %v2008
    %2254 = vmatpush.bf16.msra.mxu0 %v2007
    %2255 = vmatpush.bf16.msra.mxu0 %v2006
    %2256 = vmatpush.bf16.msra.mxu0 %v2005
    %2257 = vmatpush.bf16.msra.mxu0 %v2004
    %2258 = vmatmul.bf16.gmra.mxu0 %v2236
    %v2259 = vpop.f32.mrf.mxu0
    %v2260 = vadd.f32 0.0, %v2259
    %v2261 = vpop.f32.mrf.mxu0
    %2262 = vdwg.mxu0
    %v2263 = vadd.f32 %v2233, %v2247
    %v2264 = vxor.u32 %v2263, 2147483648
    %v2265 = vmul.f32 %v2264, 1.442695
    %v2266 = vpow.pop %v2265
    %v2267 = vadd.f32 %v2266, 1.0
    %v2268 = vrcp.pop %v2267
    %v2269 = vmul.f32 %v2267, %v2268
    %v2270 = vsub.f32 1.0, %v2269
    %v2271 = vmul.f32 %v2268, %v2270
    %v2272 = vadd.f32 %v2268, %v2271
    %vm2273 = vweird.f32 %v2267
    %vm2274 = vweird.f32 %v2268
    %vm2275 = vmor %vm2273, %vm2274
    %v2276 = vsel %vm2275, %v2268, %v2272
    %v2277 = vand.u32 2147483647, %v2267
    %vm2278 = vcmp.eq.f32.partialorder %v2277, 8.507059e+37
    %v2279 = vand.u32 %v2267, 2147483648
    %v2280 = vor.u32 1.1754944e-38, %v2279
    %v2281 = vsel %vm2278, %v2280, %v2276
    %v2282 = vmul.f32 1.0, %v2281
    %v2283 = vadd.f32 %v2234, %v2260
    %v2284 = vxor.u32 %v2283, 2147483648
    %v2285 = vmul.f32 %v2284, 1.442695
    %v2286 = vpow.pop %v2285
    %v2287 = vadd.f32 %v2286, 1.0
    %v2288 = vrcp.pop %v2287
    %v2289 = vmul.f32 %v2287, %v2288
    %v2290 = vsub.f32 1.0, %v2289
    %v2291 = vmul.f32 %v2288, %v2290
    %v2292 = vadd.f32 %v2288, %v2291
    %vm2293 = vweird.f32 %v2287
    %vm2294 = vweird.f32 %v2288
    %vm2295 = vmor %vm2293, %vm2294
    %v2296 = vsel %vm2295, %v2288, %v2292
    %v2297 = vand.u32 2147483647, %v2287
    %vm2298 = vcmp.eq.f32.partialorder %v2297, 8.507059e+37
    %v2299 = vand.u32 %v2287, 2147483648
    %v2300 = vor.u32 1.1754944e-38, %v2299
    %v2301 = vsel %vm2298, %v2300, %v2296
    %v2302 = vmul.f32 1.0, %v2301
    %2303 = vmatpush.bf16.msra.mxu0 %v2112
    %2304 = vmatpush.bf16.msra.mxu0 %v2111
    %2305 = vmatpush.bf16.msra.mxu0 %v2110
    %2306 = vmatpush.bf16.msra.mxu0 %v2109
    %2307 = vmatpush.bf16.msra.mxu0 %v2108
    %2308 = vmatpush.bf16.msra.mxu0 %v2107
    %2309 = vmatpush.bf16.msra.mxu0 %v2106
    %2310 = vmatpush.bf16.msra.mxu0 %v2105
    %2311 = vmatmul.bf16.gmra.mxu0 %v2236
    %v2312 = vpop.f32.mrf.mxu0
    %v2313 = vadd.f32 %v1903, %v2312
    %v2314 = vpop.f32.mrf.mxu0
    %2315 = vdwg.mxu0
    %v2316 = vmul.f32 %v2282, %v2313
    %v2317 = vadd.f32 %v2235, %v2316
    %v2318 = vtanh.pop %v2317
    %v2319 = vsub.f32 1.0, %v2302
    %v2320 = vmul.f32 %v2319, %v2318
    %v2321 = vmul.f32 %v2302, %v2231
    %v2322 = vadd.f32 %v2320, %v2321
    %2323 = vst [vmem:[%s1038] sm:$0xff] %v2322
    %v2324 = vld [vmem:[%s1040] sm:$0xff]
    %v2325 = vld [vmem:[%s1042] sm:$0xff]
    %v2326 = vld [vmem:[%s1044] sm:$0xff]
    %v2327 = vpack.c.bf16 %v2322, %v2322
    %2328 = vmatpush.bf16.msra.mxu0 %v1950
    %2329 = vmatpush.bf16.msra.mxu0 %v1949
    %2330 = vmatpush.bf16.msra.mxu0 %v1948
    %2331 = vmatpush.bf16.msra.mxu0 %v1947
    %2332 = vmatpush.bf16.msra.mxu0 %v1946
    %2333 = vmatpush.bf16.msra.mxu0 %v1945
    %2334 = vmatpush.bf16.msra.mxu0 %v1944
    %2335 = vmatpush.bf16.msra.mxu0 %v1943
    %2336 = vmatmul.bf16.gmra.mxu0 %v2327
    %v2337 = vpop.f32.mrf.mxu0
    %v2338 = vadd.f32 0.0, %v2337
    %v2339 = vpop.f32.mrf.mxu0
    %2340 = vdwg.mxu0
    %2341 = vmatpush.bf16.msra.mxu0 %v2011
    %2342 = vmatpush.bf16.msra.mxu0 %v2010
    %2343 = vmatpush.bf16.msra.mxu0 %v2009
    %2344 = vmatpush.bf16.msra.mxu0 %v2008
    %2345 = vmatpush.bf16.msra.mxu0 %v2007
    %2346 = vmatpush.bf16.msra.mxu0 %v2006
    %2347 = vmatpush.bf16.msra.mxu0 %v2005
    %2348 = vmatpush.bf16.msra.mxu0 %v2004
    %2349 = vmatmul.bf16.gmra.mxu0 %v2327
    %v2350 = vpop.f32.mrf.mxu0
    %v2351 = vadd.f32 0.0, %v2350
    %v2352 = vpop.f32.mrf.mxu0
    %2353 = vdwg.mxu0
    %v2354 = vadd.f32 %v2324, %v2338
    %v2355 = vxor.u32 %v2354, 2147483648
    %v2356 = vmul.f32 %v2355, 1.442695
    %v2357 = vpow.pop %v2356
    %v2358 = vadd.f32 %v2357, 1.0
    %v2359 = vrcp.pop %v2358
    %v2360 = vmul.f32 %v2358, %v2359
    %v2361 = vsub.f32 1.0, %v2360
    %v2362 = vmul.f32 %v2359, %v2361
    %v2363 = vadd.f32 %v2359, %v2362
    %vm2364 = vweird.f32 %v2358
    %vm2365 = vweird.f32 %v2359
    %vm2366 = vmor %vm2364, %vm2365
    %v2367 = vsel %vm2366, %v2359, %v2363
    %v2368 = vand.u32 2147483647, %v2358
    %vm2369 = vcmp.eq.f32.partialorder %v2368, 8.507059e+37
    %v2370 = vand.u32 %v2358, 2147483648
    %v2371 = vor.u32 1.1754944e-38, %v2370
    %v2372 = vsel %vm2369, %v2371, %v2367
    %v2373 = vmul.f32 1.0, %v2372
    %v2374 = vadd.f32 %v2325, %v2351
    %v2375 = vxor.u32 %v2374, 2147483648
    %v2376 = vmul.f32 %v2375, 1.442695
    %v2377 = vpow.pop %v2376
    %v2378 = vadd.f32 %v2377, 1.0
    %v2379 = vrcp.pop %v2378
    %v2380 = vmul.f32 %v2378, %v2379
    %v2381 = vsub.f32 1.0, %v2380
    %v2382 = vmul.f32 %v2379, %v2381
    %v2383 = vadd.f32 %v2379, %v2382
    %vm2384 = vweird.f32 %v2378
    %vm2385 = vweird.f32 %v2379
    %vm2386 = vmor %vm2384, %vm2385
    %v2387 = vsel %vm2386, %v2379, %v2383
    %v2388 = vand.u32 2147483647, %v2378
    %vm2389 = vcmp.eq.f32.partialorder %v2388, 8.507059e+37
    %v2390 = vand.u32 %v2378, 2147483648
    %v2391 = vor.u32 1.1754944e-38, %v2390
    %v2392 = vsel %vm2389, %v2391, %v2387
    %v2393 = vmul.f32 1.0, %v2392
    %2394 = vmatpush.bf16.msra.mxu0 %v2112
    %2395 = vmatpush.bf16.msra.mxu0 %v2111
    %2396 = vmatpush.bf16.msra.mxu0 %v2110
    %2397 = vmatpush.bf16.msra.mxu0 %v2109
    %2398 = vmatpush.bf16.msra.mxu0 %v2108
    %2399 = vmatpush.bf16.msra.mxu0 %v2107
    %2400 = vmatpush.bf16.msra.mxu0 %v2106
    %2401 = vmatpush.bf16.msra.mxu0 %v2105
    %2402 = vmatmul.bf16.gmra.mxu0 %v2327
    %v2403 = vpop.f32.mrf.mxu0
    %v2404 = vadd.f32 %v1903, %v2403
    %v2405 = vpop.f32.mrf.mxu0
    %2406 = vdwg.mxu0
    %v2407 = vmul.f32 %v2373, %v2404
    %v2408 = vadd.f32 %v2326, %v2407
    %v2409 = vtanh.pop %v2408
    %v2410 = vsub.f32 1.0, %v2393
    %v2411 = vmul.f32 %v2410, %v2409
    %v2412 = vmul.f32 %v2393, %v2322
    %v2413 = vadd.f32 %v2411, %v2412
    %2414 = vst [vmem:[%s1133] sm:$0xff] %v2413
    %v2415 = vld [vmem:[%s1135] sm:$0xff]
    %v2416 = vld [vmem:[%s1137] sm:$0xff]
    %v2417 = vld [vmem:[%s1139] sm:$0xff]
    %v2418 = vpack.c.bf16 %v2413, %v2413
    %2419 = vmatpush.bf16.msra.mxu0 %v1950
    %2420 = vmatpush.bf16.msra.mxu0 %v1949
    %2421 = vmatpush.bf16.msra.mxu0 %v1948
    %2422 = vmatpush.bf16.msra.mxu0 %v1947
    %2423 = vmatpush.bf16.msra.mxu0 %v1946
    %2424 = vmatpush.bf16.msra.mxu0 %v1945
    %2425 = vmatpush.bf16.msra.mxu0 %v1944
    %2426 = vmatpush.bf16.msra.mxu0 %v1943
    %2427 = vmatmul.bf16.gmra.mxu0 %v2418
    %v2428 = vpop.f32.mrf.mxu0
    %v2429 = vadd.f32 0.0, %v2428
    %v2430 = vpop.f32.mrf.mxu0
    %2431 = vdwg.mxu0
    %2432 = vmatpush.bf16.msra.mxu0 %v2011
    %2433 = vmatpush.bf16.msra.mxu0 %v2010
    %2434 = vmatpush.bf16.msra.mxu0 %v2009
    %2435 = vmatpush.bf16.msra.mxu0 %v2008
    %2436 = vmatpush.bf16.msra.mxu0 %v2007
    %2437 = vmatpush.bf16.msra.mxu0 %v2006
    %2438 = vmatpush.bf16.msra.mxu0 %v2005
    %2439 = vmatpush.bf16.msra.mxu0 %v2004
    %2440 = vmatmul.bf16.gmra.mxu0 %v2418
    %v2441 = vpop.f32.mrf.mxu0
    %v2442 = vadd.f32 0.0, %v2441
    %v2443 = vpop.f32.mrf.mxu0
    %2444 = vdwg.mxu0
    %v2445 = vadd.f32 %v2415, %v2429
    %v2446 = vxor.u32 %v2445, 2147483648
    %v2447 = vmul.f32 %v2446, 1.442695
    %v2448 = vpow.pop %v2447
    %v2449 = vadd.f32 %v2448, 1.0
    %v2450 = vrcp.pop %v2449
    %v2451 = vmul.f32 %v2449, %v2450
    %v2452 = vsub.f32 1.0, %v2451
    %v2453 = vmul.f32 %v2450, %v2452
    %v2454 = vadd.f32 %v2450, %v2453
    %vm2455 = vweird.f32 %v2449
    %vm2456 = vweird.f32 %v2450
    %vm2457 = vmor %vm2455, %vm2456
    %v2458 = vsel %vm2457, %v2450, %v2454
    %v2459 = vand.u32 2147483647, %v2449
    %vm2460 = vcmp.eq.f32.partialorder %v2459, 8.507059e+37
    %v2461 = vand.u32 %v2449, 2147483648
    %v2462 = vor.u32 1.1754944e-38, %v2461
    %v2463 = vsel %vm2460, %v2462, %v2458
    %v2464 = vmul.f32 1.0, %v2463
    %v2465 = vadd.f32 %v2416, %v2442
    %v2466 = vxor.u32 %v2465, 2147483648
    %v2467 = vmul.f32 %v2466, 1.442695
    %v2468 = vpow.pop %v2467
    %v2469 = vadd.f32 %v2468, 1.0
    %v2470 = vrcp.pop %v2469
    %v2471 = vmul.f32 %v2469, %v2470
    %v2472 = vsub.f32 1.0, %v2471
    %v2473 = vmul.f32 %v2470, %v2472
    %v2474 = vadd.f32 %v2470, %v2473
    %vm2475 = vweird.f32 %v2469
    %vm2476 = vweird.f32 %v2470
    %vm2477 = vmor %vm2475, %vm2476
    %v2478 = vsel %vm2477, %v2470, %v2474
    %v2479 = vand.u32 2147483647, %v2469
    %vm2480 = vcmp.eq.f32.partialorder %v2479, 8.507059e+37
    %v2481 = vand.u32 %v2469, 2147483648
    %v2482 = vor.u32 1.1754944e-38, %v2481
    %v2483 = vsel %vm2480, %v2482, %v2478
    %v2484 = vmul.f32 1.0, %v2483
    %2485 = vmatpush.bf16.msra.mxu0 %v2112
    %2486 = vmatpush.bf16.msra.mxu0 %v2111
    %2487 = vmatpush.bf16.msra.mxu0 %v2110
    %2488 = vmatpush.bf16.msra.mxu0 %v2109
    %2489 = vmatpush.bf16.msra.mxu0 %v2108
    %2490 = vmatpush.bf16.msra.mxu0 %v2107
    %2491 = vmatpush.bf16.msra.mxu0 %v2106
    %2492 = vmatpush.bf16.msra.mxu0 %v2105
    %2493 = vmatmul.bf16.gmra.mxu0 %v2418
    %v2494 = vpop.f32.mrf.mxu0
    %v2495 = vadd.f32 %v1903, %v2494
    %v2496 = vpop.f32.mrf.mxu0
    %2497 = vdwg.mxu0
    %v2498 = vmul.f32 %v2464, %v2495
    %v2499 = vadd.f32 %v2417, %v2498
    %v2500 = vtanh.pop %v2499
    %v2501 = vsub.f32 1.0, %v2484
    %v2502 = vmul.f32 %v2501, %v2500
    %v2503 = vmul.f32 %v2484, %v2413
    %v2504 = vadd.f32 %v2502, %v2503
    %2505 = vst [vmem:[%s1228] sm:$0xff] %v2504
    %v2506 = vld [vmem:[%s1230] sm:$0xff]
    %v2507 = vld [vmem:[%s1232] sm:$0xff]
    %v2508 = vld [vmem:[%s1234] sm:$0xff]
    %v2509 = vpack.c.bf16 %v2504, %v2504
    %2510 = vmatpush.bf16.msra.mxu0 %v1950
    %2511 = vmatpush.bf16.msra.mxu0 %v1949
    %2512 = vmatpush.bf16.msra.mxu0 %v1948
    %2513 = vmatpush.bf16.msra.mxu0 %v1947
    %2514 = vmatpush.bf16.msra.mxu0 %v1946
    %2515 = vmatpush.bf16.msra.mxu0 %v1945
    %2516 = vmatpush.bf16.msra.mxu0 %v1944
    %2517 = vmatpush.bf16.msra.mxu0 %v1943
    %2518 = vmatmul.bf16.gmra.mxu0 %v2509
    %v2519 = vpop.f32.mrf.mxu0
    %v2520 = vadd.f32 0.0, %v2519
    %v2521 = vpop.f32.mrf.mxu0
    %2522 = vdwg.mxu0
    %2523 = vmatpush.bf16.msra.mxu0 %v2011
    %2524 = vmatpush.bf16.msra.mxu0 %v2010
    %2525 = vmatpush.bf16.msra.mxu0 %v2009
    %2526 = vmatpush.bf16.msra.mxu0 %v2008
    %2527 = vmatpush.bf16.msra.mxu0 %v2007
    %2528 = vmatpush.bf16.msra.mxu0 %v2006
    %2529 = vmatpush.bf16.msra.mxu0 %v2005
    %2530 = vmatpush.bf16.msra.mxu0 %v2004
    %2531 = vmatmul.bf16.gmra.mxu0 %v2509
    %v2532 = vpop.f32.mrf.mxu0
    %v2533 = vadd.f32 0.0, %v2532
    %v2534 = vpop.f32.mrf.mxu0
    %2535 = vdwg.mxu0
    %v2536 = vadd.f32 %v2506, %v2520
    %v2537 = vxor.u32 %v2536, 2147483648
    %v2538 = vmul.f32 %v2537, 1.442695
    %v2539 = vpow.pop %v2538
    %v2540 = vadd.f32 %v2539, 1.0
    %v2541 = vrcp.pop %v2540
    %v2542 = vmul.f32 %v2540, %v2541
    %v2543 = vsub.f32 1.0, %v2542
    %v2544 = vmul.f32 %v2541, %v2543
    %v2545 = vadd.f32 %v2541, %v2544
    %vm2546 = vweird.f32 %v2540
    %vm2547 = vweird.f32 %v2541
    %vm2548 = vmor %vm2546, %vm2547
    %v2549 = vsel %vm2548, %v2541, %v2545
    %v2550 = vand.u32 2147483647, %v2540
    %vm2551 = vcmp.eq.f32.partialorder %v2550, 8.507059e+37
    %v2552 = vand.u32 %v2540, 2147483648
    %v2553 = vor.u32 1.1754944e-38, %v2552
    %v2554 = vsel %vm2551, %v2553, %v2549
    %v2555 = vmul.f32 1.0, %v2554
    %v2556 = vadd.f32 %v2507, %v2533
    %v2557 = vxor.u32 %v2556, 2147483648
    %v2558 = vmul.f32 %v2557, 1.442695
    %v2559 = vpow.pop %v2558
    %v2560 = vadd.f32 %v2559, 1.0
    %v2561 = vrcp.pop %v2560
    %v2562 = vmul.f32 %v2560, %v2561
    %v2563 = vsub.f32 1.0, %v2562
    %v2564 = vmul.f32 %v2561, %v2563
    %v2565 = vadd.f32 %v2561, %v2564
    %vm2566 = vweird.f32 %v2560
    %vm2567 = vweird.f32 %v2561
    %vm2568 = vmor %vm2566, %vm2567
    %v2569 = vsel %vm2568, %v2561, %v2565
    %v2570 = vand.u32 2147483647, %v2560
    %vm2571 = vcmp.eq.f32.partialorder %v2570, 8.507059e+37
    %v2572 = vand.u32 %v2560, 2147483648
    %v2573 = vor.u32 1.1754944e-38, %v2572
    %v2574 = vsel %vm2571, %v2573, %v2569
    %v2575 = vmul.f32 1.0, %v2574
    %2576 = vmatpush.bf16.msra.mxu0 %v2112
    %2577 = vmatpush.bf16.msra.mxu0 %v2111
    %2578 = vmatpush.bf16.msra.mxu0 %v2110
    %2579 = vmatpush.bf16.msra.mxu0 %v2109
    %2580 = vmatpush.bf16.msra.mxu0 %v2108
    %2581 = vmatpush.bf16.msra.mxu0 %v2107
    %2582 = vmatpush.bf16.msra.mxu0 %v2106
    %2583 = vmatpush.bf16.msra.mxu0 %v2105
    %2584 = vmatmul.bf16.gmra.mxu0 %v2509
    %v2585 = vpop.f32.mrf.mxu0
    %v2586 = vadd.f32 %v1903, %v2585
    %v2587 = vpop.f32.mrf.mxu0
    %2588 = vdwg.mxu0
    %v2589 = vmul.f32 %v2555, %v2586
    %v2590 = vadd.f32 %v2508, %v2589
    %v2591 = vtanh.pop %v2590
    %v2592 = vsub.f32 1.0, %v2575
    %v2593 = vmul.f32 %v2592, %v2591
    %v2594 = vmul.f32 %v2575, %v2504
    %v2595 = vadd.f32 %v2593, %v2594
    %2596 = vst [vmem:[%s1323] sm:$0xff] %v2595
    %v2597 = vld [vmem:[%s1325] sm:$0xff]
    %v2598 = vld [vmem:[%s1327] sm:$0xff]
    %v2599 = vld [vmem:[%s1329] sm:$0xff]
    %v2600 = vpack.c.bf16 %v2595, %v2595
    %2601 = vmatpush.bf16.msra.mxu0 %v1950
    %2602 = vmatpush.bf16.msra.mxu0 %v1949
    %2603 = vmatpush.bf16.msra.mxu0 %v1948
    %2604 = vmatpush.bf16.msra.mxu0 %v1947
    %2605 = vmatpush.bf16.msra.mxu0 %v1946
    %2606 = vmatpush.bf16.msra.mxu0 %v1945
    %2607 = vmatpush.bf16.msra.mxu0 %v1944
    %2608 = vmatpush.bf16.msra.mxu0 %v1943
    %2609 = vmatmul.bf16.gmra.mxu0 %v2600
    %v2610 = vpop.f32.mrf.mxu0
    %v2611 = vadd.f32 0.0, %v2610
    %v2612 = vpop.f32.mrf.mxu0
    %2613 = vdwg.mxu0
    %2614 = vmatpush.bf16.msra.mxu0 %v2011
    %2615 = vmatpush.bf16.msra.mxu0 %v2010
    %2616 = vmatpush.bf16.msra.mxu0 %v2009
    %2617 = vmatpush.bf16.msra.mxu0 %v2008
    %2618 = vmatpush.bf16.msra.mxu0 %v2007
    %2619 = vmatpush.bf16.msra.mxu0 %v2006
    %2620 = vmatpush.bf16.msra.mxu0 %v2005
    %2621 = vmatpush.bf16.msra.mxu0 %v2004
    %2622 = vmatmul.bf16.gmra.mxu0 %v2600
    %v2623 = vpop.f32.mrf.mxu0
    %v2624 = vadd.f32 0.0, %v2623
    %v2625 = vpop.f32.mrf.mxu0
    %2626 = vdwg.mxu0
    %v2627 = vadd.f32 %v2597, %v2611
    %v2628 = vxor.u32 %v2627, 2147483648
    %v2629 = vmul.f32 %v2628, 1.442695
    %v2630 = vpow.pop %v2629
    %v2631 = vadd.f32 %v2630, 1.0
    %v2632 = vrcp.pop %v2631
    %v2633 = vmul.f32 %v2631, %v2632
    %v2634 = vsub.f32 1.0, %v2633
    %v2635 = vmul.f32 %v2632, %v2634
    %v2636 = vadd.f32 %v2632, %v2635
    %vm2637 = vweird.f32 %v2631
    %vm2638 = vweird.f32 %v2632
    %vm2639 = vmor %vm2637, %vm2638
    %v2640 = vsel %vm2639, %v2632, %v2636
    %v2641 = vand.u32 2147483647, %v2631
    %vm2642 = vcmp.eq.f32.partialorder %v2641, 8.507059e+37
    %v2643 = vand.u32 %v2631, 2147483648
    %v2644 = vor.u32 1.1754944e-38, %v2643
    %v2645 = vsel %vm2642, %v2644, %v2640
    %v2646 = vmul.f32 1.0, %v2645
    %v2647 = vadd.f32 %v2598, %v2624
    %v2648 = vxor.u32 %v2647, 2147483648
    %v2649 = vmul.f32 %v2648, 1.442695
    %v2650 = vpow.pop %v2649
    %v2651 = vadd.f32 %v2650, 1.0
    %v2652 = vrcp.pop %v2651
    %v2653 = vmul.f32 %v2651, %v2652
    %v2654 = vsub.f32 1.0, %v2653
    %v2655 = vmul.f32 %v2652, %v2654
    %v2656 = vadd.f32 %v2652, %v2655
    %vm2657 = vweird.f32 %v2651
    %vm2658 = vweird.f32 %v2652
    %vm2659 = vmor %vm2657, %vm2658
    %v2660 = vsel %vm2659, %v2652, %v2656
    %v2661 = vand.u32 2147483647, %v2651
    %vm2662 = vcmp.eq.f32.partialorder %v2661, 8.507059e+37
    %v2663 = vand.u32 %v2651, 2147483648
    %v2664 = vor.u32 1.1754944e-38, %v2663
    %v2665 = vsel %vm2662, %v2664, %v2660
    %v2666 = vmul.f32 1.0, %v2665
    %2667 = vmatpush.bf16.msra.mxu0 %v2112
    %2668 = vmatpush.bf16.msra.mxu0 %v2111
    %2669 = vmatpush.bf16.msra.mxu0 %v2110
    %2670 = vmatpush.bf16.msra.mxu0 %v2109
    %2671 = vmatpush.bf16.msra.mxu0 %v2108
    %2672 = vmatpush.bf16.msra.mxu0 %v2107
    %2673 = vmatpush.bf16.msra.mxu0 %v2106
    %2674 = vmatpush.bf16.msra.mxu0 %v2105
    %2675 = vmatmul.bf16.gmra.mxu0 %v2600
    %v2676 = vpop.f32.mrf.mxu0
    %v2677 = vadd.f32 %v1903, %v2676
    %v2678 = vpop.f32.mrf.mxu0
    %2679 = vdwg.mxu0
    %v2680 = vmul.f32 %v2646, %v2677
    %v2681 = vadd.f32 %v2599, %v2680
    %v2682 = vtanh.pop %v2681
    %v2683 = vsub.f32 1.0, %v2666
    %v2684 = vmul.f32 %v2683, %v2682
    %v2685 = vmul.f32 %v2666, %v2595
    %v2686 = vadd.f32 %v2684, %v2685
    %2687 = vst [vmem:[%s1418] sm:$0xff] %v2686
    %v2688 = vld [vmem:[%s1420] sm:$0xff]
    %v2689 = vld [vmem:[%s1422] sm:$0xff]
    %v2690 = vld [vmem:[%s1424] sm:$0xff]
    %v2691 = vpack.c.bf16 %v2686, %v2686
    %2692 = vmatpush.bf16.msra.mxu0 %v1950
    %2693 = vmatpush.bf16.msra.mxu0 %v1949
    %2694 = vmatpush.bf16.msra.mxu0 %v1948
    %2695 = vmatpush.bf16.msra.mxu0 %v1947
    %2696 = vmatpush.bf16.msra.mxu0 %v1946
    %2697 = vmatpush.bf16.msra.mxu0 %v1945
    %2698 = vmatpush.bf16.msra.mxu0 %v1944
    %2699 = vmatpush.bf16.msra.mxu0 %v1943
    %2700 = vmatmul.bf16.gmra.mxu0 %v2691
    %v2701 = vpop.f32.mrf.mxu0
    %v2702 = vadd.f32 0.0, %v2701
    %v2703 = vpop.f32.mrf.mxu0
    %2704 = vdwg.mxu0
    %2705 = vmatpush.bf16.msra.mxu0 %v2011
    %2706 = vmatpush.bf16.msra.mxu0 %v2010
    %2707 = vmatpush.bf16.msra.mxu0 %v2009
    %2708 = vmatpush.bf16.msra.mxu0 %v2008
    %2709 = vmatpush.bf16.msra.mxu0 %v2007
    %2710 = vmatpush.bf16.msra.mxu0 %v2006
    %2711 = vmatpush.bf16.msra.mxu0 %v2005
    %2712 = vmatpush.bf16.msra.mxu0 %v2004
    %2713 = vmatmul.bf16.gmra.mxu0 %v2691
    %v2714 = vpop.f32.mrf.mxu0
    %v2715 = vadd.f32 0.0, %v2714
    %v2716 = vpop.f32.mrf.mxu0
    %2717 = vdwg.mxu0
    %v2718 = vadd.f32 %v2688, %v2702
    %v2719 = vxor.u32 %v2718, 2147483648
    %v2720 = vmul.f32 %v2719, 1.442695
    %v2721 = vpow.pop %v2720
    %v2722 = vadd.f32 %v2721, 1.0
    %v2723 = vrcp.pop %v2722
    %v2724 = vmul.f32 %v2722, %v2723
    %v2725 = vsub.f32 1.0, %v2724
    %v2726 = vmul.f32 %v2723, %v2725
    %v2727 = vadd.f32 %v2723, %v2726
    %vm2728 = vweird.f32 %v2722
    %vm2729 = vweird.f32 %v2723
    %vm2730 = vmor %vm2728, %vm2729
    %v2731 = vsel %vm2730, %v2723, %v2727
    %v2732 = vand.u32 2147483647, %v2722
    %vm2733 = vcmp.eq.f32.partialorder %v2732, 8.507059e+37
    %v2734 = vand.u32 %v2722, 2147483648
    %v2735 = vor.u32 1.1754944e-38, %v2734
    %v2736 = vsel %vm2733, %v2735, %v2731
    %v2737 = vmul.f32 1.0, %v2736
    %v2738 = vadd.f32 %v2689, %v2715
    %v2739 = vxor.u32 %v2738, 2147483648
    %v2740 = vmul.f32 %v2739, 1.442695
    %v2741 = vpow.pop %v2740
    %v2742 = vadd.f32 %v2741, 1.0
    %v2743 = vrcp.pop %v2742
    %v2744 = vmul.f32 %v2742, %v2743
    %v2745 = vsub.f32 1.0, %v2744
    %v2746 = vmul.f32 %v2743, %v2745
    %v2747 = vadd.f32 %v2743, %v2746
    %vm2748 = vweird.f32 %v2742
    %vm2749 = vweird.f32 %v2743
    %vm2750 = vmor %vm2748, %vm2749
    %v2751 = vsel %vm2750, %v2743, %v2747
    %v2752 = vand.u32 2147483647, %v2742
    %vm2753 = vcmp.eq.f32.partialorder %v2752, 8.507059e+37
    %v2754 = vand.u32 %v2742, 2147483648
    %v2755 = vor.u32 1.1754944e-38, %v2754
    %v2756 = vsel %vm2753, %v2755, %v2751
    %v2757 = vmul.f32 1.0, %v2756
    %2758 = vmatpush.bf16.msra.mxu0 %v2112
    %2759 = vmatpush.bf16.msra.mxu0 %v2111
    %2760 = vmatpush.bf16.msra.mxu0 %v2110
    %2761 = vmatpush.bf16.msra.mxu0 %v2109
    %2762 = vmatpush.bf16.msra.mxu0 %v2108
    %2763 = vmatpush.bf16.msra.mxu0 %v2107
    %2764 = vmatpush.bf16.msra.mxu0 %v2106
    %2765 = vmatpush.bf16.msra.mxu0 %v2105
    %2766 = vmatmul.bf16.gmra.mxu0 %v2691
    %v2767 = vpop.f32.mrf.mxu0
    %v2768 = vadd.f32 %v1903, %v2767
    %v2769 = vpop.f32.mrf.mxu0
    %2770 = vdwg.mxu0
    %v2771 = vmul.f32 %v2737, %v2768
    %v2772 = vadd.f32 %v2690, %v2771
    %v2773 = vtanh.pop %v2772
    %v2774 = vsub.f32 1.0, %v2757
    %v2775 = vmul.f32 %v2774, %v2773
    %v2776 = vmul.f32 %v2757, %v2686
    %v2777 = vadd.f32 %v2775, %v2776
    %2778 = vst [vmem:[%s1513] sm:$0xff] %v2777
    %s2779 = scalar_lea.vmem [#allocation21], 8
    %2780 = vst [vmem:[%s2779] sm:$0xff] %v2777
    %v2781 = vld [vmem:[#allocation2] sm:$0x3]
    %2782 = vst [vmem:[#allocation6] sm:$0x3] %v2781
    %v2783 = vld [vmem:[#allocation2 + $0x8] sm:$0x3]
    %2784 = vst [vmem:[#allocation6 + $0x2] sm:$0x3] %v2783
    %v2785 = vld [vmem:[#allocation2 + $0x10] sm:$0x3]
    %2786 = vst [vmem:[#allocation6 + $0x4] sm:$0x3] %v2785
    %v2787 = vld [vmem:[#allocation2 + $0x18] sm:$0x3]
    %2788 = vst [vmem:[#allocation6 + $0x6] sm:$0x3] %v2787
    %v2789 = vld [vmem:[#allocation2 + $0x20] sm:$0x3]
    %2790 = vst [vmem:[#allocation6 + $0x8] sm:$0x3] %v2789
    %v2791 = vld [vmem:[#allocation2 + $0x28] sm:$0x3]
    %2792 = vst [vmem:[#allocation6 + $0xa] sm:$0x3] %v2791
    %v2793 = vld [vmem:[#allocation2 + $0x30] sm:$0x3]
    %2794 = vst [vmem:[#allocation6 + $0xc] sm:$0x3] %v2793
    %v2795 = vld [vmem:[#allocation2 + $0x38] sm:$0x3]
    %2796 = vst [vmem:[#allocation6 + $0xe] sm:$0x3] %v2795
    %v2797 = vld [vmem:[#allocation6] sm:$0xff]
    %v2798 = vld [vmem:[#allocation6 + $0x8] sm:$0xff]
    %v2799 = vpack.c.bf16 %v2798, %v2797
    %v2800 = vld [vmem:[#allocation18] sm:$0xf]
    %v2801 = vld [vmem:[#allocation18 + $0x4] sm:$0xf]
    %v2802 = vld [vmem:[#allocation18 + $0x8] sm:$0xf]
    %v2803 = vld [vmem:[#allocation18 + $0xc] sm:$0xf]
    %v2804 = vld [vmem:[#allocation18 + $0x10] sm:$0xf]
    %v2805 = vld [vmem:[#allocation18 + $0x14] sm:$0xf]
    %v2806 = vld [vmem:[#allocation18 + $0x18] sm:$0xf]
    %v2807 = vld [vmem:[#allocation18 + $0x1c] sm:$0xf]
    %v2808 = vld [vmem:[#allocation18 + $0x20] sm:$0xf]
    %v2809 = vld [vmem:[#allocation18 + $0x24] sm:$0xf]
    %v2810 = vld [vmem:[#allocation18 + $0x28] sm:$0xf]
    %v2811 = vld [vmem:[#allocation18 + $0x2c] sm:$0xf]
    %v2812 = vld [vmem:[#allocation18 + $0x30] sm:$0xf]
    %v2813 = vld [vmem:[#allocation18 + $0x34] sm:$0xf]
    %v2814 = vld [vmem:[#allocation18 + $0x38] sm:$0xf]
    %v2815 = vld [vmem:[#allocation18 + $0x3c] sm:$0xf]
    %v2816 = vld [vmem:[%s7] sm:$0x1]
    %v2818 = vperm.slane %v2816, 0
    %v2836 = vunpack.c.l.b16 %v2800
    %v2837 = vunpack.c.l.b16 %v2801
    %v2838 = vunpack.c.l.b16 %v2802
    %v2839 = vunpack.c.l.b16 %v2803
    %v2840 = vunpack.c.l.b16 %v2804
    %v2841 = vunpack.c.l.b16 %v2805
    %v2842 = vunpack.c.l.b16 %v2806
    %v2843 = vunpack.c.l.b16 %v2807
    %v2844 = vunpack.c.l.b16 %v2808
    %v2845 = vunpack.c.l.b16 %v2809
    %v2846 = vunpack.c.l.b16 %v2810
    %v2847 = vunpack.c.l.b16 %v2811
    %v2848 = vunpack.c.l.b16 %v2812
    %v2849 = vunpack.c.l.b16 %v2813
    %v2850 = vunpack.c.l.b16 %v2814
    %v2851 = vunpack.c.l.b16 %v2815
    %v2852 = vpack.c.b16 %v2837, %v2836
    %v2853 = vpack.c.b16 %v2839, %v2838
    %v2854 = vpack.c.b16 %v2841, %v2840
    %v2855 = vpack.c.b16 %v2843, %v2842
    %v2856 = vpack.c.b16 %v2845, %v2844
    %v2857 = vpack.c.b16 %v2847, %v2846
    %v2858 = vpack.c.b16 %v2849, %v2848
    %v2859 = vpack.c.b16 %v2851, %v2850
    %2868 = vmatpush.bf16.msra.mxu0 %v2859
    %2869 = vmatpush.bf16.msra.mxu0 %v2858
    %2870 = vmatpush.bf16.msra.mxu0 %v2857
    %2871 = vmatpush.bf16.msra.mxu0 %v2856
    %2872 = vmatpush.bf16.msra.mxu0 %v2855
    %2873 = vmatpush.bf16.msra.mxu0 %v2854
    %2874 = vmatpush.bf16.msra.mxu0 %v2853
    %2875 = vmatpush.bf16.msra.mxu0 %v2852
    %2876 = vmatmul.bf16.gmra.mxu0 %v2799
    %v2877 = vpop.f32.mrf.mxu0
    %v2878 = vadd.f32 %v2818, %v2877
    %v2879 = vpop.f32.mrf.mxu0
    %v2880 = vadd.f32 %v2818, %v2879
    %2881 = vdwg.mxu0
    %v2882 = vmax.f32 %v2878, %v2880
    %v2883 = vsub.f32 %v2878, %v2882
    %v2884 = vsub.f32 %v2880, %v2882
    %v2885 = vmul.f32 %v2883, 1.442695
    %v2886 = vpow.pop %v2885
    %v2887 = vmul.f32 %v2884, 1.442695
    %v2888 = vpow.pop %v2887
    %v2889 = vadd.f32 %v2886, %v2888
    %v2890 = vrcp.pop %v2889
    %v2891 = vmul.f32 %v2886, %v2890
    %v2892 = vmul.f32 %v2888, %v2890
    %2893 = vst [vmem:[#allocation20] sm:$0xff] %v2891
    %2894 = vst [vmem:[#allocation20 + $0x8] sm:$0xff] %v2892
    // Predicated region
    $region62: #{tpu_custom_call.1} parent=1 // pred_check
      _
    $region63: #{tpu_custom_call.1} parent=1 // pred_check_branch
      %2896 = sbr.rel (0) target = $region65
    $region64: #{tpu_custom_call.1} parent=1 // pred_region
      %2898 = vsyncadd [#allocation9], 0
      %s2899 = sshll.u32 [#allocation20], 4
      %s2900 = int_to_ptr.vmem [resolvable:$true] %s2899
      %s2901 = sshll.u32 %s8, 4
      %s2902 = int_to_ptr.hbm [resolvable:$true] %s2901
      %2907 = dma.vmem_to_hbm [thread:$0]  %s2900, 256, %s2902, [#allocation9], 128, 128, 8
    $region65: #{tpu_custom_call.1} parent=1 // pred_fallthru
      _
    // Predicated region
    $region66: #{tpu_custom_call.1} parent=1 // pred_check
      _
    $region67: #{tpu_custom_call.1} parent=1 // pred_check_branch
      %2909 = sbr.rel (0) target = $region69
    $region68: #{tpu_custom_call.1} parent=1 // pred_region
      %2911 = vsyncadd [#allocation22], 0
      %s2912 = sshll.u32 [#allocation21], 4
      %s2913 = int_to_ptr.vmem [resolvable:$true] %s2912
      %s2914 = sshll.u32 %s9, 4
      %s2915 = int_to_ptr.hbm [resolvable:$true] %s2914
      %2920 = dma.vmem_to_hbm [thread:$0]  %s2913, 256, %s2915, [#allocation22], 128, 128, 8
    $region69: #{tpu_custom_call.1} parent=1 // pred_fallthru
      _
    // Predicated region
    $region70: #{tpu_custom_call.1} parent=1 // pred_check
      _
    $region71: #{tpu_custom_call.1} parent=1 // pred_check_branch
      %2922 = sbr.rel (0) target = $region73
    $region72: #{tpu_custom_call.1} parent=1 // pred_region
      %2924 = dma.done [#allocation9], 256
    $region73: #{tpu_custom_call.1} parent=1 // pred_fallthru
      _
    // Predicated region
    $region74: #{tpu_custom_call.1} parent=1 // pred_check
      _
    $region75: #{tpu_custom_call.1} parent=1 // pred_check_branch
      %2926 = sbr.rel (0) target = $region77
    $region76: #{tpu_custom_call.1} parent=1 // pred_region
      %2928 = dma.done [#allocation22], 256
    $region77: #{tpu_custom_call.1} parent=1 // pred_fallthru
      _
    %2929 = vsyncpa [#allocation8], 1
    %2930 = vsyncpa [#allocation13], 1
    %2931 = vsyncpa [#allocation16], 1
    %2932 = vsyncpa [#allocation19], 1
    %2933 = vsyncpa [#allocation9], 1
    %2934 = vsyncpa [#allocation22], 1
    %2935 = vsyncpa [#allocation10], 1

</llo_original>
